<compile_context>
chip_gen: v7x
topology: tpu7x:2x2x1
jax: 0.10.0
libtpu: 0.0.40
codegen_flags: <defaults>
</compile_context>

<pallas_src>
import functools
import math

import jax
import jax.numpy as jnp
from jax.experimental import pallas as pl
from jax.experimental.pallas import tpu as pltpu


# ------------------------------ fused kernel ------------------------------- #

def _gelu_exact(v):
    # PyTorch nn.GELU() is the exact-erf variant.  Mosaic erf lowering availability
    # varies across jax versions, so erf is computed via the Abramowitz-Stegun 7.1.26
    # rational approximation (|abs err| <= 1.5e-7): exp on the EUP + VPU arithmetic.
    z = v * jnp.float32(0.7071067811865476)
    az = jnp.abs(z)
    t = 1.0 / (1.0 + jnp.float32(0.3275911) * az)
    poly = t * (jnp.float32(0.254829592)
                + t * (jnp.float32(-0.284496736)
                       + t * (jnp.float32(1.421413741)
                              + t * (jnp.float32(-1.453152027)
                                     + t * jnp.float32(1.061405429)))))
    erf_abs = 1.0 - poly * jnp.exp(-az * az)
    erf = jnp.where(z >= 0, erf_abs, -erf_abs)
    return 0.5 * v * (1.0 + erf)


def _resampler_fused_kernel(x_ref, lat_ref, slab_ref, out_ref, *,
                            offsets, depth, heads, dim_head, eps):
    dh = dim_head
    dim = lat_ref.shape[-1]
    n_lat = lat_ref.shape[-2]
    n_img = x_ref.shape[-2]
    n_kv = n_img + n_lat

    def W(name):
        off, r = offsets[name]
        return slab_ref[off:off + r, :]            # static, 8-aligned row slice

    def heads_view(w):                             # (inner, dim) -> (H, dh, dim)
        # Leading-dim split only: last dim unchanged, new second-minor = dh = 8
        # (one sublane tile), i.e. a pure re-grouping of sublane blocks.
        return w.reshape(heads, dh, dim)

    def layernorm(v, g, b):
        mu = jnp.mean(v, axis=-1, keepdims=True)
        var = jnp.mean(jnp.square(v - mu), axis=-1, keepdims=True)
        return (v - mu) * jax.lax.rsqrt(var + eps) * g + b

    x = x_ref[0].astype(jnp.float32)               # (n_img, emb)
    lat0 = lat_ref[0].astype(jnp.float32)          # (n_lat, dim): final residual
    x = jnp.dot(x, W('proj_in_w'),
                preferred_element_type=jnp.float32) + W('proj_in_b')
    lat = lat0

    # depth is small (2 here) so the layer loop stays unrolled; for deep configs move
    # it onto an 'arbitrary' grid axis over a per-layer weight slab.
    for li in range(depth):
        p = f'l{li}_'

        # ---- PerceiverAttention (head-batched) ----
        xn = layernorm(x, W(p + 'norm1_g'), W(p + 'norm1_b'))        # (n_img, dim)
        ln_l = layernorm(lat, W(p + 'norm2_g'), W(p + 'norm2_b'))    # (n_lat, dim)
        kvin = jnp.concatenate([xn, ln_l], axis=0)                   # (n_kv, dim)

        wq_r = heads_view(W(p + 'wq'))     # qk scale already folded into wq
        wk_r = heads_view(W(p + 'wk'))
        wv_r = heads_view(W(p + 'wv'))
        wo_r = heads_view(W(p + 'wo'))

        lat_b = jnp.broadcast_to(ln_l[None], (heads, n_lat, dim))
        kv_b = jnp.broadcast_to(kvin[None], (heads, n_kv, dim))

        q = jnp.einsum('hld,hkd->hlk', lat_b, wq_r,
                       preferred_element_type=jnp.float32)           # (H, L, dh)
        k = jnp.einsum('hmd,hkd->hmk', kv_b, wk_r,
                       preferred_element_type=jnp.float32)           # (H, M, dh)
        v = jnp.einsum('hmd,hkd->hmk', kv_b, wv_r,
                       preferred_element_type=jnp.float32)           # (H, M, dh)

        s = jnp.einsum('hlk,hmk->hlm', q, k,
                       preferred_element_type=jnp.float32)           # (H, L, M)
        s = s - jnp.max(s, axis=-1, keepdims=True)
        p_att = jnp.exp(s)
        p_att = p_att * pl.reciprocal(jnp.sum(p_att, axis=-1, keepdims=True),
                                      approx=False)                  # exact softmax
        o = jnp.einsum('hlm,hmk->hlk', p_att, v,
                       preferred_element_type=jnp.float32)           # (H, L, dh)
        attn = jnp.einsum('hlk,hkd->hld', o, wo_r,
                          preferred_element_type=jnp.float32).sum(axis=0)  # (L, dim)
        lat = attn + lat                                             # residual

        # ---- FeedForward: LN -> W1 -> GELU -> W2 (+ residual) ----
        hff = layernorm(lat, W(p + 'ff_ln_g'), W(p + 'ff_ln_b'))
        h1 = jax.lax.dot_general(hff, W(p + 'ff_w1'),     # w1 stored (ff_inner, dim)
                                 (((1,), (1,)), ((), ())),
                                 preferred_element_type=jnp.float32)  # (L, ff_inner)
        h1 = _gelu_exact(h1)
        lat = jnp.dot(h1, W(p + 'ff_w2'),
                      preferred_element_type=jnp.float32) + lat

    # ---- output head ----
    y = jnp.dot(lat, W('proj_out_w'),
                preferred_element_type=jnp.float32) + W('proj_out_b')
    yn = layernorm(y, W('norm_out_g'), W('norm_out_b'))
    z = jnp.dot(yn, W('zero_w'),
                preferred_element_type=jnp.float32) + W('zero_b')
    # TODO(synk): output_dim=32 -> lane-masked vst; real configs should use a multiple
    # of 128 (or pack the result lane-dense) for unmasked stores.
    out_ref[0] = (lat0 + z).astype(out_ref.dtype)


# ------------------------------ param packing ------------------------------- #

def _pack_params(params, *, heads, dim_head):
    """Concatenate every parameter into one (rows, dim) f32 slab.

    Linear weights are stored so the kernel contracts them without lane splits:
      * (in, out)  row-major when used as  x @ W        (lane dim = out)
      * (out, in)  row-major when used as  x @ W^T      (lane dim = in)
    Per-head attention weights are stored (inner, dim), head-major along rows, so a
    leading-dim reshape to (H, dh, dim) is layout-free in the kernel.  The qk scale
    dh**-0.5 is folded into wq.  Every entry starts on an 8-row boundary.
    """
    inner = heads * dim_head
    qk_scale = float(dim_head) ** -0.5

    chunks, offsets = [], {}
    cursor = 0

    def add(name, arr):
        nonlocal cursor
        arr = jnp.asarray(arr, jnp.float32)
        if arr.ndim == 1:
            arr = arr.reshape(1, -1)
        r = arr.shape[0]
        pad = (-r) % 8
        if pad:
            arr = jnp.concatenate(
                [arr, jnp.zeros((pad, arr.shape[1]), jnp.float32)], axis=0)
        chunks.append(arr)
        offsets[name] = (cursor, r)
        cursor += r + pad

    add('proj_in_w', params['proj_in_w'])                    # (emb, dim)
    add('proj_in_b', params['proj_in_b'])
    for li, layer in enumerate(params['layers']):
        p = f'l{li}_'
        add(p + 'norm1_g', layer['norm1_g'])
        add(p + 'norm1_b', layer['norm1_b'])
        add(p + 'norm2_g', layer['norm2_g'])
        add(p + 'norm2_b', layer['norm2_b'])
        add(p + 'wq', (layer['wq'] * qk_scale).T)            # (inner, dim), scaled
        add(p + 'wk', layer['wkv'][:, :inner].T)             # (inner, dim)
        add(p + 'wv', layer['wkv'][:, inner:].T)             # (inner, dim)
        add(p + 'wo', layer['wo'])                           # (inner, dim)
        add(p + 'ff_ln_g', layer['ff_ln_g'])
        add(p + 'ff_ln_b', layer['ff_ln_b'])
        add(p + 'ff_w1', layer['ff_w1'].T)                   # (ff_inner, dim)
        add(p + 'ff_w2', layer['ff_w2'])                     # (ff_inner, dim)
    add('proj_out_w', params['proj_out_w'])                  # (dim, output_dim)
    add('proj_out_b', params['proj_out_b'])
    add('norm_out_g', params['norm_out_g'])
    add('norm_out_b', params['norm_out_b'])
    add('zero_w', params['zero_w'])
    add('zero_b', params['zero_b'])

    return jnp.concatenate(chunks, axis=0), offsets


# ------------------------------ forward wrapper ----------------------------- #

def resampler_cross_forward(params, x, latents, *, heads, dim_head, eps=1e-5):
    # apply_pos_emb=False and num_latents_mean_pooled=0 (module defaults), so the
    # pos-emb / mean-pooled-latents branches are identity / absent.
    B, n_img, emb = x.shape
    _, n_lat, dim = latents.shape
    depth = len(params['layers'])
    output_dim = params['proj_out_w'].shape[1]
    assert output_dim == dim, "final residual requires output_dim == latent dim"

    slab, offsets = _pack_params(params, heads=heads, dim_head=dim_head)

    kernel = functools.partial(
        _resampler_fused_kernel, offsets=offsets, depth=depth,
        heads=heads, dim_head=dim_head, eps=eps)

    return pl.pallas_call(
        kernel,
        out_shape=jax.ShapeDtypeStruct((B, n_lat, output_dim), latents.dtype),
        grid=(B,),
        in_specs=[
            pl.BlockSpec((1, n_img, emb), lambda i: (i, 0, 0)),
            pl.BlockSpec((1, n_lat, dim), lambda i: (i, 0, 0)),
            # One parameter slab; constant block index -> DMA'd into VMEM once and
            # reused across the batch grid steps.
            pl.BlockSpec(slab.shape, lambda i: (0, 0)),
        ],
        out_specs=pl.BlockSpec((1, n_lat, output_dim), lambda i: (i, 0, 0)),
        compiler_params=pltpu.CompilerParams(
            dimension_semantics=("parallel",),   # batch=2 -> both v7x TensorCores
        ),
    )(x, latents, slab)


# ----------------------------- pure-JAX reference --------------------------- #

def _reference_forward(params, x, latents, *, heads, dim_head, eps=1e-5):
    def ln(v, g, b):
        mu = jnp.mean(v, axis=-1, keepdims=True)
        var = jnp.mean(jnp.square(v - mu), axis=-1, keepdims=True)
        return (v - mu) * jax.lax.rsqrt(var + eps) * g + b

    identical = latents
    x = x @ params['proj_in_w'] + params['proj_in_b']
    scale = 1.0 / math.sqrt(math.sqrt(dim_head))
    for layer in params['layers']:
        xn = ln(x, layer['norm1_g'], layer['norm1_b'])
        lnorm = ln(latents, layer['norm2_g'], layer['norm2_b'])
        b, l, _ = lnorm.shape
        q = lnorm @ layer['wq']
        kv = jnp.concatenate([xn, lnorm], axis=-2) @ layer['wkv']
        k, v = jnp.split(kv, 2, axis=-1)

        def split_heads(t):
            bb, n, w = t.shape
            return t.reshape(bb, n, heads, w // heads).transpose(0, 2, 1, 3)

        qh, kh, vh = split_heads(q), split_heads(k), split_heads(v)
        w_att = jnp.einsum('bhld,bhmd->bhlm', qh * scale, kh * scale)
        w_att = jax.nn.softmax(w_att, axis=-1)
        o = jnp.einsum('bhlm,bhmd->bhld', w_att, vh)
        o = o.transpose(0, 2, 1, 3).reshape(b, l, -1)
        latents = o @ layer['wo'] + latents

        h = ln(latents, layer['ff_ln_g'], layer['ff_ln_b'])
        h = h @ layer['ff_w1']
        h = jax.nn.gelu(h, approximate=False)
        h = h @ layer['ff_w2']
        latents = h + latents

    latents = latents @ params['proj_out_w'] + params['proj_out_b']
    normed = ln(latents, params['norm_out_g'], params['norm_out_b'])
    return identical + normed @ params['zero_w'] + params['zero_b']


# ------------------------------- params init -------------------------------- #

def init_params(key, *, dim, depth, dim_head, heads, embedding_dim, output_dim,
                ff_mult):
    inner = dim_head * heads
    ff_inner = int(dim * ff_mult)
    keys = iter(jax.random.split(key, 4 + depth * 8))

    def w(din, dout):
        return jax.random.normal(next(keys), (din, dout), jnp.float32) * 0.02

    params = {
        'proj_in_w': w(embedding_dim, dim),
        'proj_in_b': jax.random.normal(next(keys), (dim,), jnp.float32) * 0.02,
        'proj_out_w': w(dim, output_dim),
        'proj_out_b': jax.random.normal(next(keys), (output_dim,), jnp.float32) * 0.02,
        'norm_out_g': jnp.ones((output_dim,), jnp.float32),
        'norm_out_b': jnp.zeros((output_dim,), jnp.float32),
        # zero_linear: explicitly zero-initialized in the PyTorch module
        'zero_w': jnp.zeros((output_dim, output_dim), jnp.float32),
        'zero_b': jnp.zeros((output_dim,), jnp.float32),
        'layers': [],
    }
    for _ in range(depth):
        params['layers'].append({
            'norm1_g': jnp.ones((dim,), jnp.float32),
            'norm1_b': jnp.zeros((dim,), jnp.float32),
            'norm2_g': jnp.ones((dim,), jnp.float32),
            'norm2_b': jnp.zeros((dim,), jnp.float32),
            'wq': w(dim, inner),
            'wkv': w(dim, 2 * inner),
            'wo': w(inner, dim),
            'ff_ln_g': jnp.ones((dim,), jnp.float32),
            'ff_ln_b': jnp.zeros((dim,), jnp.float32),
            'ff_w1': w(dim, ff_inner),
            'ff_w2': w(ff_inner, dim),
        })
    return params


if __name__ == "__main__":
    # Small config consistent with the module's constructor (dim == output_dim is
    # required by the final residual add, as in the defaults).
    dim = 32
    depth = 2
    dim_head = 8
    heads = 4
    embedding_dim = 24
    output_dim = 32
    ff_mult = 4

    batch, n_img, n_lat = 2, 16, 8

    key = jax.random.PRNGKey(0)
    kp, kx, kl, kz1, kz2 = jax.random.split(key, 5)
    params = init_params(
        kp, dim=dim, depth=depth, dim_head=dim_head, heads=heads,
        embedding_dim=embedding_dim, output_dim=output_dim, ff_mult=ff_mult)

    x = jax.random.normal(kx, (batch, n_img, embedding_dim), jnp.float32)
    latents = jax.random.normal(kl, (batch, n_lat, dim), jnp.float32)

    fwd = jax.jit(functools.partial(
        resampler_cross_forward, heads=heads, dim_head=dim_head))
    out = fwd(params, x, latents)
    jax.block_until_ready(out)

    assert out.shape == (batch, n_lat, output_dim), out.shape
    assert out.dtype == jnp.float32

    # Self-check against a pure-JAX reference. The module's zero_linear is
    # zero-initialized (so the module output equals `latents` exactly); for the
    # check only, swap in random weights there so the full compute path is
    # exercised end-to-end.
    check_params = dict(params)
    check_params['zero_w'] = jax.random.normal(
        kz1, (output_dim, output_dim), jnp.float32) * 0.02
    check_params['zero_b'] = jax.random.normal(
        kz2, (output_dim,), jnp.float32) * 0.02
    got = fwd(check_params, x, latents)
    want = _reference_forward(check_params, x, latents,
                              heads=heads, dim_head=dim_head)
    jax.block_until_ready(got)
    err = float(jnp.max(jnp.abs(got - want)))
    assert jnp.allclose(got, want, atol=2e-2, rtol=2e-2), err

    print("KERNEL_OK")
</pallas_src>

<mosaic_0001>
module attributes {stable_mosaic.version = 11 : i64} {
  func.func @_resampler_fused_kernel(%arg0: i32, %arg1: memref<1x16x24xf32, #tpu.memory_space<vmem>>, %arg2: memref<1x8x32xf32, #tpu.memory_space<vmem>>, %arg3: memref<992x32xf32, #tpu.memory_space<vmem>>, %arg4: memref<1x8x32xf32, #tpu.memory_space<vmem>>) attributes {dimension_semantics = [#tpu.dimension_semantics<parallel>], iteration_bounds = array<i64: 2>, scalar_prefetch = 0 : i64, scratch_operands = 0 : i64, tpu.core_type = #tpu.core_type<tc>, window_params = [{transform_indices = @transform_0, window_bounds = array<i64: 1, 16, 24>}, {transform_indices = @transform_1, window_bounds = array<i64: 1, 8, 32>}, {pipeline_mode = #tpu.pipeline_mode<synchronous>, transform_indices = @transform_2, window_bounds = array<i64: 992, 32>}, {transform_indices = @transform_3, window_bounds = array<i64: 1, 8, 32>}]} {
    %c0 = arith.constant 0 : index
    %c0_0 = arith.constant 0 : index
    %c0_1 = arith.constant 0 : index
    %0 = vector.load %arg1[%c0, %c0_0, %c0_1] : memref<1x16x24xf32, #tpu.memory_space<vmem>>, vector<1x16x24xf32>
    %1 = vector.shape_cast %0 : vector<1x16x24xf32> to vector<16x24xf32>
    %c0_2 = arith.constant 0 : index
    %c0_3 = arith.constant 0 : index
    %c0_4 = arith.constant 0 : index
    %2 = vector.load %arg2[%c0_2, %c0_3, %c0_4] : memref<1x8x32xf32, #tpu.memory_space<vmem>>, vector<1x8x32xf32>
    %3 = vector.shape_cast %2 : vector<1x8x32xf32> to vector<8x32xf32>
    %c0_5 = arith.constant 0 : index
    %c0_6 = arith.constant 0 : index
    %4 = vector.load %arg3[%c0_5, %c0_6] : memref<992x32xf32, #tpu.memory_space<vmem>>, vector<24x32xf32>
    %cst = arith.constant dense<0.000000e+00> : vector<16x32xf32>
    %5 = tpu.matmul %1, %4, %cst {dimension_numbers = #tpu.dot_dimension_numbers<[1], [0], [0], [1], [0, 0, 1, 1], [], []>} : vector<16x24xf32>, vector<24x32xf32>, vector<16x32xf32> -> vector<16x32xf32>
    %c24 = arith.constant 24 : index
    %c0_7 = arith.constant 0 : index
    %6 = vector.load %arg3[%c24, %c0_7] : memref<992x32xf32, #tpu.memory_space<vmem>>, vector<1x32xf32>
    %7 = vector.broadcast %6 : vector<1x32xf32> to vector<16x32xf32>
    %8 = arith.addf %5, %7 : vector<16x32xf32>
    %c32 = arith.constant 32 : index
    %c0_8 = arith.constant 0 : index
    %9 = vector.load %arg3[%c32, %c0_8] : memref<992x32xf32, #tpu.memory_space<vmem>>, vector<1x32xf32>
    %c40 = arith.constant 40 : index
    %c0_9 = arith.constant 0 : index
    %10 = vector.load %arg3[%c40, %c0_9] : memref<992x32xf32, #tpu.memory_space<vmem>>, vector<1x32xf32>
    %cst_10 = arith.constant dense<0.000000e+00> : vector<16xf32>
    %11 = vector.multi_reduction <add>, %8, %cst_10 [1] : vector<16x32xf32> to vector<16xf32>
    %12 = vector.shape_cast %11 : vector<16xf32> to vector<16x1xf32>
    %cst_11 = arith.constant 3.200000e+01 : f32
    %13 = vector.broadcast %cst_11 : f32 to vector<16x1xf32>
    %14 = arith.divf %12, %13 : vector<16x1xf32>
    %15 = vector.broadcast %14 : vector<16x1xf32> to vector<16x32xf32>
    %16 = arith.subf %8, %15 : vector<16x32xf32>
    %17 = arith.mulf %16, %16 : vector<16x32xf32>
    %cst_12 = arith.constant dense<0.000000e+00> : vector<16xf32>
    %18 = vector.multi_reduction <add>, %17, %cst_12 [1] : vector<16x32xf32> to vector<16xf32>
    %19 = vector.shape_cast %18 : vector<16xf32> to vector<16x1xf32>
    %cst_13 = arith.constant 3.200000e+01 : f32
    %20 = vector.broadcast %cst_13 : f32 to vector<16x1xf32>
    %21 = arith.divf %19, %20 : vector<16x1xf32>
    %22 = vector.broadcast %14 : vector<16x1xf32> to vector<16x32xf32>
    %23 = arith.subf %8, %22 : vector<16x32xf32>
    %cst_14 = arith.constant 9.99999974E-6 : f32
    %24 = vector.broadcast %cst_14 : f32 to vector<16x1xf32>
    %25 = arith.addf %21, %24 : vector<16x1xf32>
    %26 = math.rsqrt %25 : vector<16x1xf32>
    %27 = vector.broadcast %26 : vector<16x1xf32> to vector<16x32xf32>
    %28 = arith.mulf %23, %27 : vector<16x32xf32>
    %29 = vector.broadcast %9 : vector<1x32xf32> to vector<16x32xf32>
    %30 = arith.mulf %28, %29 : vector<16x32xf32>
    %31 = vector.broadcast %10 : vector<1x32xf32> to vector<16x32xf32>
    %32 = arith.addf %30, %31 : vector<16x32xf32>
    %c48 = arith.constant 48 : index
    %c0_15 = arith.constant 0 : index
    %33 = vector.load %arg3[%c48, %c0_15] : memref<992x32xf32, #tpu.memory_space<vmem>>, vector<1x32xf32>
    %c56 = arith.constant 56 : index
    %c0_16 = arith.constant 0 : index
    %34 = vector.load %arg3[%c56, %c0_16] : memref<992x32xf32, #tpu.memory_space<vmem>>, vector<1x32xf32>
    %cst_17 = arith.constant dense<0.000000e+00> : vector<8xf32>
    %35 = vector.multi_reduction <add>, %3, %cst_17 [1] : vector<8x32xf32> to vector<8xf32>
    %36 = vector.shape_cast %35 : vector<8xf32> to vector<8x1xf32>
    %cst_18 = arith.constant 3.200000e+01 : f32
    %37 = vector.broadcast %cst_18 : f32 to vector<8x1xf32>
    %38 = arith.divf %36, %37 : vector<8x1xf32>
    %39 = vector.broadcast %38 : vector<8x1xf32> to vector<8x32xf32>
    %40 = arith.subf %3, %39 : vector<8x32xf32>
    %41 = arith.mulf %40, %40 : vector<8x32xf32>
    %cst_19 = arith.constant dense<0.000000e+00> : vector<8xf32>
    %42 = vector.multi_reduction <add>, %41, %cst_19 [1] : vector<8x32xf32> to vector<8xf32>
    %43 = vector.shape_cast %42 : vector<8xf32> to vector<8x1xf32>
    %cst_20 = arith.constant 3.200000e+01 : f32
    %44 = vector.broadcast %cst_20 : f32 to vector<8x1xf32>
    %45 = arith.divf %43, %44 : vector<8x1xf32>
    %46 = vector.broadcast %38 : vector<8x1xf32> to vector<8x32xf32>
    %47 = arith.subf %3, %46 : vector<8x32xf32>
    %cst_21 = arith.constant 9.99999974E-6 : f32
    %48 = vector.broadcast %cst_21 : f32 to vector<8x1xf32>
    %49 = arith.addf %45, %48 : vector<8x1xf32>
    %50 = math.rsqrt %49 : vector<8x1xf32>
    %51 = vector.broadcast %50 : vector<8x1xf32> to vector<8x32xf32>
    %52 = arith.mulf %47, %51 : vector<8x32xf32>
    %53 = vector.broadcast %33 : vector<1x32xf32> to vector<8x32xf32>
    %54 = arith.mulf %52, %53 : vector<8x32xf32>
    %55 = vector.broadcast %34 : vector<1x32xf32> to vector<8x32xf32>
    %56 = arith.addf %54, %55 : vector<8x32xf32>
    %57 = tpu.concatenate %32, %56 in 0 : vector<16x32xf32>, vector<8x32xf32> -> vector<24x32xf32>
    %c64 = arith.constant 64 : index
    %c0_22 = arith.constant 0 : index
    %58 = vector.load %arg3[%c64, %c0_22] : memref<992x32xf32, #tpu.memory_space<vmem>>, vector<32x32xf32>
    %59 = vector.shape_cast %58 : vector<32x32xf32> to vector<4x8x32xf32>
    %c96 = arith.constant 96 : index
    %c0_23 = arith.constant 0 : index
    %60 = vector.load %arg3[%c96, %c0_23] : memref<992x32xf32, #tpu.memory_space<vmem>>, vector<32x32xf32>
    %61 = vector.shape_cast %60 : vector<32x32xf32> to vector<4x8x32xf32>
    %c128 = arith.constant 128 : index
    %c0_24 = arith.constant 0 : index
    %62 = vector.load %arg3[%c128, %c0_24] : memref<992x32xf32, #tpu.memory_space<vmem>>, vector<32x32xf32>
    %63 = vector.shape_cast %62 : vector<32x32xf32> to vector<4x8x32xf32>
    %c160 = arith.constant 160 : index
    %c0_25 = arith.constant 0 : index
    %64 = vector.load %arg3[%c160, %c0_25] : memref<992x32xf32, #tpu.memory_space<vmem>>, vector<32x32xf32>
    %65 = vector.shape_cast %64 : vector<32x32xf32> to vector<4x8x32xf32>
    %66 = vector.shape_cast %56 : vector<8x32xf32> to vector<1x8x32xf32>
    %67 = vector.shape_cast %66 : vector<1x8x32xf32> to vector<1x8x32xf32>
    %68 = vector.broadcast %67 : vector<1x8x32xf32> to vector<4x8x32xf32>
    %69 = vector.shape_cast %57 : vector<24x32xf32> to vector<1x24x32xf32>
    %70 = vector.shape_cast %69 : vector<1x24x32xf32> to vector<1x24x32xf32>
    %71 = vector.broadcast %70 : vector<1x24x32xf32> to vector<4x24x32xf32>
    "tpu.trace_start"() <{level = 10 : i32, message = "hld,hkd->hlk"}> : () -> ()
    %cst_26 = arith.constant dense<0.000000e+00> : vector<4x8x8xf32>
    %72 = tpu.matmul %68, %59, %cst_26 {dimension_numbers = #tpu.dot_dimension_numbers<[2], [2], [1], [1], [0, 0, 0, 1, 1, 1], [0], [0]>} : vector<4x8x32xf32>, vector<4x8x32xf32>, vector<4x8x8xf32> -> vector<4x8x8xf32>
    "tpu.trace_stop"() : () -> ()
    "tpu.trace_start"() <{level = 10 : i32, message = "hmd,hkd->hmk"}> : () -> ()
    %cst_27 = arith.constant dense<0.000000e+00> : vector<4x24x8xf32>
    %73 = tpu.matmul %71, %61, %cst_27 {dimension_numbers = #tpu.dot_dimension_numbers<[2], [2], [1], [1], [0, 0, 0, 1, 1, 1], [0], [0]>} : vector<4x24x32xf32>, vector<4x8x32xf32>, vector<4x24x8xf32> -> vector<4x24x8xf32>
    %cst_28 = arith.constant dense<0.000000e+00> : vector<4x24x8xf32>
    %74 = tpu.matmul %71, %63, %cst_28 {dimension_numbers = #tpu.dot_dimension_numbers<[2], [2], [1], [1], [0, 0, 0, 1, 1, 1], [0], [0]>} : vector<4x24x32xf32>, vector<4x8x32xf32>, vector<4x24x8xf32> -> vector<4x24x8xf32>
    "tpu.trace_stop"() : () -> ()
    "tpu.trace_start"() <{level = 10 : i32, message = "hlk,hmk->hlm"}> : () -> ()
    %cst_29 = arith.constant dense<0.000000e+00> : vector<4x8x24xf32>
    %75 = tpu.matmul %72, %73, %cst_29 {dimension_numbers = #tpu.dot_dimension_numbers<[2], [2], [1], [1], [0, 0, 0, 1, 1, 1], [0], [0]>} : vector<4x8x8xf32>, vector<4x24x8xf32>, vector<4x8x24xf32> -> vector<4x8x24xf32>
    "tpu.trace_stop"() : () -> ()
    %cst_30 = arith.constant dense<0xFF800000> : vector<4x8xf32>
    %76 = vector.multi_reduction <maximumf>, %75, %cst_30 [2] : vector<4x8x24xf32> to vector<4x8xf32>
    %77 = vector.shape_cast %76 : vector<4x8xf32> to vector<4x8x1xf32>
    %78 = vector.broadcast %77 : vector<4x8x1xf32> to vector<4x8x24xf32>
    %79 = arith.subf %75, %78 : vector<4x8x24xf32>
    %80 = math.exp %79 : vector<4x8x24xf32>
    %cst_31 = arith.constant dense<0.000000e+00> : vector<4x8xf32>
    %81 = vector.multi_reduction <add>, %80, %cst_31 [2] : vector<4x8x24xf32> to vector<4x8xf32>
    %82 = vector.shape_cast %81 : vector<4x8xf32> to vector<4x8x1xf32>
    %83 = tpu.reciprocal %82 : vector<4x8x1xf32> -> vector<4x8x1xf32>
    %84 = vector.broadcast %83 : vector<4x8x1xf32> to vector<4x8x24xf32>
    %85 = arith.mulf %80, %84 : vector<4x8x24xf32>
    "tpu.trace_start"() <{level = 10 : i32, message = "hlm,hmk->hlk"}> : () -> ()
    %cst_32 = arith.constant dense<0.000000e+00> : vector<4x8x8xf32>
    %86 = tpu.matmul %85, %74, %cst_32 {dimension_numbers = #tpu.dot_dimension_numbers<[2], [1], [1], [2], [0, 0, 0, 1, 1, 2], [0], [0]>} : vector<4x8x24xf32>, vector<4x24x8xf32>, vector<4x8x8xf32> -> vector<4x8x8xf32>
    "tpu.trace_stop"() : () -> ()
    "tpu.trace_start"() <{level = 10 : i32, message = "hlk,hkd->hld"}> : () -> ()
    %cst_33 = arith.constant dense<0.000000e+00> : vector<4x8x32xf32>
    %87 = tpu.matmul %86, %65, %cst_33 {dimension_numbers = #tpu.dot_dimension_numbers<[2], [1], [1], [2], [0, 0, 0, 1, 1, 2], [0], [0]>} : vector<4x8x8xf32>, vector<4x8x32xf32>, vector<4x8x32xf32> -> vector<4x8x32xf32>
    "tpu.trace_stop"() : () -> ()
    %cst_34 = arith.constant dense<0.000000e+00> : vector<8x32xf32>
    %88 = vector.multi_reduction <add>, %87, %cst_34 [0] : vector<4x8x32xf32> to vector<8x32xf32>
    %89 = arith.addf %88, %3 : vector<8x32xf32>
    %c192 = arith.constant 192 : index
    %c0_35 = arith.constant 0 : index
    %90 = vector.load %arg3[%c192, %c0_35] : memref<992x32xf32, #tpu.memory_space<vmem>>, vector<1x32xf32>
    %c200 = arith.constant 200 : index
    %c0_36 = arith.constant 0 : index
    %91 = vector.load %arg3[%c200, %c0_36] : memref<992x32xf32, #tpu.memory_space<vmem>>, vector<1x32xf32>
    %cst_37 = arith.constant dense<0.000000e+00> : vector<8xf32>
    %92 = vector.multi_reduction <add>, %89, %cst_37 [1] : vector<8x32xf32> to vector<8xf32>
    %93 = vector.shape_cast %92 : vector<8xf32> to vector<8x1xf32>
    %cst_38 = arith.constant 3.200000e+01 : f32
    %94 = vector.broadcast %cst_38 : f32 to vector<8x1xf32>
    %95 = arith.divf %93, %94 : vector<8x1xf32>
    %96 = vector.broadcast %95 : vector<8x1xf32> to vector<8x32xf32>
    %97 = arith.subf %89, %96 : vector<8x32xf32>
    %98 = arith.mulf %97, %97 : vector<8x32xf32>
    %cst_39 = arith.constant dense<0.000000e+00> : vector<8xf32>
    %99 = vector.multi_reduction <add>, %98, %cst_39 [1] : vector<8x32xf32> to vector<8xf32>
    %100 = vector.shape_cast %99 : vector<8xf32> to vector<8x1xf32>
    %cst_40 = arith.constant 3.200000e+01 : f32
    %101 = vector.broadcast %cst_40 : f32 to vector<8x1xf32>
    %102 = arith.divf %100, %101 : vector<8x1xf32>
    %103 = vector.broadcast %95 : vector<8x1xf32> to vector<8x32xf32>
    %104 = arith.subf %89, %103 : vector<8x32xf32>
    %cst_41 = arith.constant 9.99999974E-6 : f32
    %105 = vector.broadcast %cst_41 : f32 to vector<8x1xf32>
    %106 = arith.addf %102, %105 : vector<8x1xf32>
    %107 = math.rsqrt %106 : vector<8x1xf32>
    %108 = vector.broadcast %107 : vector<8x1xf32> to vector<8x32xf32>
    %109 = arith.mulf %104, %108 : vector<8x32xf32>
    %110 = vector.broadcast %90 : vector<1x32xf32> to vector<8x32xf32>
    %111 = arith.mulf %109, %110 : vector<8x32xf32>
    %112 = vector.broadcast %91 : vector<1x32xf32> to vector<8x32xf32>
    %113 = arith.addf %111, %112 : vector<8x32xf32>
    %c208 = arith.constant 208 : index
    %c0_42 = arith.constant 0 : index
    %114 = vector.load %arg3[%c208, %c0_42] : memref<992x32xf32, #tpu.memory_space<vmem>>, vector<128x32xf32>
    %cst_43 = arith.constant dense<0.000000e+00> : vector<8x128xf32>
    %115 = tpu.matmul %113, %114, %cst_43 {dimension_numbers = #tpu.dot_dimension_numbers<[1], [1], [0], [0], [0, 0, 1, 0], [], []>} : vector<8x32xf32>, vector<128x32xf32>, vector<8x128xf32> -> vector<8x128xf32>
    %cst_44 = arith.constant 0.707106769 : f32
    %116 = vector.broadcast %cst_44 : f32 to vector<8x128xf32>
    %117 = arith.mulf %115, %116 : vector<8x128xf32>
    %118 = math.absf %117 : vector<8x128xf32>
    %cst_45 = arith.constant 0.327591091 : f32
    %119 = vector.broadcast %cst_45 : f32 to vector<8x128xf32>
    %120 = arith.mulf %119, %118 : vector<8x128xf32>
    %cst_46 = arith.constant 1.000000e+00 : f32
    %121 = vector.broadcast %cst_46 : f32 to vector<8x128xf32>
    %122 = arith.addf %121, %120 : vector<8x128xf32>
    %cst_47 = arith.constant 1.000000e+00 : f32
    %123 = vector.broadcast %cst_47 : f32 to vector<8x128xf32>
    %124 = arith.divf %123, %122 : vector<8x128xf32>
    %cst_48 = arith.constant 1.06140542 : f32
    %125 = vector.broadcast %cst_48 : f32 to vector<8x128xf32>
    %126 = arith.mulf %124, %125 : vector<8x128xf32>
    %cst_49 = arith.constant -1.45315206 : f32
    %127 = vector.broadcast %cst_49 : f32 to vector<8x128xf32>
    %128 = arith.addf %127, %126 : vector<8x128xf32>
    %129 = arith.mulf %124, %128 : vector<8x128xf32>
    %cst_50 = arith.constant 1.42141378 : f32
    %130 = vector.broadcast %cst_50 : f32 to vector<8x128xf32>
    %131 = arith.addf %130, %129 : vector<8x128xf32>
    %132 = arith.mulf %124, %131 : vector<8x128xf32>
    %cst_51 = arith.constant -0.284496725 : f32
    %133 = vector.broadcast %cst_51 : f32 to vector<8x128xf32>
    %134 = arith.addf %133, %132 : vector<8x128xf32>
    %135 = arith.mulf %124, %134 : vector<8x128xf32>
    %cst_52 = arith.constant 0.254829586 : f32
    %136 = vector.broadcast %cst_52 : f32 to vector<8x128xf32>
    %137 = arith.addf %136, %135 : vector<8x128xf32>
    %138 = arith.mulf %124, %137 : vector<8x128xf32>
    %cst_53 = arith.constant 0.000000e+00 : f32
    %139 = vector.broadcast %cst_53 : f32 to vector<8x128xf32>
    %140 = arith.subf %139, %118 : vector<8x128xf32>
    %141 = arith.mulf %140, %118 : vector<8x128xf32>
    %142 = math.exp %141 : vector<8x128xf32>
    %143 = arith.mulf %138, %142 : vector<8x128xf32>
    %cst_54 = arith.constant 1.000000e+00 : f32
    %144 = vector.broadcast %cst_54 : f32 to vector<8x128xf32>
    %145 = arith.subf %144, %143 : vector<8x128xf32>
    %cst_55 = arith.constant 0.000000e+00 : f32
    %146 = vector.broadcast %cst_55 : f32 to vector<8x128xf32>
    %147 = arith.cmpf oge, %117, %146 : vector<8x128xf32>
    %cst_56 = arith.constant 0.000000e+00 : f32
    %148 = vector.broadcast %cst_56 : f32 to vector<8x128xf32>
    %149 = arith.subf %148, %145 : vector<8x128xf32>
    %150 = arith.select %147, %145, %149 : vector<8x128xi1>, vector<8x128xf32>
    %cst_57 = arith.constant 5.000000e-01 : f32
    %151 = vector.broadcast %cst_57 : f32 to vector<8x128xf32>
    %152 = arith.mulf %151, %115 : vector<8x128xf32>
    %cst_58 = arith.constant 1.000000e+00 : f32
    %153 = vector.broadcast %cst_58 : f32 to vector<8x128xf32>
    %154 = arith.addf %153, %150 : vector<8x128xf32>
    %155 = arith.mulf %152, %154 : vector<8x128xf32>
    %c336 = arith.constant 336 : index
    %c0_59 = arith.constant 0 : index
    %156 = vector.load %arg3[%c336, %c0_59] : memref<992x32xf32, #tpu.memory_space<vmem>>, vector<128x32xf32>
    %cst_60 = arith.constant dense<0.000000e+00> : vector<8x32xf32>
    %157 = tpu.matmul %155, %156, %cst_60 {dimension_numbers = #tpu.dot_dimension_numbers<[1], [0], [0], [1], [0, 0, 1, 1], [], []>} : vector<8x128xf32>, vector<128x32xf32>, vector<8x32xf32> -> vector<8x32xf32>
    %158 = arith.addf %157, %89 : vector<8x32xf32>
    %c464 = arith.constant 464 : index
    %c0_61 = arith.constant 0 : index
    %159 = vector.load %arg3[%c464, %c0_61] : memref<992x32xf32, #tpu.memory_space<vmem>>, vector<1x32xf32>
    %c472 = arith.constant 472 : index
    %c0_62 = arith.constant 0 : index
    %160 = vector.load %arg3[%c472, %c0_62] : memref<992x32xf32, #tpu.memory_space<vmem>>, vector<1x32xf32>
    %cst_63 = arith.constant dense<0.000000e+00> : vector<16xf32>
    %161 = vector.multi_reduction <add>, %8, %cst_63 [1] : vector<16x32xf32> to vector<16xf32>
    %162 = vector.shape_cast %161 : vector<16xf32> to vector<16x1xf32>
    %cst_64 = arith.constant 3.200000e+01 : f32
    %163 = vector.broadcast %cst_64 : f32 to vector<16x1xf32>
    %164 = arith.divf %162, %163 : vector<16x1xf32>
    %165 = vector.broadcast %164 : vector<16x1xf32> to vector<16x32xf32>
    %166 = arith.subf %8, %165 : vector<16x32xf32>
    %167 = arith.mulf %166, %166 : vector<16x32xf32>
    %cst_65 = arith.constant dense<0.000000e+00> : vector<16xf32>
    %168 = vector.multi_reduction <add>, %167, %cst_65 [1] : vector<16x32xf32> to vector<16xf32>
    %169 = vector.shape_cast %168 : vector<16xf32> to vector<16x1xf32>
    %cst_66 = arith.constant 3.200000e+01 : f32
    %170 = vector.broadcast %cst_66 : f32 to vector<16x1xf32>
    %171 = arith.divf %169, %170 : vector<16x1xf32>
    %172 = vector.broadcast %164 : vector<16x1xf32> to vector<16x32xf32>
    %173 = arith.subf %8, %172 : vector<16x32xf32>
    %cst_67 = arith.constant 9.99999974E-6 : f32
    %174 = vector.broadcast %cst_67 : f32 to vector<16x1xf32>
    %175 = arith.addf %171, %174 : vector<16x1xf32>
    %176 = math.rsqrt %175 : vector<16x1xf32>
    %177 = vector.broadcast %176 : vector<16x1xf32> to vector<16x32xf32>
    %178 = arith.mulf %173, %177 : vector<16x32xf32>
    %179 = vector.broadcast %159 : vector<1x32xf32> to vector<16x32xf32>
    %180 = arith.mulf %178, %179 : vector<16x32xf32>
    %181 = vector.broadcast %160 : vector<1x32xf32> to vector<16x32xf32>
    %182 = arith.addf %180, %181 : vector<16x32xf32>
    %c480 = arith.constant 480 : index
    %c0_68 = arith.constant 0 : index
    %183 = vector.load %arg3[%c480, %c0_68] : memref<992x32xf32, #tpu.memory_space<vmem>>, vector<1x32xf32>
    %c488 = arith.constant 488 : index
    %c0_69 = arith.constant 0 : index
    %184 = vector.load %arg3[%c488, %c0_69] : memref<992x32xf32, #tpu.memory_space<vmem>>, vector<1x32xf32>
    %cst_70 = arith.constant dense<0.000000e+00> : vector<8xf32>
    %185 = vector.multi_reduction <add>, %158, %cst_70 [1] : vector<8x32xf32> to vector<8xf32>
    %186 = vector.shape_cast %185 : vector<8xf32> to vector<8x1xf32>
    %cst_71 = arith.constant 3.200000e+01 : f32
    %187 = vector.broadcast %cst_71 : f32 to vector<8x1xf32>
    %188 = arith.divf %186, %187 : vector<8x1xf32>
    %189 = vector.broadcast %188 : vector<8x1xf32> to vector<8x32xf32>
    %190 = arith.subf %158, %189 : vector<8x32xf32>
    %191 = arith.mulf %190, %190 : vector<8x32xf32>
    %cst_72 = arith.constant dense<0.000000e+00> : vector<8xf32>
    %192 = vector.multi_reduction <add>, %191, %cst_72 [1] : vector<8x32xf32> to vector<8xf32>
    %193 = vector.shape_cast %192 : vector<8xf32> to vector<8x1xf32>
    %cst_73 = arith.constant 3.200000e+01 : f32
    %194 = vector.broadcast %cst_73 : f32 to vector<8x1xf32>
    %195 = arith.divf %193, %194 : vector<8x1xf32>
    %196 = vector.broadcast %188 : vector<8x1xf32> to vector<8x32xf32>
    %197 = arith.subf %158, %196 : vector<8x32xf32>
    %cst_74 = arith.constant 9.99999974E-6 : f32
    %198 = vector.broadcast %cst_74 : f32 to vector<8x1xf32>
    %199 = arith.addf %195, %198 : vector<8x1xf32>
    %200 = math.rsqrt %199 : vector<8x1xf32>
    %201 = vector.broadcast %200 : vector<8x1xf32> to vector<8x32xf32>
    %202 = arith.mulf %197, %201 : vector<8x32xf32>
    %203 = vector.broadcast %183 : vector<1x32xf32> to vector<8x32xf32>
    %204 = arith.mulf %202, %203 : vector<8x32xf32>
    %205 = vector.broadcast %184 : vector<1x32xf32> to vector<8x32xf32>
    %206 = arith.addf %204, %205 : vector<8x32xf32>
    %207 = tpu.concatenate %182, %206 in 0 : vector<16x32xf32>, vector<8x32xf32> -> vector<24x32xf32>
    %c496 = arith.constant 496 : index
    %c0_75 = arith.constant 0 : index
    %208 = vector.load %arg3[%c496, %c0_75] : memref<992x32xf32, #tpu.memory_space<vmem>>, vector<32x32xf32>
    %209 = vector.shape_cast %208 : vector<32x32xf32> to vector<4x8x32xf32>
    %c528 = arith.constant 528 : index
    %c0_76 = arith.constant 0 : index
    %210 = vector.load %arg3[%c528, %c0_76] : memref<992x32xf32, #tpu.memory_space<vmem>>, vector<32x32xf32>
    %211 = vector.shape_cast %210 : vector<32x32xf32> to vector<4x8x32xf32>
    %c560 = arith.constant 560 : index
    %c0_77 = arith.constant 0 : index
    %212 = vector.load %arg3[%c560, %c0_77] : memref<992x32xf32, #tpu.memory_space<vmem>>, vector<32x32xf32>
    %213 = vector.shape_cast %212 : vector<32x32xf32> to vector<4x8x32xf32>
    %c592 = arith.constant 592 : index
    %c0_78 = arith.constant 0 : index
    %214 = vector.load %arg3[%c592, %c0_78] : memref<992x32xf32, #tpu.memory_space<vmem>>, vector<32x32xf32>
    %215 = vector.shape_cast %214 : vector<32x32xf32> to vector<4x8x32xf32>
    %216 = vector.shape_cast %206 : vector<8x32xf32> to vector<1x8x32xf32>
    %217 = vector.shape_cast %216 : vector<1x8x32xf32> to vector<1x8x32xf32>
    %218 = vector.broadcast %217 : vector<1x8x32xf32> to vector<4x8x32xf32>
    %219 = vector.shape_cast %207 : vector<24x32xf32> to vector<1x24x32xf32>
    %220 = vector.shape_cast %219 : vector<1x24x32xf32> to vector<1x24x32xf32>
    %221 = vector.broadcast %220 : vector<1x24x32xf32> to vector<4x24x32xf32>
    "tpu.trace_start"() <{level = 10 : i32, message = "hld,hkd->hlk"}> : () -> ()
    %cst_79 = arith.constant dense<0.000000e+00> : vector<4x8x8xf32>
    %222 = tpu.matmul %218, %209, %cst_79 {dimension_numbers = #tpu.dot_dimension_numbers<[2], [2], [1], [1], [0, 0, 0, 1, 1, 1], [0], [0]>} : vector<4x8x32xf32>, vector<4x8x32xf32>, vector<4x8x8xf32> -> vector<4x8x8xf32>
    "tpu.trace_stop"() : () -> ()
    "tpu.trace_start"() <{level = 10 : i32, message = "hmd,hkd->hmk"}> : () -> ()
    %cst_80 = arith.constant dense<0.000000e+00> : vector<4x24x8xf32>
    %223 = tpu.matmul %221, %211, %cst_80 {dimension_numbers = #tpu.dot_dimension_numbers<[2], [2], [1], [1], [0, 0, 0, 1, 1, 1], [0], [0]>} : vector<4x24x32xf32>, vector<4x8x32xf32>, vector<4x24x8xf32> -> vector<4x24x8xf32>
    %cst_81 = arith.constant dense<0.000000e+00> : vector<4x24x8xf32>
    %224 = tpu.matmul %221, %213, %cst_81 {dimension_numbers = #tpu.dot_dimension_numbers<[2], [2], [1], [1], [0, 0, 0, 1, 1, 1], [0], [0]>} : vector<4x24x32xf32>, vector<4x8x32xf32>, vector<4x24x8xf32> -> vector<4x24x8xf32>
    "tpu.trace_stop"() : () -> ()
    "tpu.trace_start"() <{level = 10 : i32, message = "hlk,hmk->hlm"}> : () -> ()
    %cst_82 = arith.constant dense<0.000000e+00> : vector<4x8x24xf32>
    %225 = tpu.matmul %222, %223, %cst_82 {dimension_numbers = #tpu.dot_dimension_numbers<[2], [2], [1], [1], [0, 0, 0, 1, 1, 1], [0], [0]>} : vector<4x8x8xf32>, vector<4x24x8xf32>, vector<4x8x24xf32> -> vector<4x8x24xf32>
    "tpu.trace_stop"() : () -> ()
    %cst_83 = arith.constant dense<0xFF800000> : vector<4x8xf32>
    %226 = vector.multi_reduction <maximumf>, %225, %cst_83 [2] : vector<4x8x24xf32> to vector<4x8xf32>
    %227 = vector.shape_cast %226 : vector<4x8xf32> to vector<4x8x1xf32>
    %228 = vector.broadcast %227 : vector<4x8x1xf32> to vector<4x8x24xf32>
    %229 = arith.subf %225, %228 : vector<4x8x24xf32>
    %230 = math.exp %229 : vector<4x8x24xf32>
    %cst_84 = arith.constant dense<0.000000e+00> : vector<4x8xf32>
    %231 = vector.multi_reduction <add>, %230, %cst_84 [2] : vector<4x8x24xf32> to vector<4x8xf32>
    %232 = vector.shape_cast %231 : vector<4x8xf32> to vector<4x8x1xf32>
    %233 = tpu.reciprocal %232 : vector<4x8x1xf32> -> vector<4x8x1xf32>
    %234 = vector.broadcast %233 : vector<4x8x1xf32> to vector<4x8x24xf32>
    %235 = arith.mulf %230, %234 : vector<4x8x24xf32>
    "tpu.trace_start"() <{level = 10 : i32, message = "hlm,hmk->hlk"}> : () -> ()
    %cst_85 = arith.constant dense<0.000000e+00> : vector<4x8x8xf32>
    %236 = tpu.matmul %235, %224, %cst_85 {dimension_numbers = #tpu.dot_dimension_numbers<[2], [1], [1], [2], [0, 0, 0, 1, 1, 2], [0], [0]>} : vector<4x8x24xf32>, vector<4x24x8xf32>, vector<4x8x8xf32> -> vector<4x8x8xf32>
    "tpu.trace_stop"() : () -> ()
    "tpu.trace_start"() <{level = 10 : i32, message = "hlk,hkd->hld"}> : () -> ()
    %cst_86 = arith.constant dense<0.000000e+00> : vector<4x8x32xf32>
    %237 = tpu.matmul %236, %215, %cst_86 {dimension_numbers = #tpu.dot_dimension_numbers<[2], [1], [1], [2], [0, 0, 0, 1, 1, 2], [0], [0]>} : vector<4x8x8xf32>, vector<4x8x32xf32>, vector<4x8x32xf32> -> vector<4x8x32xf32>
    "tpu.trace_stop"() : () -> ()
    %cst_87 = arith.constant dense<0.000000e+00> : vector<8x32xf32>
    %238 = vector.multi_reduction <add>, %237, %cst_87 [0] : vector<4x8x32xf32> to vector<8x32xf32>
    %239 = arith.addf %238, %158 : vector<8x32xf32>
    %c624 = arith.constant 624 : index
    %c0_88 = arith.constant 0 : index
    %240 = vector.load %arg3[%c624, %c0_88] : memref<992x32xf32, #tpu.memory_space<vmem>>, vector<1x32xf32>
    %c632 = arith.constant 632 : index
    %c0_89 = arith.constant 0 : index
    %241 = vector.load %arg3[%c632, %c0_89] : memref<992x32xf32, #tpu.memory_space<vmem>>, vector<1x32xf32>
    %cst_90 = arith.constant dense<0.000000e+00> : vector<8xf32>
    %242 = vector.multi_reduction <add>, %239, %cst_90 [1] : vector<8x32xf32> to vector<8xf32>
    %243 = vector.shape_cast %242 : vector<8xf32> to vector<8x1xf32>
    %cst_91 = arith.constant 3.200000e+01 : f32
    %244 = vector.broadcast %cst_91 : f32 to vector<8x1xf32>
    %245 = arith.divf %243, %244 : vector<8x1xf32>
    %246 = vector.broadcast %245 : vector<8x1xf32> to vector<8x32xf32>
    %247 = arith.subf %239, %246 : vector<8x32xf32>
    %248 = arith.mulf %247, %247 : vector<8x32xf32>
    %cst_92 = arith.constant dense<0.000000e+00> : vector<8xf32>
    %249 = vector.multi_reduction <add>, %248, %cst_92 [1] : vector<8x32xf32> to vector<8xf32>
    %250 = vector.shape_cast %249 : vector<8xf32> to vector<8x1xf32>
    %cst_93 = arith.constant 3.200000e+01 : f32
    %251 = vector.broadcast %cst_93 : f32 to vector<8x1xf32>
    %252 = arith.divf %250, %251 : vector<8x1xf32>
    %253 = vector.broadcast %245 : vector<8x1xf32> to vector<8x32xf32>
    %254 = arith.subf %239, %253 : vector<8x32xf32>
    %cst_94 = arith.constant 9.99999974E-6 : f32
    %255 = vector.broadcast %cst_94 : f32 to vector<8x1xf32>
    %256 = arith.addf %252, %255 : vector<8x1xf32>
    %257 = math.rsqrt %256 : vector<8x1xf32>
    %258 = vector.broadcast %257 : vector<8x1xf32> to vector<8x32xf32>
    %259 = arith.mulf %254, %258 : vector<8x32xf32>
    %260 = vector.broadcast %240 : vector<1x32xf32> to vector<8x32xf32>
    %261 = arith.mulf %259, %260 : vector<8x32xf32>
    %262 = vector.broadcast %241 : vector<1x32xf32> to vector<8x32xf32>
    %263 = arith.addf %261, %262 : vector<8x32xf32>
    %c640 = arith.constant 640 : index
    %c0_95 = arith.constant 0 : index
    %264 = vector.load %arg3[%c640, %c0_95] : memref<992x32xf32, #tpu.memory_space<vmem>>, vector<128x32xf32>
    %cst_96 = arith.constant dense<0.000000e+00> : vector<8x128xf32>
    %265 = tpu.matmul %263, %264, %cst_96 {dimension_numbers = #tpu.dot_dimension_numbers<[1], [1], [0], [0], [0, 0, 1, 0], [], []>} : vector<8x32xf32>, vector<128x32xf32>, vector<8x128xf32> -> vector<8x128xf32>
    %cst_97 = arith.constant 0.707106769 : f32
    %266 = vector.broadcast %cst_97 : f32 to vector<8x128xf32>
    %267 = arith.mulf %265, %266 : vector<8x128xf32>
    %268 = math.absf %267 : vector<8x128xf32>
    %cst_98 = arith.constant 0.327591091 : f32
    %269 = vector.broadcast %cst_98 : f32 to vector<8x128xf32>
    %270 = arith.mulf %269, %268 : vector<8x128xf32>
    %cst_99 = arith.constant 1.000000e+00 : f32
    %271 = vector.broadcast %cst_99 : f32 to vector<8x128xf32>
    %272 = arith.addf %271, %270 : vector<8x128xf32>
    %cst_100 = arith.constant 1.000000e+00 : f32
    %273 = vector.broadcast %cst_100 : f32 to vector<8x128xf32>
    %274 = arith.divf %273, %272 : vector<8x128xf32>
    %cst_101 = arith.constant 1.06140542 : f32
    %275 = vector.broadcast %cst_101 : f32 to vector<8x128xf32>
    %276 = arith.mulf %274, %275 : vector<8x128xf32>
    %cst_102 = arith.constant -1.45315206 : f32
    %277 = vector.broadcast %cst_102 : f32 to vector<8x128xf32>
    %278 = arith.addf %277, %276 : vector<8x128xf32>
    %279 = arith.mulf %274, %278 : vector<8x128xf32>
    %cst_103 = arith.constant 1.42141378 : f32
    %280 = vector.broadcast %cst_103 : f32 to vector<8x128xf32>
    %281 = arith.addf %280, %279 : vector<8x128xf32>
    %282 = arith.mulf %274, %281 : vector<8x128xf32>
    %cst_104 = arith.constant -0.284496725 : f32
    %283 = vector.broadcast %cst_104 : f32 to vector<8x128xf32>
    %284 = arith.addf %283, %282 : vector<8x128xf32>
    %285 = arith.mulf %274, %284 : vector<8x128xf32>
    %cst_105 = arith.constant 0.254829586 : f32
    %286 = vector.broadcast %cst_105 : f32 to vector<8x128xf32>
    %287 = arith.addf %286, %285 : vector<8x128xf32>
    %288 = arith.mulf %274, %287 : vector<8x128xf32>
    %cst_106 = arith.constant 0.000000e+00 : f32
    %289 = vector.broadcast %cst_106 : f32 to vector<8x128xf32>
    %290 = arith.subf %289, %268 : vector<8x128xf32>
    %291 = arith.mulf %290, %268 : vector<8x128xf32>
    %292 = math.exp %291 : vector<8x128xf32>
    %293 = arith.mulf %288, %292 : vector<8x128xf32>
    %cst_107 = arith.constant 1.000000e+00 : f32
    %294 = vector.broadcast %cst_107 : f32 to vector<8x128xf32>
    %295 = arith.subf %294, %293 : vector<8x128xf32>
    %cst_108 = arith.constant 0.000000e+00 : f32
    %296 = vector.broadcast %cst_108 : f32 to vector<8x128xf32>
    %297 = arith.cmpf oge, %267, %296 : vector<8x128xf32>
    %cst_109 = arith.constant 0.000000e+00 : f32
    %298 = vector.broadcast %cst_109 : f32 to vector<8x128xf32>
    %299 = arith.subf %298, %295 : vector<8x128xf32>
    %300 = arith.select %297, %295, %299 : vector<8x128xi1>, vector<8x128xf32>
    %cst_110 = arith.constant 5.000000e-01 : f32
    %301 = vector.broadcast %cst_110 : f32 to vector<8x128xf32>
    %302 = arith.mulf %301, %265 : vector<8x128xf32>
    %cst_111 = arith.constant 1.000000e+00 : f32
    %303 = vector.broadcast %cst_111 : f32 to vector<8x128xf32>
    %304 = arith.addf %303, %300 : vector<8x128xf32>
    %305 = arith.mulf %302, %304 : vector<8x128xf32>
    %c768 = arith.constant 768 : index
    %c0_112 = arith.constant 0 : index
    %306 = vector.load %arg3[%c768, %c0_112] : memref<992x32xf32, #tpu.memory_space<vmem>>, vector<128x32xf32>
    %cst_113 = arith.constant dense<0.000000e+00> : vector<8x32xf32>
    %307 = tpu.matmul %305, %306, %cst_113 {dimension_numbers = #tpu.dot_dimension_numbers<[1], [0], [0], [1], [0, 0, 1, 1], [], []>} : vector<8x128xf32>, vector<128x32xf32>, vector<8x32xf32> -> vector<8x32xf32>
    %308 = arith.addf %307, %239 : vector<8x32xf32>
    %c896 = arith.constant 896 : index
    %c0_114 = arith.constant 0 : index
    %309 = vector.load %arg3[%c896, %c0_114] : memref<992x32xf32, #tpu.memory_space<vmem>>, vector<32x32xf32>
    %cst_115 = arith.constant dense<0.000000e+00> : vector<8x32xf32>
    %310 = tpu.matmul %308, %309, %cst_115 {dimension_numbers = #tpu.dot_dimension_numbers<[1], [0], [0], [1], [0, 0, 1, 1], [], []>} : vector<8x32xf32>, vector<32x32xf32>, vector<8x32xf32> -> vector<8x32xf32>
    %c928 = arith.constant 928 : index
    %c0_116 = arith.constant 0 : index
    %311 = vector.load %arg3[%c928, %c0_116] : memref<992x32xf32, #tpu.memory_space<vmem>>, vector<1x32xf32>
    %312 = vector.broadcast %311 : vector<1x32xf32> to vector<8x32xf32>
    %313 = arith.addf %310, %312 : vector<8x32xf32>
    %c936 = arith.constant 936 : index
    %c0_117 = arith.constant 0 : index
    %314 = vector.load %arg3[%c936, %c0_117] : memref<992x32xf32, #tpu.memory_space<vmem>>, vector<1x32xf32>
    %c944 = arith.constant 944 : index
    %c0_118 = arith.constant 0 : index
    %315 = vector.load %arg3[%c944, %c0_118] : memref<992x32xf32, #tpu.memory_space<vmem>>, vector<1x32xf32>
    %cst_119 = arith.constant dense<0.000000e+00> : vector<8xf32>
    %316 = vector.multi_reduction <add>, %313, %cst_119 [1] : vector<8x32xf32> to vector<8xf32>
    %317 = vector.shape_cast %316 : vector<8xf32> to vector<8x1xf32>
    %cst_120 = arith.constant 3.200000e+01 : f32
    %318 = vector.broadcast %cst_120 : f32 to vector<8x1xf32>
    %319 = arith.divf %317, %318 : vector<8x1xf32>
    %320 = vector.broadcast %319 : vector<8x1xf32> to vector<8x32xf32>
    %321 = arith.subf %313, %320 : vector<8x32xf32>
    %322 = arith.mulf %321, %321 : vector<8x32xf32>
    %cst_121 = arith.constant dense<0.000000e+00> : vector<8xf32>
    %323 = vector.multi_reduction <add>, %322, %cst_121 [1] : vector<8x32xf32> to vector<8xf32>
    %324 = vector.shape_cast %323 : vector<8xf32> to vector<8x1xf32>
    %cst_122 = arith.constant 3.200000e+01 : f32
    %325 = vector.broadcast %cst_122 : f32 to vector<8x1xf32>
    %326 = arith.divf %324, %325 : vector<8x1xf32>
    %327 = vector.broadcast %319 : vector<8x1xf32> to vector<8x32xf32>
    %328 = arith.subf %313, %327 : vector<8x32xf32>
    %cst_123 = arith.constant 9.99999974E-6 : f32
    %329 = vector.broadcast %cst_123 : f32 to vector<8x1xf32>
    %330 = arith.addf %326, %329 : vector<8x1xf32>
    %331 = math.rsqrt %330 : vector<8x1xf32>
    %332 = vector.broadcast %331 : vector<8x1xf32> to vector<8x32xf32>
    %333 = arith.mulf %328, %332 : vector<8x32xf32>
    %334 = vector.broadcast %314 : vector<1x32xf32> to vector<8x32xf32>
    %335 = arith.mulf %333, %334 : vector<8x32xf32>
    %336 = vector.broadcast %315 : vector<1x32xf32> to vector<8x32xf32>
    %337 = arith.addf %335, %336 : vector<8x32xf32>
    %c952 = arith.constant 952 : index
    %c0_124 = arith.constant 0 : index
    %338 = vector.load %arg3[%c952, %c0_124] : memref<992x32xf32, #tpu.memory_space<vmem>>, vector<32x32xf32>
    %cst_125 = arith.constant dense<0.000000e+00> : vector<8x32xf32>
    %339 = tpu.matmul %337, %338, %cst_125 {dimension_numbers = #tpu.dot_dimension_numbers<[1], [0], [0], [1], [0, 0, 1, 1], [], []>} : vector<8x32xf32>, vector<32x32xf32>, vector<8x32xf32> -> vector<8x32xf32>
    %c984 = arith.constant 984 : index
    %c0_126 = arith.constant 0 : index
    %340 = vector.load %arg3[%c984, %c0_126] : memref<992x32xf32, #tpu.memory_space<vmem>>, vector<1x32xf32>
    %341 = vector.broadcast %340 : vector<1x32xf32> to vector<8x32xf32>
    %342 = arith.addf %339, %341 : vector<8x32xf32>
    %343 = arith.addf %3, %342 : vector<8x32xf32>
    %c0_127 = arith.constant 0 : index
    %c0_128 = arith.constant 0 : index
    %c0_129 = arith.constant 0 : index
    %344 = vector.load %arg4[%c0_127, %c0_128, %c0_129] : memref<1x8x32xf32, #tpu.memory_space<vmem>>, vector<1x8x32xf32>
    %345 = vector.shape_cast %344 : vector<1x8x32xf32> to vector<8x32xf32>
    %346 = vector.shape_cast %343 : vector<8x32xf32> to vector<1x8x32xf32>
    tpu.vector_store %arg4[%c0_127, %c0_128, %c0_129], %346 {strides = array<i32>} : memref<1x8x32xf32, #tpu.memory_space<vmem>>, vector<1x8x32xf32>,
    return
  }
  func.func @transform_0(%arg0: i32) -> (i32, i32, i32) {
    %c0_i32 = arith.constant 0 : i32
    %c0_i32_0 = arith.constant 0 : i32
    %c0_i32_1 = arith.constant 0 : i32
    return %arg0, %c0_i32, %c0_i32_0 : i32, i32, i32
  }
  func.func @transform_1(%arg0: i32) -> (i32, i32, i32) {
    %c0_i32 = arith.constant 0 : i32
    %c0_i32_0 = arith.constant 0 : i32
    %c0_i32_1 = arith.constant 0 : i32
    return %arg0, %c0_i32, %c0_i32_0 : i32, i32, i32
  }
  func.func @transform_2(%arg0: i32) -> (i32, i32) {
    %c0_i32 = arith.constant 0 : i32
    %c0_i32_0 = arith.constant 0 : i32
    %c0_i32_1 = arith.constant 0 : i32
    return %c0_i32, %c0_i32_0 : i32, i32
  }
  func.func @transform_3(%arg0: i32) -> (i32, i32, i32) {
    %c0_i32 = arith.constant 0 : i32
    %c0_i32_0 = arith.constant 0 : i32
    %c0_i32_1 = arith.constant 0 : i32
    return %arg0, %c0_i32, %c0_i32_0 : i32, i32, i32
  }
}

</mosaic_0001>

<llo_original>
// kernel: resampler_cross_forward.1
$region0: #{resampler_cross_forward.1}
  #allocation0 [shape = 'u32[]', space=smem, size = 0x4, offset = 0x4, fixed_abs, tag = 'smem constant byte address 0x4 - core index']
  #allocation1 [shape = 'u32[144,128]{1,0:T(1,128)}', space=vmem, size = 0x12000, scoped, tag = 'internal scratch']
  %s0 = inlined_call_operand.vmem [shape: f32[2,16,24], index: 0, kind: input, shape index: {}]
  %s1 = inlined_call_operand.vmem [shape: f32[2,8,32], index: 1, kind: input, shape index: {}]
  %s2 = inlined_call_operand.vmem [shape: f32[992,32], index: 2, kind: input, shape index: {}]
  %s3 = inlined_call_operand.hbm [shape: f32[2,8,32], index: 3, kind: output, shape index: {}]
  %s4 = sld [smem:[#allocation0]]
  $region45: #{resampler_cross_forward.1} parent=0
    _
  %s6 = ssub.s32 1, %s4
  %s7 = scalar_select 0, %s6, %s4
  $region1: #{resampler_cross_forward.1} parent=0
    #allocation2 [shape = 'u8[8192]{0}', space=vmem, size = 0x2000, scoped, tag = 'output window, operand 0']
    #allocation3 [shape = 's32[2]{0}', space=sflag, size = 0x8, scoped, tag = 'scoped memory for resampler_cross_forward.1']
    %8 = vsyncpa [#allocation3], 0
    %s9 = scalar_lea.sflag [#allocation3], 1
    %10 = vsyncpa %s9, 0
    loop: start=0, step=1, limit=4
    $region2: #{resampler_cross_forward.1} parent=1 // loop_pre_header
      _
    $region3: #{resampler_cross_forward.1} parent=1 // loop_header
      %s12 = sphi 0, %s16
      %p13 = scmp.ge.s32.totalorder %s12, 4
      %s22 = sphi 0, %s24
      %s25 = sphi 0, %s22
      %s26 = sphi 0, %s25
      %s42 = sphi 0, %s26
      %s48 = sphi 0, %s50
      %s51 = sphi 0, %s48
      %s52 = sphi 0, %s51
      %s68 = sphi 0, %s52
      %s72 = sphi 0, %s72
      %s74 = sphi 0, %s72
      %s75 = sphi 0, %s74
      %s89 = sphi 0, %s75
      %s95 = sphi 0, %s97
      %s98 = sphi 0, %s95
      %s99 = sphi 0, %s98
      %s115 = sphi 0, %s99
    $region4: #{resampler_cross_forward.1} parent=1 // loop_header_branch
      %15 = sbr.rel (%p13) target = $region8
    $region5: #{resampler_cross_forward.1} parent=1 // loop_body
      %s17 = ssub.s32 %s12, 1
      %s18 = ssub.s32 %s12, 2
      %s19 = sadd.s32 %s12, 1
      %s20 = ssub.s32 %s12, %s19
      %p21 = scmp.eq.s32.totalorder %s20, 0
      %s23 = sadd.s32 %s22, 1
      %s24 = scalar_select %p21, %s22, %s23
      %p27 = pneg %p21
      %p28 = scmp.eq.s32.totalorder %s12, 1
      %p29 = por %p27, %p28
      %p30 = scmp.ne.s32.totalorder %s22, %s25
      %p31 = scmp.eq.s32.totalorder %s12, 0
      %p32 = por %p30, %p31
      %p33 = scmp.ne.s32.totalorder %s22, %s25
      %p34 = scmp.eq.s32.totalorder %s17, 1
      %p35 = por %p33, %p34
      %p36 = scmp.ne.s32.totalorder %s25, %s26
      %p37 = scmp.eq.s32.totalorder %s17, 0
      %p38 = por %p36, %p37
      %p39 = scmp.ne.s32.totalorder %s25, %s26
      %p40 = scmp.eq.s32.totalorder %s18, 1
      %p41 = por %p39, %p40
      %p43 = scmp.ne.s32.totalorder %s26, %s42
      %p44 = scmp.eq.s32.totalorder %s18, 0
      %p45 = por %p43, %p44
      %s46 = ssub.s32 %s12, %s19
      %p47 = scmp.eq.s32.totalorder %s46, 0
      %s49 = sadd.s32 %s48, 1
      %s50 = scalar_select %p47, %s48, %s49
      %p53 = pneg %p47
      %p54 = scmp.eq.s32.totalorder %s12, 1
      %p55 = por %p53, %p54
      %p56 = scmp.ne.s32.totalorder %s48, %s51
      %p57 = scmp.eq.s32.totalorder %s12, 0
      %p58 = por %p56, %p57
      %p59 = scmp.ne.s32.totalorder %s48, %s51
      %p60 = scmp.eq.s32.totalorder %s17, 1
      %p61 = por %p59, %p60
      %p62 = scmp.ne.s32.totalorder %s51, %s52
      %p63 = scmp.eq.s32.totalorder %s17, 0
      %p64 = por %p62, %p63
      %p65 = scmp.ne.s32.totalorder %s51, %s52
      %p66 = scmp.eq.s32.totalorder %s18, 1
      %p67 = por %p65, %p66
      %p69 = scmp.ne.s32.totalorder %s52, %s68
      %p70 = scmp.eq.s32.totalorder %s18, 0
      %p71 = por %p69, %p70
      %s73 = sadd.s32 %s72, 1
      %p76 = scmp.eq.s32.totalorder %s12, 1
      %p77 = scmp.ne.s32.totalorder %s72, %s74
      %p78 = scmp.eq.s32.totalorder %s12, 0
      %p79 = por %p77, %p78
      %p80 = scmp.ne.s32.totalorder %s72, %s74
      %p81 = scmp.eq.s32.totalorder %s17, 1
      %p82 = por %p80, %p81
      %p83 = scmp.ne.s32.totalorder %s74, %s75
      %p84 = scmp.eq.s32.totalorder %s17, 0
      %p85 = por %p83, %p84
      %p86 = scmp.ne.s32.totalorder %s74, %s75
      %p87 = scmp.eq.s32.totalorder %s18, 1
      %p88 = por %p86, %p87
      %p90 = scmp.ne.s32.totalorder %s75, %s89
      %p91 = scmp.eq.s32.totalorder %s18, 0
      %p92 = por %p90, %p91
      %s93 = ssub.s32 %s12, %s19
      %p94 = scmp.eq.s32.totalorder %s93, 0
      %s96 = sadd.s32 %s95, 1
      %s97 = scalar_select %p94, %s95, %s96
      %p100 = pneg %p94
      %p101 = scmp.eq.s32.totalorder %s12, 1
      %p102 = por %p100, %p101
      %p103 = scmp.ne.s32.totalorder %s95, %s98
      %p104 = scmp.eq.s32.totalorder %s12, 0
      %p105 = por %p103, %p104
      %p106 = scmp.ne.s32.totalorder %s95, %s98
      %p107 = scmp.eq.s32.totalorder %s17, 1
      %p108 = por %p106, %p107
      %p109 = scmp.ne.s32.totalorder %s98, %s99
      %p110 = scmp.eq.s32.totalorder %s17, 0
      %p111 = por %p109, %p110
      %p112 = scmp.ne.s32.totalorder %s98, %s99
      %p113 = scmp.eq.s32.totalorder %s18, 1
      %p114 = por %p112, %p113
      %p116 = scmp.ne.s32.totalorder %s99, %s115
      %p117 = scmp.eq.s32.totalorder %s18, 0
      %p118 = por %p116, %p117
      %p119 = scmp.le.s32.totalorder 1, %s12
      %p120 = scmp.lt.s32.totalorder %s12, 3
      %p121 = pnand %p119, %p120
      %p122 = pneg %p121
      // Predicated region
      $region9: #{resampler_cross_forward.1} parent=5 // pred_check
        _
      $region10: #{resampler_cross_forward.1} parent=5 // pred_check_branch
        %124 = sbr.rel (%p121) target = $region12
      $region11: #{resampler_cross_forward.1} parent=5 // pred_region
        %s125 = ssub.s32 %s12, 1
        // Predicated region
        $region13: #{resampler_cross_forward.1} parent=11 // pred_check
          %p126 = pneg %p85
        $region14: #{resampler_cross_forward.1} parent=11 // pred_check_branch
          %128 = sbr.rel (%p126) target = $region16
        $region15: #{resampler_cross_forward.1} parent=11 // pred_region
          _
        $region16: #{resampler_cross_forward.1} parent=11 // pred_fallthru
          _
      $region12: #{resampler_cross_forward.1} parent=5 // pred_fallthru
        _
      %p129 = scmp.lt.s32.totalorder %s12, 2
      // Predicated region
      $region17: #{resampler_cross_forward.1} parent=5 // pred_check
        %p130 = pneg %p129
      $region18: #{resampler_cross_forward.1} parent=5 // pred_check_branch
        %132 = sbr.rel (%p130) target = $region20
      $region19: #{resampler_cross_forward.1} parent=5 // pred_region
        // Predicated region
        $region21: #{resampler_cross_forward.1} parent=19 // pred_check
          %p133 = pneg %p32
        $region22: #{resampler_cross_forward.1} parent=19 // pred_check_branch
          %135 = sbr.rel (%p133) target = $region24
        $region23: #{resampler_cross_forward.1} parent=19 // pred_region
          %p136 = scmp.lt.s32.totalorder %s12, 1
          %s137 = scalar_select %p136, %s12, 1
          %s138 = smul.addr %s137, 2
          %s139 = smul.addr %s138, 8
          %s140 = scalar_lea.vmem %s0, %s139
        $region24: #{resampler_cross_forward.1} parent=19 // pred_fallthru
          _
        // Predicated region
        $region25: #{resampler_cross_forward.1} parent=19 // pred_check
          %p141 = pneg %p58
        $region26: #{resampler_cross_forward.1} parent=19 // pred_check_branch
          %143 = sbr.rel (%p141) target = $region28
        $region27: #{resampler_cross_forward.1} parent=19 // pred_region
          %p144 = scmp.lt.s32.totalorder %s12, 1
          %s145 = scalar_select %p144, %s12, 1
          %s146 = smul.addr %s145, 8
          %s147 = scalar_lea.vmem %s1, %s146
        $region28: #{resampler_cross_forward.1} parent=19 // pred_fallthru
          _
      $region20: #{resampler_cross_forward.1} parent=5 // pred_fallthru
        _
      %p148 = scmp.le.s32.totalorder 1, %s12
      %p149 = scmp.lt.s32.totalorder %s12, 3
      %p150 = pnand %p148, %p149
      %p151 = pneg %p150
      // Predicated region
      $region29: #{resampler_cross_forward.1} parent=5 // pred_check
        _
      $region30: #{resampler_cross_forward.1} parent=5 // pred_check_branch
        %153 = sbr.rel (%p150) target = $region32
      $region31: #{resampler_cross_forward.1} parent=5 // pred_region
        %s154 = ssub.s32 %s12, 1
        %p155 = scmp.lt.s32.totalorder %s17, 1
        %s156 = scalar_select %p155, %s17, 1
        %s157 = smul.addr %s156, 2
        %s158 = smul.addr %s157, 8
        %s159 = scalar_lea.vmem %s0, %s158
        %p160 = pneg %p38
        %p161 = pneg %p35
        %p162 = scmp.lt.s32.totalorder %s17, 1
        %s163 = scalar_select %p162, %s17, 1
        %s164 = smul.addr %s163, 8
        %s165 = scalar_lea.vmem %s1, %s164
        %p166 = pneg %p64
        %p167 = pneg %p61
        %p168 = pneg %p85
        %p169 = pneg %p82
        %p170 = pneg %p111
        %p171 = pneg %p108
        %s172 = sand.u32 %s98, 1
        %s173 = scalar_lea.sflag [#allocation3], %s172
        %s174 = sand.u32 %s98, 1
        %s175 = smul.addr %s174, 8
        %s176 = scalar_lea.vmem [#allocation2], %s175
        %p177 = scmp.lt.s32.totalorder %s17, 1
        %s178 = scalar_select %p177, %s17, 1
        %s179 = smul.addr %s178, 2
        %s180 = smul.addr %s179, 8
        %s181 = scalar_lea.vmem %s0, %s180
        %p182 = scmp.lt.s32.totalorder %s17, 1
        %s183 = scalar_select %p182, %s17, 1
        %s184 = smul.addr %s183, 8
        %s185 = scalar_lea.vmem %s1, %s184
        %v186 = vld [vmem:[%s181] sm:$0xff]
        %v187 = vld [vmem:[%s181 + $0x8] sm:$0xff]
        %v188 = vld [vmem:[%s185] sm:$0xff]
        %v189 = vld [vmem:[%s2] sm:$0xff]
        %v190 = vld [vmem:[%s2 + $0x8] sm:$0xff]
        %v191 = vld [vmem:[%s2 + $0x10] sm:$0xff]
        %v192 = vld [vmem:[%s2 + $0x18] sm:$0x1]
        %v193 = vlaneseq
        %v194 = vshrl.u32 %v193, 7
        %v195 = vsub.s32 0, %v194
        %v196 = vrot.slane %v192, %v195
        %vm197 = vcmask 195584
        %v199 = vsel %vm197, %v186, 0
        %v202 = vsel %vm197, %v187, 0
        %204 = vmatprep.subr.mxu0 0.0
        %205 = vmatpush1.msra.mxu0 %v189
        %206 = vmatprep.subr.mxu0 0.0
        %207 = vmatpush1.msra.mxu0 %v190
        %208 = vmatprep.subr.mxu0 0.0
        %209 = vmatpush1.msra.mxu0 %v191
        %210 = vmatprep.subr.mxu0 0.0
        %211 = vmatpush1.msra.mxu0 0.0
        %212 = vmatprep.subr.mxu0 0.0
        %213 = vmatpush1.msra.mxu0 0.0
        %214 = vmatprep.subr.mxu0 0.0
        %215 = vmatpush1.msra.mxu0 0.0
        %216 = vmatprep.subr.mxu0 0.0
        %217 = vmatpush1.msra.mxu0 0.0
        %218 = vmatprep.subr.mxu0 0.0
        %219 = vmatpush1.msra.mxu0 0.0
        %220 = vmatprep.subr.mxu0 0.0
        %221 = vmatpush1.msra.mxu0 0.0
        %222 = vmatprep.subr.mxu0 0.0
        %223 = vmatpush1.msra.mxu0 0.0
        %224 = vmatprep.subr.mxu0 0.0
        %225 = vmatpush1.msra.mxu0 0.0
        %226 = vmatprep.subr.mxu0 0.0
        %227 = vmatpush1.msra.mxu0 0.0
        %228 = vmatprep.subr.mxu0 0.0
        %229 = vmatpush1.msra.mxu0 0.0
        %230 = vmatprep.subr.mxu0 0.0
        %231 = vmatpush1.msra.mxu0 0.0
        %232 = vmatprep.subr.mxu0 0.0
        %233 = vmatpush1.msra.mxu0 0.0
        %234 = vmatprep.subr.mxu0 0.0
        %235 = vmatpush1.msra.mxu0 0.0
        %236 = vmatprep.subr.mxu0 0.0
        %237 = vmatpush1.msra.mxu0 0.0
        %238 = vmatprep.subr.mxu0 0.0
        %239 = vmatpush1.msra.mxu0 0.0
        %240 = vmatprep.subr.mxu0 0.0
        %241 = vmatpush1.msra.mxu0 0.0
        %242 = vmatprep.subr.mxu0 0.0
        %243 = vmatpush1.msra.mxu0 0.0
        %244 = vmatprep.subr.mxu0 0.0
        %245 = vmatpush1.msra.mxu0 0.0
        %246 = vmatprep.subr.mxu0 0.0
        %247 = vmatpush1.msra.mxu0 0.0
        %248 = vmatprep.subr.mxu0 0.0
        %249 = vmatpush1.msra.mxu0 0.0
        %250 = vmatprep.subr.mxu0 0.0
        %251 = vmatpush1.msra.mxu0 0.0
        %252 = vmatprep.subr.mxu0 0.0
        %253 = vmatpush1.msra.mxu0 0.0
        %254 = vmatprep.subr.mxu0 0.0
        %255 = vmatpush1.msra.mxu0 0.0
        %256 = vmatprep.subr.mxu0 0.0
        %257 = vmatpush1.msra.mxu0 0.0
        %258 = vmatprep.subr.mxu0 0.0
        %259 = vmatpush1.msra.mxu0 0.0
        %260 = vmatprep.subr.mxu0 0.0
        %261 = vmatpush1.msra.mxu0 0.0
        %262 = vmatprep.subr.mxu0 0.0
        %263 = vmatpush1.msra.mxu0 0.0
        %264 = vmatprep.subr.mxu0 0.0
        %265 = vmatpush1.msra.mxu0 0.0
        %266 = vmatprep.subr.mxu0 0.0
        %267 = vmatpush1.msra.mxu0 0.0
        %268 = vmatprep.mubr.f32.mxu0 0.0
        %269 = vmatmul.mubr.f32.gmra.mrb[0].mxu0 %v199
        %v270 = vpop.f32.mrb[0].mxu0
        %v271 = vadd.f32 %v196, %v270
        %v272 = vpop.f32.mrb[0].mxu0
        %273 = vmatprep.mubr.f32.mxu0 0.0
        %274 = vmatmul.mubr.f32.gmra.mrb[0].mxu0 %v202
        %v275 = vpop.f32.mrb[0].mxu0
        %v276 = vadd.f32 %v196, %v275
        %v277 = vpop.f32.mrb[0].mxu0
        %278 = vdwg.mxu0
        %v279 = vld [vmem:[%s2 + $0x20] sm:$0x1]
        %v280 = vld [vmem:[%s2 + $0x28] sm:$0x1]
        %vm281 = vcmask 261120
        %v282 = vsel %vm281, %v271, 0.0
        %283 = vadd.xlane.f32.xlu0 %v282
        %v284 = vpop.xlane.xlu0 %283
        %v285 = vsel %vm281, %v276, 0.0
        %286 = vadd.xlane.f32.xlu0 %v285
        %v287 = vpop.xlane.xlu0 %286
        %v288 = vrcp.pop 32.0
        %v289 = vmul.f32 %v284, %v288
        %v290 = vmul.f32 %v287, %v288
        %v291 = vsub.f32 %v271, %v289
        %v292 = vsub.f32 %v276, %v290
        %v293 = vmul.f32 %v291, %v291
        %v294 = vmul.f32 %v292, %v292
        %v295 = vsel %vm281, %v293, 0.0
        %296 = vadd.xlane.f32.xlu0 %v295
        %v297 = vpop.xlane.xlu0 %296
        %v298 = vsel %vm281, %v294, 0.0
        %299 = vadd.xlane.f32.xlu0 %v298
        %v300 = vpop.xlane.xlu0 %299
        %v301 = vmul.f32 %v297, %v288
        %v302 = vmul.f32 %v300, %v288
        %v303 = vadd.f32 %v301, 1e-05
        %v304 = vadd.f32 %v302, 1e-05
        %v305 = vrsqrt.pop %v303
        %v306 = vrsqrt.pop %v304
        %v307 = vmul.f32 %v291, %v305
        %v308 = vmul.f32 %v292, %v306
        %v309 = vlaneseq
        %v310 = vshrl.u32 %v309, 7
        %v311 = vsub.s32 0, %v310
        %v312 = vrot.slane %v279, %v311
        %v313 = vmul.f32 %v307, %v312
        %v314 = vmul.f32 %v308, %v312
        %v315 = vlaneseq
        %v316 = vshrl.u32 %v315, 7
        %v317 = vsub.s32 0, %v316
        %v318 = vrot.slane %v280, %v317
        %v319 = vadd.f32 %v313, %v318
        %v320 = vadd.f32 %v314, %v318
        %v321 = vld [vmem:[%s2 + $0x30] sm:$0x1]
        %v322 = vld [vmem:[%s2 + $0x38] sm:$0x1]
        %v323 = vsel %vm281, %v188, 0.0
        %324 = vadd.xlane.f32.xlu0 %v323
        %v325 = vpop.xlane.xlu0 %324
        %v326 = vmul.f32 %v325, %v288
        %v327 = vsub.f32 %v188, %v326
        %v328 = vmul.f32 %v327, %v327
        %v329 = vsel %vm281, %v328, 0.0
        %330 = vadd.xlane.f32.xlu0 %v329
        %v331 = vpop.xlane.xlu0 %330
        %v332 = vmul.f32 %v331, %v288
        %v333 = vadd.f32 %v332, 1e-05
        %v334 = vrsqrt.pop %v333
        %v335 = vmul.f32 %v327, %v334
        %v336 = vlaneseq
        %v337 = vshrl.u32 %v336, 7
        %v338 = vsub.s32 0, %v337
        %v339 = vrot.slane %v321, %v338
        %v340 = vmul.f32 %v335, %v339
        %v341 = vlaneseq
        %v342 = vshrl.u32 %v341, 7
        %v343 = vsub.s32 0, %v342
        %v344 = vrot.slane %v322, %v343
        %v345 = vadd.f32 %v340, %v344
        %v346 = vld [vmem:[%s2 + $0x40] sm:$0xff]
        %v347 = vld [vmem:[%s2 + $0x48] sm:$0xff]
        %v348 = vld [vmem:[%s2 + $0x50] sm:$0xff]
        %v349 = vld [vmem:[%s2 + $0x58] sm:$0xff]
        %v350 = vld [vmem:[%s2 + $0x60] sm:$0xff]
        %v351 = vld [vmem:[%s2 + $0x68] sm:$0xff]
        %v352 = vld [vmem:[%s2 + $0x70] sm:$0xff]
        %v353 = vld [vmem:[%s2 + $0x78] sm:$0xff]
        %v354 = vld [vmem:[%s2 + $0x80] sm:$0xff]
        %v355 = vld [vmem:[%s2 + $0x88] sm:$0xff]
        %v356 = vld [vmem:[%s2 + $0x90] sm:$0xff]
        %v357 = vld [vmem:[%s2 + $0x98] sm:$0xff]
        %v358 = vld [vmem:[%s2 + $0xa0] sm:$0xff]
        %v359 = vld [vmem:[%s2 + $0xa8] sm:$0xff]
        %v360 = vld [vmem:[%s2 + $0xb0] sm:$0xff]
        %v361 = vld [vmem:[%s2 + $0xb8] sm:$0xff]
        %v363 = vsel %vm281, %v345, 0
        %v366 = vsel %vm281, %v346, 0
        %368 = vmatprep.subr.mxu0 0.0
        %369 = vmatpush1.xpose.msra.mxu0 %v366
        %370 = vmatprep.subr.mxu0 0.0
        %371 = vmatpush1.xpose.msra.mxu0 0.0
        %372 = vmatprep.subr.mxu0 0.0
        %373 = vmatpush1.xpose.msra.mxu0 0.0
        %374 = vmatprep.subr.mxu0 0.0
        %375 = vmatpush1.xpose.msra.mxu0 0.0
        %376 = vmatprep.subr.mxu0 0.0
        %377 = vmatpush1.xpose.msra.mxu0 0.0
        %378 = vmatprep.subr.mxu0 0.0
        %379 = vmatpush1.xpose.msra.mxu0 0.0
        %380 = vmatprep.subr.mxu0 0.0
        %381 = vmatpush1.xpose.msra.mxu0 0.0
        %382 = vmatprep.subr.mxu0 0.0
        %383 = vmatpush1.xpose.msra.mxu0 0.0
        %384 = vmatprep.subr.mxu0 0.0
        %385 = vmatpush1.xpose.msra.mxu0 0.0
        %386 = vmatprep.subr.mxu0 0.0
        %387 = vmatpush1.xpose.msra.mxu0 0.0
        %388 = vmatprep.subr.mxu0 0.0
        %389 = vmatpush1.xpose.msra.mxu0 0.0
        %390 = vmatprep.subr.mxu0 0.0
        %391 = vmatpush1.xpose.msra.mxu0 0.0
        %392 = vmatprep.subr.mxu0 0.0
        %393 = vmatpush1.xpose.msra.mxu0 0.0
        %394 = vmatprep.subr.mxu0 0.0
        %395 = vmatpush1.xpose.msra.mxu0 0.0
        %396 = vmatprep.subr.mxu0 0.0
        %397 = vmatpush1.xpose.msra.mxu0 0.0
        %398 = vmatprep.subr.mxu0 0.0
        %399 = vmatpush1.xpose.msra.mxu0 0.0
        %400 = vmatprep.subr.mxu0 0.0
        %401 = vmatpush1.xpose.msra.mxu0 0.0
        %402 = vmatprep.subr.mxu0 0.0
        %403 = vmatpush1.xpose.msra.mxu0 0.0
        %404 = vmatprep.subr.mxu0 0.0
        %405 = vmatpush1.xpose.msra.mxu0 0.0
        %406 = vmatprep.subr.mxu0 0.0
        %407 = vmatpush1.xpose.msra.mxu0 0.0
        %408 = vmatprep.subr.mxu0 0.0
        %409 = vmatpush1.xpose.msra.mxu0 0.0
        %410 = vmatprep.subr.mxu0 0.0
        %411 = vmatpush1.xpose.msra.mxu0 0.0
        %412 = vmatprep.subr.mxu0 0.0
        %413 = vmatpush1.xpose.msra.mxu0 0.0
        %414 = vmatprep.subr.mxu0 0.0
        %415 = vmatpush1.xpose.msra.mxu0 0.0
        %416 = vmatprep.subr.mxu0 0.0
        %417 = vmatpush1.xpose.msra.mxu0 0.0
        %418 = vmatprep.subr.mxu0 0.0
        %419 = vmatpush1.xpose.msra.mxu0 0.0
        %420 = vmatprep.subr.mxu0 0.0
        %421 = vmatpush1.xpose.msra.mxu0 0.0
        %422 = vmatprep.subr.mxu0 0.0
        %423 = vmatpush1.xpose.msra.mxu0 0.0
        %424 = vmatprep.subr.mxu0 0.0
        %425 = vmatpush1.xpose.msra.mxu0 0.0
        %426 = vmatprep.subr.mxu0 0.0
        %427 = vmatpush1.xpose.msra.mxu0 0.0
        %428 = vmatprep.subr.mxu0 0.0
        %429 = vmatpush1.xpose.msra.mxu0 0.0
        %430 = vmatprep.subr.mxu0 0.0
        %431 = vmatpush1.xpose.msra.mxu0 0.0
        %432 = vmatprep.mubr.f32.mxu0 0.0
        %433 = vmatmul.mubr.f32.gmra.mrb[0].mxu0 %v363
        %v434 = vpop.f32.mrb[0].mxu0
        %v435 = vadd.f32 0.0, %v434
        %v436 = vpop.f32.mrb[0].mxu0
        %437 = vdwg.mxu0
        %v439 = vsel %vm281, %v347, 0
        %441 = vmatprep.subr.mxu0 0.0
        %442 = vmatpush1.xpose.msra.mxu0 %v439
        %443 = vmatprep.subr.mxu0 0.0
        %444 = vmatpush1.xpose.msra.mxu0 0.0
        %445 = vmatprep.subr.mxu0 0.0
        %446 = vmatpush1.xpose.msra.mxu0 0.0
        %447 = vmatprep.subr.mxu0 0.0
        %448 = vmatpush1.xpose.msra.mxu0 0.0
        %449 = vmatprep.subr.mxu0 0.0
        %450 = vmatpush1.xpose.msra.mxu0 0.0
        %451 = vmatprep.subr.mxu0 0.0
        %452 = vmatpush1.xpose.msra.mxu0 0.0
        %453 = vmatprep.subr.mxu0 0.0
        %454 = vmatpush1.xpose.msra.mxu0 0.0
        %455 = vmatprep.subr.mxu0 0.0
        %456 = vmatpush1.xpose.msra.mxu0 0.0
        %457 = vmatprep.subr.mxu0 0.0
        %458 = vmatpush1.xpose.msra.mxu0 0.0
        %459 = vmatprep.subr.mxu0 0.0
        %460 = vmatpush1.xpose.msra.mxu0 0.0
        %461 = vmatprep.subr.mxu0 0.0
        %462 = vmatpush1.xpose.msra.mxu0 0.0
        %463 = vmatprep.subr.mxu0 0.0
        %464 = vmatpush1.xpose.msra.mxu0 0.0
        %465 = vmatprep.subr.mxu0 0.0
        %466 = vmatpush1.xpose.msra.mxu0 0.0
        %467 = vmatprep.subr.mxu0 0.0
        %468 = vmatpush1.xpose.msra.mxu0 0.0
        %469 = vmatprep.subr.mxu0 0.0
        %470 = vmatpush1.xpose.msra.mxu0 0.0
        %471 = vmatprep.subr.mxu0 0.0
        %472 = vmatpush1.xpose.msra.mxu0 0.0
        %473 = vmatprep.subr.mxu0 0.0
        %474 = vmatpush1.xpose.msra.mxu0 0.0
        %475 = vmatprep.subr.mxu0 0.0
        %476 = vmatpush1.xpose.msra.mxu0 0.0
        %477 = vmatprep.subr.mxu0 0.0
        %478 = vmatpush1.xpose.msra.mxu0 0.0
        %479 = vmatprep.subr.mxu0 0.0
        %480 = vmatpush1.xpose.msra.mxu0 0.0
        %481 = vmatprep.subr.mxu0 0.0
        %482 = vmatpush1.xpose.msra.mxu0 0.0
        %483 = vmatprep.subr.mxu0 0.0
        %484 = vmatpush1.xpose.msra.mxu0 0.0
        %485 = vmatprep.subr.mxu0 0.0
        %486 = vmatpush1.xpose.msra.mxu0 0.0
        %487 = vmatprep.subr.mxu0 0.0
        %488 = vmatpush1.xpose.msra.mxu0 0.0
        %489 = vmatprep.subr.mxu0 0.0
        %490 = vmatpush1.xpose.msra.mxu0 0.0
        %491 = vmatprep.subr.mxu0 0.0
        %492 = vmatpush1.xpose.msra.mxu0 0.0
        %493 = vmatprep.subr.mxu0 0.0
        %494 = vmatpush1.xpose.msra.mxu0 0.0
        %495 = vmatprep.subr.mxu0 0.0
        %496 = vmatpush1.xpose.msra.mxu0 0.0
        %497 = vmatprep.subr.mxu0 0.0
        %498 = vmatpush1.xpose.msra.mxu0 0.0
        %499 = vmatprep.subr.mxu0 0.0
        %500 = vmatpush1.xpose.msra.mxu0 0.0
        %501 = vmatprep.subr.mxu0 0.0
        %502 = vmatpush1.xpose.msra.mxu0 0.0
        %503 = vmatprep.subr.mxu0 0.0
        %504 = vmatpush1.xpose.msra.mxu0 0.0
        %505 = vmatprep.mubr.f32.mxu0 0.0
        %506 = vmatmul.mubr.f32.gmra.mrb[0].mxu0 %v363
        %v507 = vpop.f32.mrb[0].mxu0
        %v508 = vadd.f32 0.0, %v507
        %v509 = vpop.f32.mrb[0].mxu0
        %510 = vdwg.mxu0
        %v512 = vsel %vm281, %v348, 0
        %514 = vmatprep.subr.mxu0 0.0
        %515 = vmatpush1.xpose.msra.mxu0 %v512
        %516 = vmatprep.subr.mxu0 0.0
        %517 = vmatpush1.xpose.msra.mxu0 0.0
        %518 = vmatprep.subr.mxu0 0.0
        %519 = vmatpush1.xpose.msra.mxu0 0.0
        %520 = vmatprep.subr.mxu0 0.0
        %521 = vmatpush1.xpose.msra.mxu0 0.0
        %522 = vmatprep.subr.mxu0 0.0
        %523 = vmatpush1.xpose.msra.mxu0 0.0
        %524 = vmatprep.subr.mxu0 0.0
        %525 = vmatpush1.xpose.msra.mxu0 0.0
        %526 = vmatprep.subr.mxu0 0.0
        %527 = vmatpush1.xpose.msra.mxu0 0.0
        %528 = vmatprep.subr.mxu0 0.0
        %529 = vmatpush1.xpose.msra.mxu0 0.0
        %530 = vmatprep.subr.mxu0 0.0
        %531 = vmatpush1.xpose.msra.mxu0 0.0
        %532 = vmatprep.subr.mxu0 0.0
        %533 = vmatpush1.xpose.msra.mxu0 0.0
        %534 = vmatprep.subr.mxu0 0.0
        %535 = vmatpush1.xpose.msra.mxu0 0.0
        %536 = vmatprep.subr.mxu0 0.0
        %537 = vmatpush1.xpose.msra.mxu0 0.0
        %538 = vmatprep.subr.mxu0 0.0
        %539 = vmatpush1.xpose.msra.mxu0 0.0
        %540 = vmatprep.subr.mxu0 0.0
        %541 = vmatpush1.xpose.msra.mxu0 0.0
        %542 = vmatprep.subr.mxu0 0.0
        %543 = vmatpush1.xpose.msra.mxu0 0.0
        %544 = vmatprep.subr.mxu0 0.0
        %545 = vmatpush1.xpose.msra.mxu0 0.0
        %546 = vmatprep.subr.mxu0 0.0
        %547 = vmatpush1.xpose.msra.mxu0 0.0
        %548 = vmatprep.subr.mxu0 0.0
        %549 = vmatpush1.xpose.msra.mxu0 0.0
        %550 = vmatprep.subr.mxu0 0.0
        %551 = vmatpush1.xpose.msra.mxu0 0.0
        %552 = vmatprep.subr.mxu0 0.0
        %553 = vmatpush1.xpose.msra.mxu0 0.0
        %554 = vmatprep.subr.mxu0 0.0
        %555 = vmatpush1.xpose.msra.mxu0 0.0
        %556 = vmatprep.subr.mxu0 0.0
        %557 = vmatpush1.xpose.msra.mxu0 0.0
        %558 = vmatprep.subr.mxu0 0.0
        %559 = vmatpush1.xpose.msra.mxu0 0.0
        %560 = vmatprep.subr.mxu0 0.0
        %561 = vmatpush1.xpose.msra.mxu0 0.0
        %562 = vmatprep.subr.mxu0 0.0
        %563 = vmatpush1.xpose.msra.mxu0 0.0
        %564 = vmatprep.subr.mxu0 0.0
        %565 = vmatpush1.xpose.msra.mxu0 0.0
        %566 = vmatprep.subr.mxu0 0.0
        %567 = vmatpush1.xpose.msra.mxu0 0.0
        %568 = vmatprep.subr.mxu0 0.0
        %569 = vmatpush1.xpose.msra.mxu0 0.0
        %570 = vmatprep.subr.mxu0 0.0
        %571 = vmatpush1.xpose.msra.mxu0 0.0
        %572 = vmatprep.subr.mxu0 0.0
        %573 = vmatpush1.xpose.msra.mxu0 0.0
        %574 = vmatprep.subr.mxu0 0.0
        %575 = vmatpush1.xpose.msra.mxu0 0.0
        %576 = vmatprep.subr.mxu0 0.0
        %577 = vmatpush1.xpose.msra.mxu0 0.0
        %578 = vmatprep.mubr.f32.mxu0 0.0
        %579 = vmatmul.mubr.f32.gmra.mrb[0].mxu0 %v363
        %v580 = vpop.f32.mrb[0].mxu0
        %v581 = vadd.f32 0.0, %v580
        %v582 = vpop.f32.mrb[0].mxu0
        %583 = vdwg.mxu0
        %v585 = vsel %vm281, %v349, 0
        %587 = vmatprep.subr.mxu0 0.0
        %588 = vmatpush1.xpose.msra.mxu0 %v585
        %589 = vmatprep.subr.mxu0 0.0
        %590 = vmatpush1.xpose.msra.mxu0 0.0
        %591 = vmatprep.subr.mxu0 0.0
        %592 = vmatpush1.xpose.msra.mxu0 0.0
        %593 = vmatprep.subr.mxu0 0.0
        %594 = vmatpush1.xpose.msra.mxu0 0.0
        %595 = vmatprep.subr.mxu0 0.0
        %596 = vmatpush1.xpose.msra.mxu0 0.0
        %597 = vmatprep.subr.mxu0 0.0
        %598 = vmatpush1.xpose.msra.mxu0 0.0
        %599 = vmatprep.subr.mxu0 0.0
        %600 = vmatpush1.xpose.msra.mxu0 0.0
        %601 = vmatprep.subr.mxu0 0.0
        %602 = vmatpush1.xpose.msra.mxu0 0.0
        %603 = vmatprep.subr.mxu0 0.0
        %604 = vmatpush1.xpose.msra.mxu0 0.0
        %605 = vmatprep.subr.mxu0 0.0
        %606 = vmatpush1.xpose.msra.mxu0 0.0
        %607 = vmatprep.subr.mxu0 0.0
        %608 = vmatpush1.xpose.msra.mxu0 0.0
        %609 = vmatprep.subr.mxu0 0.0
        %610 = vmatpush1.xpose.msra.mxu0 0.0
        %611 = vmatprep.subr.mxu0 0.0
        %612 = vmatpush1.xpose.msra.mxu0 0.0
        %613 = vmatprep.subr.mxu0 0.0
        %614 = vmatpush1.xpose.msra.mxu0 0.0
        %615 = vmatprep.subr.mxu0 0.0
        %616 = vmatpush1.xpose.msra.mxu0 0.0
        %617 = vmatprep.subr.mxu0 0.0
        %618 = vmatpush1.xpose.msra.mxu0 0.0
        %619 = vmatprep.subr.mxu0 0.0
        %620 = vmatpush1.xpose.msra.mxu0 0.0
        %621 = vmatprep.subr.mxu0 0.0
        %622 = vmatpush1.xpose.msra.mxu0 0.0
        %623 = vmatprep.subr.mxu0 0.0
        %624 = vmatpush1.xpose.msra.mxu0 0.0
        %625 = vmatprep.subr.mxu0 0.0
        %626 = vmatpush1.xpose.msra.mxu0 0.0
        %627 = vmatprep.subr.mxu0 0.0
        %628 = vmatpush1.xpose.msra.mxu0 0.0
        %629 = vmatprep.subr.mxu0 0.0
        %630 = vmatpush1.xpose.msra.mxu0 0.0
        %631 = vmatprep.subr.mxu0 0.0
        %632 = vmatpush1.xpose.msra.mxu0 0.0
        %633 = vmatprep.subr.mxu0 0.0
        %634 = vmatpush1.xpose.msra.mxu0 0.0
        %635 = vmatprep.subr.mxu0 0.0
        %636 = vmatpush1.xpose.msra.mxu0 0.0
        %637 = vmatprep.subr.mxu0 0.0
        %638 = vmatpush1.xpose.msra.mxu0 0.0
        %639 = vmatprep.subr.mxu0 0.0
        %640 = vmatpush1.xpose.msra.mxu0 0.0
        %641 = vmatprep.subr.mxu0 0.0
        %642 = vmatpush1.xpose.msra.mxu0 0.0
        %643 = vmatprep.subr.mxu0 0.0
        %644 = vmatpush1.xpose.msra.mxu0 0.0
        %645 = vmatprep.subr.mxu0 0.0
        %646 = vmatpush1.xpose.msra.mxu0 0.0
        %647 = vmatprep.subr.mxu0 0.0
        %648 = vmatpush1.xpose.msra.mxu0 0.0
        %649 = vmatprep.subr.mxu0 0.0
        %650 = vmatpush1.xpose.msra.mxu0 0.0
        %651 = vmatprep.mubr.f32.mxu0 0.0
        %652 = vmatmul.mubr.f32.gmra.mrb[0].mxu0 %v363
        %v653 = vpop.f32.mrb[0].mxu0
        %v654 = vadd.f32 0.0, %v653
        %v655 = vpop.f32.mrb[0].mxu0
        %656 = vdwg.mxu0
        %v658 = vsel %vm281, %v319, 0
        %v661 = vsel %vm281, %v320, 0
        %v664 = vsel %vm281, %v350, 0
        %666 = vmatprep.subr.mxu0 0.0
        %667 = vmatpush1.xpose.msra.mxu0 %v664
        %668 = vmatprep.subr.mxu0 0.0
        %669 = vmatpush1.xpose.msra.mxu0 0.0
        %670 = vmatprep.subr.mxu0 0.0
        %671 = vmatpush1.xpose.msra.mxu0 0.0
        %672 = vmatprep.subr.mxu0 0.0
        %673 = vmatpush1.xpose.msra.mxu0 0.0
        %674 = vmatprep.subr.mxu0 0.0
        %675 = vmatpush1.xpose.msra.mxu0 0.0
        %676 = vmatprep.subr.mxu0 0.0
        %677 = vmatpush1.xpose.msra.mxu0 0.0
        %678 = vmatprep.subr.mxu0 0.0
        %679 = vmatpush1.xpose.msra.mxu0 0.0
        %680 = vmatprep.subr.mxu0 0.0
        %681 = vmatpush1.xpose.msra.mxu0 0.0
        %682 = vmatprep.subr.mxu0 0.0
        %683 = vmatpush1.xpose.msra.mxu0 0.0
        %684 = vmatprep.subr.mxu0 0.0
        %685 = vmatpush1.xpose.msra.mxu0 0.0
        %686 = vmatprep.subr.mxu0 0.0
        %687 = vmatpush1.xpose.msra.mxu0 0.0
        %688 = vmatprep.subr.mxu0 0.0
        %689 = vmatpush1.xpose.msra.mxu0 0.0
        %690 = vmatprep.subr.mxu0 0.0
        %691 = vmatpush1.xpose.msra.mxu0 0.0
        %692 = vmatprep.subr.mxu0 0.0
        %693 = vmatpush1.xpose.msra.mxu0 0.0
        %694 = vmatprep.subr.mxu0 0.0
        %695 = vmatpush1.xpose.msra.mxu0 0.0
        %696 = vmatprep.subr.mxu0 0.0
        %697 = vmatpush1.xpose.msra.mxu0 0.0
        %698 = vmatprep.subr.mxu0 0.0
        %699 = vmatpush1.xpose.msra.mxu0 0.0
        %700 = vmatprep.subr.mxu0 0.0
        %701 = vmatpush1.xpose.msra.mxu0 0.0
        %702 = vmatprep.subr.mxu0 0.0
        %703 = vmatpush1.xpose.msra.mxu0 0.0
        %704 = vmatprep.subr.mxu0 0.0
        %705 = vmatpush1.xpose.msra.mxu0 0.0
        %706 = vmatprep.subr.mxu0 0.0
        %707 = vmatpush1.xpose.msra.mxu0 0.0
        %708 = vmatprep.subr.mxu0 0.0
        %709 = vmatpush1.xpose.msra.mxu0 0.0
        %710 = vmatprep.subr.mxu0 0.0
        %711 = vmatpush1.xpose.msra.mxu0 0.0
        %712 = vmatprep.subr.mxu0 0.0
        %713 = vmatpush1.xpose.msra.mxu0 0.0
        %714 = vmatprep.subr.mxu0 0.0
        %715 = vmatpush1.xpose.msra.mxu0 0.0
        %716 = vmatprep.subr.mxu0 0.0
        %717 = vmatpush1.xpose.msra.mxu0 0.0
        %718 = vmatprep.subr.mxu0 0.0
        %719 = vmatpush1.xpose.msra.mxu0 0.0
        %720 = vmatprep.subr.mxu0 0.0
        %721 = vmatpush1.xpose.msra.mxu0 0.0
        %722 = vmatprep.subr.mxu0 0.0
        %723 = vmatpush1.xpose.msra.mxu0 0.0
        %724 = vmatprep.subr.mxu0 0.0
        %725 = vmatpush1.xpose.msra.mxu0 0.0
        %726 = vmatprep.subr.mxu0 0.0
        %727 = vmatpush1.xpose.msra.mxu0 0.0
        %728 = vmatprep.subr.mxu0 0.0
        %729 = vmatpush1.xpose.msra.mxu0 0.0
        %730 = vmatprep.mubr.f32.mxu0 0.0
        %731 = vmatmul.mubr.f32.gmra.mrb[0].mxu0 %v658
        %v732 = vpop.f32.mrb[0].mxu0
        %v733 = vadd.f32 0.0, %v732
        %v734 = vpop.f32.mrb[0].mxu0
        %735 = vmatprep.mubr.f32.mxu0 0.0
        %736 = vmatmul.mubr.f32.gmra.mrb[0].mxu0 %v661
        %v737 = vpop.f32.mrb[0].mxu0
        %v738 = vadd.f32 0.0, %v737
        %v739 = vpop.f32.mrb[0].mxu0
        %740 = vmatprep.mubr.f32.mxu0 0.0
        %741 = vmatmul.mubr.f32.gmra.mrb[0].mxu0 %v363
        %v742 = vpop.f32.mrb[0].mxu0
        %v743 = vadd.f32 0.0, %v742
        %v744 = vpop.f32.mrb[0].mxu0
        %745 = vdwg.mxu0
        %v747 = vsel %vm281, %v351, 0
        %749 = vmatprep.subr.mxu0 0.0
        %750 = vmatpush1.xpose.msra.mxu0 %v747
        %751 = vmatprep.subr.mxu0 0.0
        %752 = vmatpush1.xpose.msra.mxu0 0.0
        %753 = vmatprep.subr.mxu0 0.0
        %754 = vmatpush1.xpose.msra.mxu0 0.0
        %755 = vmatprep.subr.mxu0 0.0
        %756 = vmatpush1.xpose.msra.mxu0 0.0
        %757 = vmatprep.subr.mxu0 0.0
        %758 = vmatpush1.xpose.msra.mxu0 0.0
        %759 = vmatprep.subr.mxu0 0.0
        %760 = vmatpush1.xpose.msra.mxu0 0.0
        %761 = vmatprep.subr.mxu0 0.0
        %762 = vmatpush1.xpose.msra.mxu0 0.0
        %763 = vmatprep.subr.mxu0 0.0
        %764 = vmatpush1.xpose.msra.mxu0 0.0
        %765 = vmatprep.subr.mxu0 0.0
        %766 = vmatpush1.xpose.msra.mxu0 0.0
        %767 = vmatprep.subr.mxu0 0.0
        %768 = vmatpush1.xpose.msra.mxu0 0.0
        %769 = vmatprep.subr.mxu0 0.0
        %770 = vmatpush1.xpose.msra.mxu0 0.0
        %771 = vmatprep.subr.mxu0 0.0
        %772 = vmatpush1.xpose.msra.mxu0 0.0
        %773 = vmatprep.subr.mxu0 0.0
        %774 = vmatpush1.xpose.msra.mxu0 0.0
        %775 = vmatprep.subr.mxu0 0.0
        %776 = vmatpush1.xpose.msra.mxu0 0.0
        %777 = vmatprep.subr.mxu0 0.0
        %778 = vmatpush1.xpose.msra.mxu0 0.0
        %779 = vmatprep.subr.mxu0 0.0
        %780 = vmatpush1.xpose.msra.mxu0 0.0
        %781 = vmatprep.subr.mxu0 0.0
        %782 = vmatpush1.xpose.msra.mxu0 0.0
        %783 = vmatprep.subr.mxu0 0.0
        %784 = vmatpush1.xpose.msra.mxu0 0.0
        %785 = vmatprep.subr.mxu0 0.0
        %786 = vmatpush1.xpose.msra.mxu0 0.0
        %787 = vmatprep.subr.mxu0 0.0
        %788 = vmatpush1.xpose.msra.mxu0 0.0
        %789 = vmatprep.subr.mxu0 0.0
        %790 = vmatpush1.xpose.msra.mxu0 0.0
        %791 = vmatprep.subr.mxu0 0.0
        %792 = vmatpush1.xpose.msra.mxu0 0.0
        %793 = vmatprep.subr.mxu0 0.0
        %794 = vmatpush1.xpose.msra.mxu0 0.0
        %795 = vmatprep.subr.mxu0 0.0
        %796 = vmatpush1.xpose.msra.mxu0 0.0
        %797 = vmatprep.subr.mxu0 0.0
        %798 = vmatpush1.xpose.msra.mxu0 0.0
        %799 = vmatprep.subr.mxu0 0.0
        %800 = vmatpush1.xpose.msra.mxu0 0.0
        %801 = vmatprep.subr.mxu0 0.0
        %802 = vmatpush1.xpose.msra.mxu0 0.0
        %803 = vmatprep.subr.mxu0 0.0
        %804 = vmatpush1.xpose.msra.mxu0 0.0
        %805 = vmatprep.subr.mxu0 0.0
        %806 = vmatpush1.xpose.msra.mxu0 0.0
        %807 = vmatprep.subr.mxu0 0.0
        %808 = vmatpush1.xpose.msra.mxu0 0.0
        %809 = vmatprep.subr.mxu0 0.0
        %810 = vmatpush1.xpose.msra.mxu0 0.0
        %811 = vmatprep.subr.mxu0 0.0
        %812 = vmatpush1.xpose.msra.mxu0 0.0
        %813 = vmatprep.mubr.f32.mxu0 0.0
        %814 = vmatmul.mubr.f32.gmra.mrb[0].mxu0 %v658
        %v815 = vpop.f32.mrb[0].mxu0
        %v816 = vadd.f32 0.0, %v815
        %v817 = vpop.f32.mrb[0].mxu0
        %818 = vmatprep.mubr.f32.mxu0 0.0
        %819 = vmatmul.mubr.f32.gmra.mrb[0].mxu0 %v661
        %v820 = vpop.f32.mrb[0].mxu0
        %v821 = vadd.f32 0.0, %v820
        %v822 = vpop.f32.mrb[0].mxu0
        %823 = vmatprep.mubr.f32.mxu0 0.0
        %824 = vmatmul.mubr.f32.gmra.mrb[0].mxu0 %v363
        %v825 = vpop.f32.mrb[0].mxu0
        %v826 = vadd.f32 0.0, %v825
        %v827 = vpop.f32.mrb[0].mxu0
        %828 = vdwg.mxu0
        %v830 = vsel %vm281, %v352, 0
        %832 = vmatprep.subr.mxu0 0.0
        %833 = vmatpush1.xpose.msra.mxu0 %v830
        %834 = vmatprep.subr.mxu0 0.0
        %835 = vmatpush1.xpose.msra.mxu0 0.0
        %836 = vmatprep.subr.mxu0 0.0
        %837 = vmatpush1.xpose.msra.mxu0 0.0
        %838 = vmatprep.subr.mxu0 0.0
        %839 = vmatpush1.xpose.msra.mxu0 0.0
        %840 = vmatprep.subr.mxu0 0.0
        %841 = vmatpush1.xpose.msra.mxu0 0.0
        %842 = vmatprep.subr.mxu0 0.0
        %843 = vmatpush1.xpose.msra.mxu0 0.0
        %844 = vmatprep.subr.mxu0 0.0
        %845 = vmatpush1.xpose.msra.mxu0 0.0
        %846 = vmatprep.subr.mxu0 0.0
        %847 = vmatpush1.xpose.msra.mxu0 0.0
        %848 = vmatprep.subr.mxu0 0.0
        %849 = vmatpush1.xpose.msra.mxu0 0.0
        %850 = vmatprep.subr.mxu0 0.0
        %851 = vmatpush1.xpose.msra.mxu0 0.0
        %852 = vmatprep.subr.mxu0 0.0
        %853 = vmatpush1.xpose.msra.mxu0 0.0
        %854 = vmatprep.subr.mxu0 0.0
        %855 = vmatpush1.xpose.msra.mxu0 0.0
        %856 = vmatprep.subr.mxu0 0.0
        %857 = vmatpush1.xpose.msra.mxu0 0.0
        %858 = vmatprep.subr.mxu0 0.0
        %859 = vmatpush1.xpose.msra.mxu0 0.0
        %860 = vmatprep.subr.mxu0 0.0
        %861 = vmatpush1.xpose.msra.mxu0 0.0
        %862 = vmatprep.subr.mxu0 0.0
        %863 = vmatpush1.xpose.msra.mxu0 0.0
        %864 = vmatprep.subr.mxu0 0.0
        %865 = vmatpush1.xpose.msra.mxu0 0.0
        %866 = vmatprep.subr.mxu0 0.0
        %867 = vmatpush1.xpose.msra.mxu0 0.0
        %868 = vmatprep.subr.mxu0 0.0
        %869 = vmatpush1.xpose.msra.mxu0 0.0
        %870 = vmatprep.subr.mxu0 0.0
        %871 = vmatpush1.xpose.msra.mxu0 0.0
        %872 = vmatprep.subr.mxu0 0.0
        %873 = vmatpush1.xpose.msra.mxu0 0.0
        %874 = vmatprep.subr.mxu0 0.0
        %875 = vmatpush1.xpose.msra.mxu0 0.0
        %876 = vmatprep.subr.mxu0 0.0
        %877 = vmatpush1.xpose.msra.mxu0 0.0
        %878 = vmatprep.subr.mxu0 0.0
        %879 = vmatpush1.xpose.msra.mxu0 0.0
        %880 = vmatprep.subr.mxu0 0.0
        %881 = vmatpush1.xpose.msra.mxu0 0.0
        %882 = vmatprep.subr.mxu0 0.0
        %883 = vmatpush1.xpose.msra.mxu0 0.0
        %884 = vmatprep.subr.mxu0 0.0
        %885 = vmatpush1.xpose.msra.mxu0 0.0
        %886 = vmatprep.subr.mxu0 0.0
        %887 = vmatpush1.xpose.msra.mxu0 0.0
        %888 = vmatprep.subr.mxu0 0.0
        %889 = vmatpush1.xpose.msra.mxu0 0.0
        %890 = vmatprep.subr.mxu0 0.0
        %891 = vmatpush1.xpose.msra.mxu0 0.0
        %892 = vmatprep.subr.mxu0 0.0
        %893 = vmatpush1.xpose.msra.mxu0 0.0
        %894 = vmatprep.subr.mxu0 0.0
        %895 = vmatpush1.xpose.msra.mxu0 0.0
        %896 = vmatprep.mubr.f32.mxu0 0.0
        %897 = vmatmul.mubr.f32.gmra.mrb[0].mxu0 %v658
        %v898 = vpop.f32.mrb[0].mxu0
        %v899 = vadd.f32 0.0, %v898
        %v900 = vpop.f32.mrb[0].mxu0
        %901 = vmatprep.mubr.f32.mxu0 0.0
        %902 = vmatmul.mubr.f32.gmra.mrb[0].mxu0 %v661
        %v903 = vpop.f32.mrb[0].mxu0
        %v904 = vadd.f32 0.0, %v903
        %v905 = vpop.f32.mrb[0].mxu0
        %906 = vmatprep.mubr.f32.mxu0 0.0
        %907 = vmatmul.mubr.f32.gmra.mrb[0].mxu0 %v363
        %v908 = vpop.f32.mrb[0].mxu0
        %v909 = vadd.f32 0.0, %v908
        %v910 = vpop.f32.mrb[0].mxu0
        %911 = vdwg.mxu0
        %v913 = vsel %vm281, %v353, 0
        %915 = vmatprep.subr.mxu0 0.0
        %916 = vmatpush1.xpose.msra.mxu0 %v913
        %917 = vmatprep.subr.mxu0 0.0
        %918 = vmatpush1.xpose.msra.mxu0 0.0
        %919 = vmatprep.subr.mxu0 0.0
        %920 = vmatpush1.xpose.msra.mxu0 0.0
        %921 = vmatprep.subr.mxu0 0.0
        %922 = vmatpush1.xpose.msra.mxu0 0.0
        %923 = vmatprep.subr.mxu0 0.0
        %924 = vmatpush1.xpose.msra.mxu0 0.0
        %925 = vmatprep.subr.mxu0 0.0
        %926 = vmatpush1.xpose.msra.mxu0 0.0
        %927 = vmatprep.subr.mxu0 0.0
        %928 = vmatpush1.xpose.msra.mxu0 0.0
        %929 = vmatprep.subr.mxu0 0.0
        %930 = vmatpush1.xpose.msra.mxu0 0.0
        %931 = vmatprep.subr.mxu0 0.0
        %932 = vmatpush1.xpose.msra.mxu0 0.0
        %933 = vmatprep.subr.mxu0 0.0
        %934 = vmatpush1.xpose.msra.mxu0 0.0
        %935 = vmatprep.subr.mxu0 0.0
        %936 = vmatpush1.xpose.msra.mxu0 0.0
        %937 = vmatprep.subr.mxu0 0.0
        %938 = vmatpush1.xpose.msra.mxu0 0.0
        %939 = vmatprep.subr.mxu0 0.0
        %940 = vmatpush1.xpose.msra.mxu0 0.0
        %941 = vmatprep.subr.mxu0 0.0
        %942 = vmatpush1.xpose.msra.mxu0 0.0
        %943 = vmatprep.subr.mxu0 0.0
        %944 = vmatpush1.xpose.msra.mxu0 0.0
        %945 = vmatprep.subr.mxu0 0.0
        %946 = vmatpush1.xpose.msra.mxu0 0.0
        %947 = vmatprep.subr.mxu0 0.0
        %948 = vmatpush1.xpose.msra.mxu0 0.0
        %949 = vmatprep.subr.mxu0 0.0
        %950 = vmatpush1.xpose.msra.mxu0 0.0
        %951 = vmatprep.subr.mxu0 0.0
        %952 = vmatpush1.xpose.msra.mxu0 0.0
        %953 = vmatprep.subr.mxu0 0.0
        %954 = vmatpush1.xpose.msra.mxu0 0.0
        %955 = vmatprep.subr.mxu0 0.0
        %956 = vmatpush1.xpose.msra.mxu0 0.0
        %957 = vmatprep.subr.mxu0 0.0
        %958 = vmatpush1.xpose.msra.mxu0 0.0
        %959 = vmatprep.subr.mxu0 0.0
        %960 = vmatpush1.xpose.msra.mxu0 0.0
        %961 = vmatprep.subr.mxu0 0.0
        %962 = vmatpush1.xpose.msra.mxu0 0.0
        %963 = vmatprep.subr.mxu0 0.0
        %964 = vmatpush1.xpose.msra.mxu0 0.0
        %965 = vmatprep.subr.mxu0 0.0
        %966 = vmatpush1.xpose.msra.mxu0 0.0
        %967 = vmatprep.subr.mxu0 0.0
        %968 = vmatpush1.xpose.msra.mxu0 0.0
        %969 = vmatprep.subr.mxu0 0.0
        %970 = vmatpush1.xpose.msra.mxu0 0.0
        %971 = vmatprep.subr.mxu0 0.0
        %972 = vmatpush1.xpose.msra.mxu0 0.0
        %973 = vmatprep.subr.mxu0 0.0
        %974 = vmatpush1.xpose.msra.mxu0 0.0
        %975 = vmatprep.subr.mxu0 0.0
        %976 = vmatpush1.xpose.msra.mxu0 0.0
        %977 = vmatprep.subr.mxu0 0.0
        %978 = vmatpush1.xpose.msra.mxu0 0.0
        %979 = vmatprep.mubr.f32.mxu0 0.0
        %980 = vmatmul.mubr.f32.gmra.mrb[0].mxu0 %v658
        %v981 = vpop.f32.mrb[0].mxu0
        %v982 = vadd.f32 0.0, %v981
        %v983 = vpop.f32.mrb[0].mxu0
        %984 = vmatprep.mubr.f32.mxu0 0.0
        %985 = vmatmul.mubr.f32.gmra.mrb[0].mxu0 %v661
        %v986 = vpop.f32.mrb[0].mxu0
        %v987 = vadd.f32 0.0, %v986
        %v988 = vpop.f32.mrb[0].mxu0
        %989 = vmatprep.mubr.f32.mxu0 0.0
        %990 = vmatmul.mubr.f32.gmra.mrb[0].mxu0 %v363
        %v991 = vpop.f32.mrb[0].mxu0
        %v992 = vadd.f32 0.0, %v991
        %v993 = vpop.f32.mrb[0].mxu0
        %994 = vdwg.mxu0
        %v996 = vsel %vm281, %v354, 0
        %998 = vmatprep.subr.mxu0 0.0
        %999 = vmatpush1.xpose.msra.mxu0 %v996
        %1000 = vmatprep.subr.mxu0 0.0
        %1001 = vmatpush1.xpose.msra.mxu0 0.0
        %1002 = vmatprep.subr.mxu0 0.0
        %1003 = vmatpush1.xpose.msra.mxu0 0.0
        %1004 = vmatprep.subr.mxu0 0.0
        %1005 = vmatpush1.xpose.msra.mxu0 0.0
        %1006 = vmatprep.subr.mxu0 0.0
        %1007 = vmatpush1.xpose.msra.mxu0 0.0
        %1008 = vmatprep.subr.mxu0 0.0
        %1009 = vmatpush1.xpose.msra.mxu0 0.0
        %1010 = vmatprep.subr.mxu0 0.0
        %1011 = vmatpush1.xpose.msra.mxu0 0.0
        %1012 = vmatprep.subr.mxu0 0.0
        %1013 = vmatpush1.xpose.msra.mxu0 0.0
        %1014 = vmatprep.subr.mxu0 0.0
        %1015 = vmatpush1.xpose.msra.mxu0 0.0
        %1016 = vmatprep.subr.mxu0 0.0
        %1017 = vmatpush1.xpose.msra.mxu0 0.0
        %1018 = vmatprep.subr.mxu0 0.0
        %1019 = vmatpush1.xpose.msra.mxu0 0.0
        %1020 = vmatprep.subr.mxu0 0.0
        %1021 = vmatpush1.xpose.msra.mxu0 0.0
        %1022 = vmatprep.subr.mxu0 0.0
        %1023 = vmatpush1.xpose.msra.mxu0 0.0
        %1024 = vmatprep.subr.mxu0 0.0
        %1025 = vmatpush1.xpose.msra.mxu0 0.0
        %1026 = vmatprep.subr.mxu0 0.0
        %1027 = vmatpush1.xpose.msra.mxu0 0.0
        %1028 = vmatprep.subr.mxu0 0.0
        %1029 = vmatpush1.xpose.msra.mxu0 0.0
        %1030 = vmatprep.subr.mxu0 0.0
        %1031 = vmatpush1.xpose.msra.mxu0 0.0
        %1032 = vmatprep.subr.mxu0 0.0
        %1033 = vmatpush1.xpose.msra.mxu0 0.0
        %1034 = vmatprep.subr.mxu0 0.0
        %1035 = vmatpush1.xpose.msra.mxu0 0.0
        %1036 = vmatprep.subr.mxu0 0.0
        %1037 = vmatpush1.xpose.msra.mxu0 0.0
        %1038 = vmatprep.subr.mxu0 0.0
        %1039 = vmatpush1.xpose.msra.mxu0 0.0
        %1040 = vmatprep.subr.mxu0 0.0
        %1041 = vmatpush1.xpose.msra.mxu0 0.0
        %1042 = vmatprep.subr.mxu0 0.0
        %1043 = vmatpush1.xpose.msra.mxu0 0.0
        %1044 = vmatprep.subr.mxu0 0.0
        %1045 = vmatpush1.xpose.msra.mxu0 0.0
        %1046 = vmatprep.subr.mxu0 0.0
        %1047 = vmatpush1.xpose.msra.mxu0 0.0
        %1048 = vmatprep.subr.mxu0 0.0
        %1049 = vmatpush1.xpose.msra.mxu0 0.0
        %1050 = vmatprep.subr.mxu0 0.0
        %1051 = vmatpush1.xpose.msra.mxu0 0.0
        %1052 = vmatprep.subr.mxu0 0.0
        %1053 = vmatpush1.xpose.msra.mxu0 0.0
        %1054 = vmatprep.subr.mxu0 0.0
        %1055 = vmatpush1.xpose.msra.mxu0 0.0
        %1056 = vmatprep.subr.mxu0 0.0
        %1057 = vmatpush1.xpose.msra.mxu0 0.0
        %1058 = vmatprep.subr.mxu0 0.0
        %1059 = vmatpush1.xpose.msra.mxu0 0.0
        %1060 = vmatprep.subr.mxu0 0.0
        %1061 = vmatpush1.xpose.msra.mxu0 0.0
        %1062 = vmatprep.mubr.f32.mxu0 0.0
        %1063 = vmatmul.mubr.f32.gmra.mrb[0].mxu0 %v658
        %v1064 = vpop.f32.mrb[0].mxu0
        %v1065 = vadd.f32 0.0, %v1064
        %v1066 = vpop.f32.mrb[0].mxu0
        %1067 = vmatprep.mubr.f32.mxu0 0.0
        %1068 = vmatmul.mubr.f32.gmra.mrb[0].mxu0 %v661
        %v1069 = vpop.f32.mrb[0].mxu0
        %v1070 = vadd.f32 0.0, %v1069
        %v1071 = vpop.f32.mrb[0].mxu0
        %1072 = vmatprep.mubr.f32.mxu0 0.0
        %1073 = vmatmul.mubr.f32.gmra.mrb[0].mxu0 %v363
        %v1074 = vpop.f32.mrb[0].mxu0
        %v1075 = vadd.f32 0.0, %v1074
        %v1076 = vpop.f32.mrb[0].mxu0
        %1077 = vdwg.mxu0
        %v1079 = vsel %vm281, %v355, 0
        %1081 = vmatprep.subr.mxu0 0.0
        %1082 = vmatpush1.xpose.msra.mxu0 %v1079
        %1083 = vmatprep.subr.mxu0 0.0
        %1084 = vmatpush1.xpose.msra.mxu0 0.0
        %1085 = vmatprep.subr.mxu0 0.0
        %1086 = vmatpush1.xpose.msra.mxu0 0.0
        %1087 = vmatprep.subr.mxu0 0.0
        %1088 = vmatpush1.xpose.msra.mxu0 0.0
        %1089 = vmatprep.subr.mxu0 0.0
        %1090 = vmatpush1.xpose.msra.mxu0 0.0
        %1091 = vmatprep.subr.mxu0 0.0
        %1092 = vmatpush1.xpose.msra.mxu0 0.0
        %1093 = vmatprep.subr.mxu0 0.0
        %1094 = vmatpush1.xpose.msra.mxu0 0.0
        %1095 = vmatprep.subr.mxu0 0.0
        %1096 = vmatpush1.xpose.msra.mxu0 0.0
        %1097 = vmatprep.subr.mxu0 0.0
        %1098 = vmatpush1.xpose.msra.mxu0 0.0
        %1099 = vmatprep.subr.mxu0 0.0
        %1100 = vmatpush1.xpose.msra.mxu0 0.0
        %1101 = vmatprep.subr.mxu0 0.0
        %1102 = vmatpush1.xpose.msra.mxu0 0.0
        %1103 = vmatprep.subr.mxu0 0.0
        %1104 = vmatpush1.xpose.msra.mxu0 0.0
        %1105 = vmatprep.subr.mxu0 0.0
        %1106 = vmatpush1.xpose.msra.mxu0 0.0
        %1107 = vmatprep.subr.mxu0 0.0
        %1108 = vmatpush1.xpose.msra.mxu0 0.0
        %1109 = vmatprep.subr.mxu0 0.0
        %1110 = vmatpush1.xpose.msra.mxu0 0.0
        %1111 = vmatprep.subr.mxu0 0.0
        %1112 = vmatpush1.xpose.msra.mxu0 0.0
        %1113 = vmatprep.subr.mxu0 0.0
        %1114 = vmatpush1.xpose.msra.mxu0 0.0
        %1115 = vmatprep.subr.mxu0 0.0
        %1116 = vmatpush1.xpose.msra.mxu0 0.0
        %1117 = vmatprep.subr.mxu0 0.0
        %1118 = vmatpush1.xpose.msra.mxu0 0.0
        %1119 = vmatprep.subr.mxu0 0.0
        %1120 = vmatpush1.xpose.msra.mxu0 0.0
        %1121 = vmatprep.subr.mxu0 0.0
        %1122 = vmatpush1.xpose.msra.mxu0 0.0
        %1123 = vmatprep.subr.mxu0 0.0
        %1124 = vmatpush1.xpose.msra.mxu0 0.0
        %1125 = vmatprep.subr.mxu0 0.0
        %1126 = vmatpush1.xpose.msra.mxu0 0.0
        %1127 = vmatprep.subr.mxu0 0.0
        %1128 = vmatpush1.xpose.msra.mxu0 0.0
        %1129 = vmatprep.subr.mxu0 0.0
        %1130 = vmatpush1.xpose.msra.mxu0 0.0
        %1131 = vmatprep.subr.mxu0 0.0
        %1132 = vmatpush1.xpose.msra.mxu0 0.0
        %1133 = vmatprep.subr.mxu0 0.0
        %1134 = vmatpush1.xpose.msra.mxu0 0.0
        %1135 = vmatprep.subr.mxu0 0.0
        %1136 = vmatpush1.xpose.msra.mxu0 0.0
        %1137 = vmatprep.subr.mxu0 0.0
        %1138 = vmatpush1.xpose.msra.mxu0 0.0
        %1139 = vmatprep.subr.mxu0 0.0
        %1140 = vmatpush1.xpose.msra.mxu0 0.0
        %1141 = vmatprep.subr.mxu0 0.0
        %1142 = vmatpush1.xpose.msra.mxu0 0.0
        %1143 = vmatprep.subr.mxu0 0.0
        %1144 = vmatpush1.xpose.msra.mxu0 0.0
        %1145 = vmatprep.mubr.f32.mxu0 0.0
        %1146 = vmatmul.mubr.f32.gmra.mrb[0].mxu0 %v658
        %v1147 = vpop.f32.mrb[0].mxu0
        %v1148 = vadd.f32 0.0, %v1147
        %v1149 = vpop.f32.mrb[0].mxu0
        %1150 = vmatprep.mubr.f32.mxu0 0.0
        %1151 = vmatmul.mubr.f32.gmra.mrb[0].mxu0 %v661
        %v1152 = vpop.f32.mrb[0].mxu0
        %v1153 = vadd.f32 0.0, %v1152
        %v1154 = vpop.f32.mrb[0].mxu0
        %1155 = vmatprep.mubr.f32.mxu0 0.0
        %1156 = vmatmul.mubr.f32.gmra.mrb[0].mxu0 %v363
        %v1157 = vpop.f32.mrb[0].mxu0
        %v1158 = vadd.f32 0.0, %v1157
        %v1159 = vpop.f32.mrb[0].mxu0
        %1160 = vdwg.mxu0
        %v1162 = vsel %vm281, %v356, 0
        %1164 = vmatprep.subr.mxu0 0.0
        %1165 = vmatpush1.xpose.msra.mxu0 %v1162
        %1166 = vmatprep.subr.mxu0 0.0
        %1167 = vmatpush1.xpose.msra.mxu0 0.0
        %1168 = vmatprep.subr.mxu0 0.0
        %1169 = vmatpush1.xpose.msra.mxu0 0.0
        %1170 = vmatprep.subr.mxu0 0.0
        %1171 = vmatpush1.xpose.msra.mxu0 0.0
        %1172 = vmatprep.subr.mxu0 0.0
        %1173 = vmatpush1.xpose.msra.mxu0 0.0
        %1174 = vmatprep.subr.mxu0 0.0
        %1175 = vmatpush1.xpose.msra.mxu0 0.0
        %1176 = vmatprep.subr.mxu0 0.0
        %1177 = vmatpush1.xpose.msra.mxu0 0.0
        %1178 = vmatprep.subr.mxu0 0.0
        %1179 = vmatpush1.xpose.msra.mxu0 0.0
        %1180 = vmatprep.subr.mxu0 0.0
        %1181 = vmatpush1.xpose.msra.mxu0 0.0
        %1182 = vmatprep.subr.mxu0 0.0
        %1183 = vmatpush1.xpose.msra.mxu0 0.0
        %1184 = vmatprep.subr.mxu0 0.0
        %1185 = vmatpush1.xpose.msra.mxu0 0.0
        %1186 = vmatprep.subr.mxu0 0.0
        %1187 = vmatpush1.xpose.msra.mxu0 0.0
        %1188 = vmatprep.subr.mxu0 0.0
        %1189 = vmatpush1.xpose.msra.mxu0 0.0
        %1190 = vmatprep.subr.mxu0 0.0
        %1191 = vmatpush1.xpose.msra.mxu0 0.0
        %1192 = vmatprep.subr.mxu0 0.0
        %1193 = vmatpush1.xpose.msra.mxu0 0.0
        %1194 = vmatprep.subr.mxu0 0.0
        %1195 = vmatpush1.xpose.msra.mxu0 0.0
        %1196 = vmatprep.subr.mxu0 0.0
        %1197 = vmatpush1.xpose.msra.mxu0 0.0
        %1198 = vmatprep.subr.mxu0 0.0
        %1199 = vmatpush1.xpose.msra.mxu0 0.0
        %1200 = vmatprep.subr.mxu0 0.0
        %1201 = vmatpush1.xpose.msra.mxu0 0.0
        %1202 = vmatprep.subr.mxu0 0.0
        %1203 = vmatpush1.xpose.msra.mxu0 0.0
        %1204 = vmatprep.subr.mxu0 0.0
        %1205 = vmatpush1.xpose.msra.mxu0 0.0
        %1206 = vmatprep.subr.mxu0 0.0
        %1207 = vmatpush1.xpose.msra.mxu0 0.0
        %1208 = vmatprep.subr.mxu0 0.0
        %1209 = vmatpush1.xpose.msra.mxu0 0.0
        %1210 = vmatprep.subr.mxu0 0.0
        %1211 = vmatpush1.xpose.msra.mxu0 0.0
        %1212 = vmatprep.subr.mxu0 0.0
        %1213 = vmatpush1.xpose.msra.mxu0 0.0
        %1214 = vmatprep.subr.mxu0 0.0
        %1215 = vmatpush1.xpose.msra.mxu0 0.0
        %1216 = vmatprep.subr.mxu0 0.0
        %1217 = vmatpush1.xpose.msra.mxu0 0.0
        %1218 = vmatprep.subr.mxu0 0.0
        %1219 = vmatpush1.xpose.msra.mxu0 0.0
        %1220 = vmatprep.subr.mxu0 0.0
        %1221 = vmatpush1.xpose.msra.mxu0 0.0
        %1222 = vmatprep.subr.mxu0 0.0
        %1223 = vmatpush1.xpose.msra.mxu0 0.0
        %1224 = vmatprep.subr.mxu0 0.0
        %1225 = vmatpush1.xpose.msra.mxu0 0.0
        %1226 = vmatprep.subr.mxu0 0.0
        %1227 = vmatpush1.xpose.msra.mxu0 0.0
        %1228 = vmatprep.mubr.f32.mxu0 0.0
        %1229 = vmatmul.mubr.f32.gmra.mrb[0].mxu0 %v658
        %v1230 = vpop.f32.mrb[0].mxu0
        %v1231 = vadd.f32 0.0, %v1230
        %v1232 = vpop.f32.mrb[0].mxu0
        %1233 = vmatprep.mubr.f32.mxu0 0.0
        %1234 = vmatmul.mubr.f32.gmra.mrb[0].mxu0 %v661
        %v1235 = vpop.f32.mrb[0].mxu0
        %v1236 = vadd.f32 0.0, %v1235
        %v1237 = vpop.f32.mrb[0].mxu0
        %1238 = vmatprep.mubr.f32.mxu0 0.0
        %1239 = vmatmul.mubr.f32.gmra.mrb[0].mxu0 %v363
        %v1240 = vpop.f32.mrb[0].mxu0
        %v1241 = vadd.f32 0.0, %v1240
        %v1242 = vpop.f32.mrb[0].mxu0
        %1243 = vdwg.mxu0
        %v1245 = vsel %vm281, %v357, 0
        %1247 = vmatprep.subr.mxu0 0.0
        %1248 = vmatpush1.xpose.msra.mxu0 %v1245
        %1249 = vmatprep.subr.mxu0 0.0
        %1250 = vmatpush1.xpose.msra.mxu0 0.0
        %1251 = vmatprep.subr.mxu0 0.0
        %1252 = vmatpush1.xpose.msra.mxu0 0.0
        %1253 = vmatprep.subr.mxu0 0.0
        %1254 = vmatpush1.xpose.msra.mxu0 0.0
        %1255 = vmatprep.subr.mxu0 0.0
        %1256 = vmatpush1.xpose.msra.mxu0 0.0
        %1257 = vmatprep.subr.mxu0 0.0
        %1258 = vmatpush1.xpose.msra.mxu0 0.0
        %1259 = vmatprep.subr.mxu0 0.0
        %1260 = vmatpush1.xpose.msra.mxu0 0.0
        %1261 = vmatprep.subr.mxu0 0.0
        %1262 = vmatpush1.xpose.msra.mxu0 0.0
        %1263 = vmatprep.subr.mxu0 0.0
        %1264 = vmatpush1.xpose.msra.mxu0 0.0
        %1265 = vmatprep.subr.mxu0 0.0
        %1266 = vmatpush1.xpose.msra.mxu0 0.0
        %1267 = vmatprep.subr.mxu0 0.0
        %1268 = vmatpush1.xpose.msra.mxu0 0.0
        %1269 = vmatprep.subr.mxu0 0.0
        %1270 = vmatpush1.xpose.msra.mxu0 0.0
        %1271 = vmatprep.subr.mxu0 0.0
        %1272 = vmatpush1.xpose.msra.mxu0 0.0
        %1273 = vmatprep.subr.mxu0 0.0
        %1274 = vmatpush1.xpose.msra.mxu0 0.0
        %1275 = vmatprep.subr.mxu0 0.0
        %1276 = vmatpush1.xpose.msra.mxu0 0.0
        %1277 = vmatprep.subr.mxu0 0.0
        %1278 = vmatpush1.xpose.msra.mxu0 0.0
        %1279 = vmatprep.subr.mxu0 0.0
        %1280 = vmatpush1.xpose.msra.mxu0 0.0
        %1281 = vmatprep.subr.mxu0 0.0
        %1282 = vmatpush1.xpose.msra.mxu0 0.0
        %1283 = vmatprep.subr.mxu0 0.0
        %1284 = vmatpush1.xpose.msra.mxu0 0.0
        %1285 = vmatprep.subr.mxu0 0.0
        %1286 = vmatpush1.xpose.msra.mxu0 0.0
        %1287 = vmatprep.subr.mxu0 0.0
        %1288 = vmatpush1.xpose.msra.mxu0 0.0
        %1289 = vmatprep.subr.mxu0 0.0
        %1290 = vmatpush1.xpose.msra.mxu0 0.0
        %1291 = vmatprep.subr.mxu0 0.0
        %1292 = vmatpush1.xpose.msra.mxu0 0.0
        %1293 = vmatprep.subr.mxu0 0.0
        %1294 = vmatpush1.xpose.msra.mxu0 0.0
        %1295 = vmatprep.subr.mxu0 0.0
        %1296 = vmatpush1.xpose.msra.mxu0 0.0
        %1297 = vmatprep.subr.mxu0 0.0
        %1298 = vmatpush1.xpose.msra.mxu0 0.0
        %1299 = vmatprep.subr.mxu0 0.0
        %1300 = vmatpush1.xpose.msra.mxu0 0.0
        %1301 = vmatprep.subr.mxu0 0.0
        %1302 = vmatpush1.xpose.msra.mxu0 0.0
        %1303 = vmatprep.subr.mxu0 0.0
        %1304 = vmatpush1.xpose.msra.mxu0 0.0
        %1305 = vmatprep.subr.mxu0 0.0
        %1306 = vmatpush1.xpose.msra.mxu0 0.0
        %1307 = vmatprep.subr.mxu0 0.0
        %1308 = vmatpush1.xpose.msra.mxu0 0.0
        %1309 = vmatprep.subr.mxu0 0.0
        %1310 = vmatpush1.xpose.msra.mxu0 0.0
        %1311 = vmatprep.mubr.f32.mxu0 0.0
        %1312 = vmatmul.mubr.f32.gmra.mrb[0].mxu0 %v658
        %v1313 = vpop.f32.mrb[0].mxu0
        %v1314 = vadd.f32 0.0, %v1313
        %v1315 = vpop.f32.mrb[0].mxu0
        %1316 = vmatprep.mubr.f32.mxu0 0.0
        %1317 = vmatmul.mubr.f32.gmra.mrb[0].mxu0 %v661
        %v1318 = vpop.f32.mrb[0].mxu0
        %v1319 = vadd.f32 0.0, %v1318
        %v1320 = vpop.f32.mrb[0].mxu0
        %1321 = vmatprep.mubr.f32.mxu0 0.0
        %1322 = vmatmul.mubr.f32.gmra.mrb[0].mxu0 %v363
        %v1323 = vpop.f32.mrb[0].mxu0
        %v1324 = vadd.f32 0.0, %v1323
        %v1325 = vpop.f32.mrb[0].mxu0
        %1326 = vdwg.mxu0
        %vm1327 = vcmask 64512
        %v1329 = vsel %vm1327, %v435, 0
        %v1332 = vsel %vm1327, %v733, 0
        %v1335 = vsel %vm1327, %v738, 0
        %v1338 = vsel %vm1327, %v743, 0
        %1340 = vmatprep.subr.mxu0 0.0
        %1341 = vmatpush1.xpose.msra.mxu0 %v1332
        %1342 = vmatprep.subr.mxu0 0.0
        %1343 = vmatpush1.xpose.msra.mxu0 %v1335
        %1344 = vmatprep.subr.mxu0 0.0
        %1345 = vmatpush1.xpose.msra.mxu0 %v1338
        %1346 = vmatprep.subr.mxu0 0.0
        %1347 = vmatpush1.xpose.msra.mxu0 0.0
        %1348 = vmatprep.subr.mxu0 0.0
        %1349 = vmatpush1.xpose.msra.mxu0 0.0
        %1350 = vmatprep.subr.mxu0 0.0
        %1351 = vmatpush1.xpose.msra.mxu0 0.0
        %1352 = vmatprep.subr.mxu0 0.0
        %1353 = vmatpush1.xpose.msra.mxu0 0.0
        %1354 = vmatprep.subr.mxu0 0.0
        %1355 = vmatpush1.xpose.msra.mxu0 0.0
        %1356 = vmatprep.subr.mxu0 0.0
        %1357 = vmatpush1.xpose.msra.mxu0 0.0
        %1358 = vmatprep.subr.mxu0 0.0
        %1359 = vmatpush1.xpose.msra.mxu0 0.0
        %1360 = vmatprep.subr.mxu0 0.0
        %1361 = vmatpush1.xpose.msra.mxu0 0.0
        %1362 = vmatprep.subr.mxu0 0.0
        %1363 = vmatpush1.xpose.msra.mxu0 0.0
        %1364 = vmatprep.subr.mxu0 0.0
        %1365 = vmatpush1.xpose.msra.mxu0 0.0
        %1366 = vmatprep.subr.mxu0 0.0
        %1367 = vmatpush1.xpose.msra.mxu0 0.0
        %1368 = vmatprep.subr.mxu0 0.0
        %1369 = vmatpush1.xpose.msra.mxu0 0.0
        %1370 = vmatprep.subr.mxu0 0.0
        %1371 = vmatpush1.xpose.msra.mxu0 0.0
        %1372 = vmatprep.subr.mxu0 0.0
        %1373 = vmatpush1.xpose.msra.mxu0 0.0
        %1374 = vmatprep.subr.mxu0 0.0
        %1375 = vmatpush1.xpose.msra.mxu0 0.0
        %1376 = vmatprep.subr.mxu0 0.0
        %1377 = vmatpush1.xpose.msra.mxu0 0.0
        %1378 = vmatprep.subr.mxu0 0.0
        %1379 = vmatpush1.xpose.msra.mxu0 0.0
        %1380 = vmatprep.subr.mxu0 0.0
        %1381 = vmatpush1.xpose.msra.mxu0 0.0
        %1382 = vmatprep.subr.mxu0 0.0
        %1383 = vmatpush1.xpose.msra.mxu0 0.0
        %1384 = vmatprep.subr.mxu0 0.0
        %1385 = vmatpush1.xpose.msra.mxu0 0.0
        %1386 = vmatprep.subr.mxu0 0.0
        %1387 = vmatpush1.xpose.msra.mxu0 0.0
        %1388 = vmatprep.subr.mxu0 0.0
        %1389 = vmatpush1.xpose.msra.mxu0 0.0
        %1390 = vmatprep.subr.mxu0 0.0
        %1391 = vmatpush1.xpose.msra.mxu0 0.0
        %1392 = vmatprep.subr.mxu0 0.0
        %1393 = vmatpush1.xpose.msra.mxu0 0.0
        %1394 = vmatprep.subr.mxu0 0.0
        %1395 = vmatpush1.xpose.msra.mxu0 0.0
        %1396 = vmatprep.subr.mxu0 0.0
        %1397 = vmatpush1.xpose.msra.mxu0 0.0
        %1398 = vmatprep.subr.mxu0 0.0
        %1399 = vmatpush1.xpose.msra.mxu0 0.0
        %1400 = vmatprep.subr.mxu0 0.0
        %1401 = vmatpush1.xpose.msra.mxu0 0.0
        %1402 = vmatprep.subr.mxu0 0.0
        %1403 = vmatpush1.xpose.msra.mxu0 0.0
        %1404 = vmatprep.mubr.f32.mxu0 0.0
        %1405 = vmatmul.mubr.f32.gmra.mrb[0].mxu0 %v1329
        %v1406 = vpop.f32.mrb[0].mxu0
        %v1407 = vadd.f32 0.0, %v1406
        %v1408 = vpop.f32.mrb[0].mxu0
        %1409 = vdwg.mxu0
        %v1411 = vsel %vm1327, %v508, 0
        %v1414 = vsel %vm1327, %v816, 0
        %v1417 = vsel %vm1327, %v821, 0
        %v1420 = vsel %vm1327, %v826, 0
        %1422 = vmatprep.subr.mxu0 0.0
        %1423 = vmatpush1.xpose.msra.mxu0 %v1414
        %1424 = vmatprep.subr.mxu0 0.0
        %1425 = vmatpush1.xpose.msra.mxu0 %v1417
        %1426 = vmatprep.subr.mxu0 0.0
        %1427 = vmatpush1.xpose.msra.mxu0 %v1420
        %1428 = vmatprep.subr.mxu0 0.0
        %1429 = vmatpush1.xpose.msra.mxu0 0.0
        %1430 = vmatprep.subr.mxu0 0.0
        %1431 = vmatpush1.xpose.msra.mxu0 0.0
        %1432 = vmatprep.subr.mxu0 0.0
        %1433 = vmatpush1.xpose.msra.mxu0 0.0
        %1434 = vmatprep.subr.mxu0 0.0
        %1435 = vmatpush1.xpose.msra.mxu0 0.0
        %1436 = vmatprep.subr.mxu0 0.0
        %1437 = vmatpush1.xpose.msra.mxu0 0.0
        %1438 = vmatprep.subr.mxu0 0.0
        %1439 = vmatpush1.xpose.msra.mxu0 0.0
        %1440 = vmatprep.subr.mxu0 0.0
        %1441 = vmatpush1.xpose.msra.mxu0 0.0
        %1442 = vmatprep.subr.mxu0 0.0
        %1443 = vmatpush1.xpose.msra.mxu0 0.0
        %1444 = vmatprep.subr.mxu0 0.0
        %1445 = vmatpush1.xpose.msra.mxu0 0.0
        %1446 = vmatprep.subr.mxu0 0.0
        %1447 = vmatpush1.xpose.msra.mxu0 0.0
        %1448 = vmatprep.subr.mxu0 0.0
        %1449 = vmatpush1.xpose.msra.mxu0 0.0
        %1450 = vmatprep.subr.mxu0 0.0
        %1451 = vmatpush1.xpose.msra.mxu0 0.0
        %1452 = vmatprep.subr.mxu0 0.0
        %1453 = vmatpush1.xpose.msra.mxu0 0.0
        %1454 = vmatprep.subr.mxu0 0.0
        %1455 = vmatpush1.xpose.msra.mxu0 0.0
        %1456 = vmatprep.subr.mxu0 0.0
        %1457 = vmatpush1.xpose.msra.mxu0 0.0
        %1458 = vmatprep.subr.mxu0 0.0
        %1459 = vmatpush1.xpose.msra.mxu0 0.0
        %1460 = vmatprep.subr.mxu0 0.0
        %1461 = vmatpush1.xpose.msra.mxu0 0.0
        %1462 = vmatprep.subr.mxu0 0.0
        %1463 = vmatpush1.xpose.msra.mxu0 0.0
        %1464 = vmatprep.subr.mxu0 0.0
        %1465 = vmatpush1.xpose.msra.mxu0 0.0
        %1466 = vmatprep.subr.mxu0 0.0
        %1467 = vmatpush1.xpose.msra.mxu0 0.0
        %1468 = vmatprep.subr.mxu0 0.0
        %1469 = vmatpush1.xpose.msra.mxu0 0.0
        %1470 = vmatprep.subr.mxu0 0.0
        %1471 = vmatpush1.xpose.msra.mxu0 0.0
        %1472 = vmatprep.subr.mxu0 0.0
        %1473 = vmatpush1.xpose.msra.mxu0 0.0
        %1474 = vmatprep.subr.mxu0 0.0
        %1475 = vmatpush1.xpose.msra.mxu0 0.0
        %1476 = vmatprep.subr.mxu0 0.0
        %1477 = vmatpush1.xpose.msra.mxu0 0.0
        %1478 = vmatprep.subr.mxu0 0.0
        %1479 = vmatpush1.xpose.msra.mxu0 0.0
        %1480 = vmatprep.subr.mxu0 0.0
        %1481 = vmatpush1.xpose.msra.mxu0 0.0
        %1482 = vmatprep.subr.mxu0 0.0
        %1483 = vmatpush1.xpose.msra.mxu0 0.0
        %1484 = vmatprep.subr.mxu0 0.0
        %1485 = vmatpush1.xpose.msra.mxu0 0.0
        %1486 = vmatprep.mubr.f32.mxu0 0.0
        %1487 = vmatmul.mubr.f32.gmra.mrb[0].mxu0 %v1411
        %v1488 = vpop.f32.mrb[0].mxu0
        %v1489 = vadd.f32 0.0, %v1488
        %v1490 = vpop.f32.mrb[0].mxu0
        %1491 = vdwg.mxu0
        %v1493 = vsel %vm1327, %v581, 0
        %v1496 = vsel %vm1327, %v899, 0
        %v1499 = vsel %vm1327, %v904, 0
        %v1502 = vsel %vm1327, %v909, 0
        %1504 = vmatprep.subr.mxu0 0.0
        %1505 = vmatpush1.xpose.msra.mxu0 %v1496
        %1506 = vmatprep.subr.mxu0 0.0
        %1507 = vmatpush1.xpose.msra.mxu0 %v1499
        %1508 = vmatprep.subr.mxu0 0.0
        %1509 = vmatpush1.xpose.msra.mxu0 %v1502
        %1510 = vmatprep.subr.mxu0 0.0
        %1511 = vmatpush1.xpose.msra.mxu0 0.0
        %1512 = vmatprep.subr.mxu0 0.0
        %1513 = vmatpush1.xpose.msra.mxu0 0.0
        %1514 = vmatprep.subr.mxu0 0.0
        %1515 = vmatpush1.xpose.msra.mxu0 0.0
        %1516 = vmatprep.subr.mxu0 0.0
        %1517 = vmatpush1.xpose.msra.mxu0 0.0
        %1518 = vmatprep.subr.mxu0 0.0
        %1519 = vmatpush1.xpose.msra.mxu0 0.0
        %1520 = vmatprep.subr.mxu0 0.0
        %1521 = vmatpush1.xpose.msra.mxu0 0.0
        %1522 = vmatprep.subr.mxu0 0.0
        %1523 = vmatpush1.xpose.msra.mxu0 0.0
        %1524 = vmatprep.subr.mxu0 0.0
        %1525 = vmatpush1.xpose.msra.mxu0 0.0
        %1526 = vmatprep.subr.mxu0 0.0
        %1527 = vmatpush1.xpose.msra.mxu0 0.0
        %1528 = vmatprep.subr.mxu0 0.0
        %1529 = vmatpush1.xpose.msra.mxu0 0.0
        %1530 = vmatprep.subr.mxu0 0.0
        %1531 = vmatpush1.xpose.msra.mxu0 0.0
        %1532 = vmatprep.subr.mxu0 0.0
        %1533 = vmatpush1.xpose.msra.mxu0 0.0
        %1534 = vmatprep.subr.mxu0 0.0
        %1535 = vmatpush1.xpose.msra.mxu0 0.0
        %1536 = vmatprep.subr.mxu0 0.0
        %1537 = vmatpush1.xpose.msra.mxu0 0.0
        %1538 = vmatprep.subr.mxu0 0.0
        %1539 = vmatpush1.xpose.msra.mxu0 0.0
        %1540 = vmatprep.subr.mxu0 0.0
        %1541 = vmatpush1.xpose.msra.mxu0 0.0
        %1542 = vmatprep.subr.mxu0 0.0
        %1543 = vmatpush1.xpose.msra.mxu0 0.0
        %1544 = vmatprep.subr.mxu0 0.0
        %1545 = vmatpush1.xpose.msra.mxu0 0.0
        %1546 = vmatprep.subr.mxu0 0.0
        %1547 = vmatpush1.xpose.msra.mxu0 0.0
        %1548 = vmatprep.subr.mxu0 0.0
        %1549 = vmatpush1.xpose.msra.mxu0 0.0
        %1550 = vmatprep.subr.mxu0 0.0
        %1551 = vmatpush1.xpose.msra.mxu0 0.0
        %1552 = vmatprep.subr.mxu0 0.0
        %1553 = vmatpush1.xpose.msra.mxu0 0.0
        %1554 = vmatprep.subr.mxu0 0.0
        %1555 = vmatpush1.xpose.msra.mxu0 0.0
        %1556 = vmatprep.subr.mxu0 0.0
        %1557 = vmatpush1.xpose.msra.mxu0 0.0
        %1558 = vmatprep.subr.mxu0 0.0
        %1559 = vmatpush1.xpose.msra.mxu0 0.0
        %1560 = vmatprep.subr.mxu0 0.0
        %1561 = vmatpush1.xpose.msra.mxu0 0.0
        %1562 = vmatprep.subr.mxu0 0.0
        %1563 = vmatpush1.xpose.msra.mxu0 0.0
        %1564 = vmatprep.subr.mxu0 0.0
        %1565 = vmatpush1.xpose.msra.mxu0 0.0
        %1566 = vmatprep.subr.mxu0 0.0
        %1567 = vmatpush1.xpose.msra.mxu0 0.0
        %1568 = vmatprep.mubr.f32.mxu0 0.0
        %1569 = vmatmul.mubr.f32.gmra.mrb[0].mxu0 %v1493
        %v1570 = vpop.f32.mrb[0].mxu0
        %v1571 = vadd.f32 0.0, %v1570
        %v1572 = vpop.f32.mrb[0].mxu0
        %1573 = vdwg.mxu0
        %v1575 = vsel %vm1327, %v654, 0
        %v1578 = vsel %vm1327, %v982, 0
        %v1581 = vsel %vm1327, %v987, 0
        %v1584 = vsel %vm1327, %v992, 0
        %1586 = vmatprep.subr.mxu0 0.0
        %1587 = vmatpush1.xpose.msra.mxu0 %v1578
        %1588 = vmatprep.subr.mxu0 0.0
        %1589 = vmatpush1.xpose.msra.mxu0 %v1581
        %1590 = vmatprep.subr.mxu0 0.0
        %1591 = vmatpush1.xpose.msra.mxu0 %v1584
        %1592 = vmatprep.subr.mxu0 0.0
        %1593 = vmatpush1.xpose.msra.mxu0 0.0
        %1594 = vmatprep.subr.mxu0 0.0
        %1595 = vmatpush1.xpose.msra.mxu0 0.0
        %1596 = vmatprep.subr.mxu0 0.0
        %1597 = vmatpush1.xpose.msra.mxu0 0.0
        %1598 = vmatprep.subr.mxu0 0.0
        %1599 = vmatpush1.xpose.msra.mxu0 0.0
        %1600 = vmatprep.subr.mxu0 0.0
        %1601 = vmatpush1.xpose.msra.mxu0 0.0
        %1602 = vmatprep.subr.mxu0 0.0
        %1603 = vmatpush1.xpose.msra.mxu0 0.0
        %1604 = vmatprep.subr.mxu0 0.0
        %1605 = vmatpush1.xpose.msra.mxu0 0.0
        %1606 = vmatprep.subr.mxu0 0.0
        %1607 = vmatpush1.xpose.msra.mxu0 0.0
        %1608 = vmatprep.subr.mxu0 0.0
        %1609 = vmatpush1.xpose.msra.mxu0 0.0
        %1610 = vmatprep.subr.mxu0 0.0
        %1611 = vmatpush1.xpose.msra.mxu0 0.0
        %1612 = vmatprep.subr.mxu0 0.0
        %1613 = vmatpush1.xpose.msra.mxu0 0.0
        %1614 = vmatprep.subr.mxu0 0.0
        %1615 = vmatpush1.xpose.msra.mxu0 0.0
        %1616 = vmatprep.subr.mxu0 0.0
        %1617 = vmatpush1.xpose.msra.mxu0 0.0
        %1618 = vmatprep.subr.mxu0 0.0
        %1619 = vmatpush1.xpose.msra.mxu0 0.0
        %1620 = vmatprep.subr.mxu0 0.0
        %1621 = vmatpush1.xpose.msra.mxu0 0.0
        %1622 = vmatprep.subr.mxu0 0.0
        %1623 = vmatpush1.xpose.msra.mxu0 0.0
        %1624 = vmatprep.subr.mxu0 0.0
        %1625 = vmatpush1.xpose.msra.mxu0 0.0
        %1626 = vmatprep.subr.mxu0 0.0
        %1627 = vmatpush1.xpose.msra.mxu0 0.0
        %1628 = vmatprep.subr.mxu0 0.0
        %1629 = vmatpush1.xpose.msra.mxu0 0.0
        %1630 = vmatprep.subr.mxu0 0.0
        %1631 = vmatpush1.xpose.msra.mxu0 0.0
        %1632 = vmatprep.subr.mxu0 0.0
        %1633 = vmatpush1.xpose.msra.mxu0 0.0
        %1634 = vmatprep.subr.mxu0 0.0
        %1635 = vmatpush1.xpose.msra.mxu0 0.0
        %1636 = vmatprep.subr.mxu0 0.0
        %1637 = vmatpush1.xpose.msra.mxu0 0.0
        %1638 = vmatprep.subr.mxu0 0.0
        %1639 = vmatpush1.xpose.msra.mxu0 0.0
        %1640 = vmatprep.subr.mxu0 0.0
        %1641 = vmatpush1.xpose.msra.mxu0 0.0
        %1642 = vmatprep.subr.mxu0 0.0
        %1643 = vmatpush1.xpose.msra.mxu0 0.0
        %1644 = vmatprep.subr.mxu0 0.0
        %1645 = vmatpush1.xpose.msra.mxu0 0.0
        %1646 = vmatprep.subr.mxu0 0.0
        %1647 = vmatpush1.xpose.msra.mxu0 0.0
        %1648 = vmatprep.subr.mxu0 0.0
        %1649 = vmatpush1.xpose.msra.mxu0 0.0
        %1650 = vmatprep.mubr.f32.mxu0 0.0
        %1651 = vmatmul.mubr.f32.gmra.mrb[0].mxu0 %v1575
        %v1652 = vpop.f32.mrb[0].mxu0
        %v1653 = vadd.f32 0.0, %v1652
        %v1654 = vpop.f32.mrb[0].mxu0
        %1655 = vdwg.mxu0
        %v1656 = vsel %vm197, %v1407, -inf
        %1657 = vmax.xlane.f32.xlu0 %v1656
        %v1658 = vpop.xlane.xlu0 %1657
        %v1659 = vsel %vm197, %v1489, -inf
        %1660 = vmax.xlane.f32.xlu0 %v1659
        %v1661 = vpop.xlane.xlu0 %1660
        %v1662 = vsel %vm197, %v1571, -inf
        %1663 = vmax.xlane.f32.xlu0 %v1662
        %v1664 = vpop.xlane.xlu0 %1663
        %v1665 = vsel %vm197, %v1653, -inf
        %1666 = vmax.xlane.f32.xlu0 %v1665
        %v1667 = vpop.xlane.xlu0 %1666
        %v1668 = vsub.f32 %v1407, %v1658
        %v1669 = vsub.f32 %v1489, %v1661
        %v1670 = vsub.f32 %v1571, %v1664
        %v1671 = vsub.f32 %v1653, %v1667
        %v1672 = vmul.f32 %v1668, 1.442695
        %v1673 = vpow.pop %v1672
        %v1674 = vmul.f32 %v1669, 1.442695
        %v1675 = vpow.pop %v1674
        %v1676 = vmul.f32 %v1670, 1.442695
        %v1677 = vpow.pop %v1676
        %v1678 = vmul.f32 %v1671, 1.442695
        %v1679 = vpow.pop %v1678
        %v1680 = vsel %vm197, %v1673, 0.0
        %1681 = vadd.xlane.f32.xlu0 %v1680
        %v1682 = vpop.xlane.xlu0 %1681
        %v1683 = vsel %vm197, %v1675, 0.0
        %1684 = vadd.xlane.f32.xlu0 %v1683
        %v1685 = vpop.xlane.xlu0 %1684
        %v1686 = vsel %vm197, %v1677, 0.0
        %1687 = vadd.xlane.f32.xlu0 %v1686
        %v1688 = vpop.xlane.xlu0 %1687
        %v1689 = vsel %vm197, %v1679, 0.0
        %1690 = vadd.xlane.f32.xlu0 %v1689
        %v1691 = vpop.xlane.xlu0 %1690
        %v1692 = vrcp.pop %v1682
        %v1693 = vrcp.pop %v1685
        %v1694 = vrcp.pop %v1688
        %v1695 = vrcp.pop %v1691
        %v1696 = vmul.f32 %v1673, %v1692
        %v1697 = vmul.f32 %v1675, %v1693
        %v1698 = vmul.f32 %v1677, %v1694
        %v1699 = vmul.f32 %v1679, %v1695
        %v1701 = vsel %vm197, %v1696, 0
        %1703 = vmatprep.subr.mxu0 0.0
        %1704 = vmatpush1.msra.mxu0 %v1065
        %1705 = vmatprep.subr.mxu0 0.0
        %1706 = vmatpush1.msra.mxu0 %v1070
        %1707 = vmatprep.subr.mxu0 0.0
        %1708 = vmatpush1.msra.mxu0 %v1075
        %1709 = vmatprep.subr.mxu0 0.0
        %1710 = vmatpush1.msra.mxu0 0.0
        %1711 = vmatprep.subr.mxu0 0.0
        %1712 = vmatpush1.msra.mxu0 0.0
        %1713 = vmatprep.subr.mxu0 0.0
        %1714 = vmatpush1.msra.mxu0 0.0
        %1715 = vmatprep.subr.mxu0 0.0
        %1716 = vmatpush1.msra.mxu0 0.0
        %1717 = vmatprep.subr.mxu0 0.0
        %1718 = vmatpush1.msra.mxu0 0.0
        %1719 = vmatprep.subr.mxu0 0.0
        %1720 = vmatpush1.msra.mxu0 0.0
        %1721 = vmatprep.subr.mxu0 0.0
        %1722 = vmatpush1.msra.mxu0 0.0
        %1723 = vmatprep.subr.mxu0 0.0
        %1724 = vmatpush1.msra.mxu0 0.0
        %1725 = vmatprep.subr.mxu0 0.0
        %1726 = vmatpush1.msra.mxu0 0.0
        %1727 = vmatprep.subr.mxu0 0.0
        %1728 = vmatpush1.msra.mxu0 0.0
        %1729 = vmatprep.subr.mxu0 0.0
        %1730 = vmatpush1.msra.mxu0 0.0
        %1731 = vmatprep.subr.mxu0 0.0
        %1732 = vmatpush1.msra.mxu0 0.0
        %1733 = vmatprep.subr.mxu0 0.0
        %1734 = vmatpush1.msra.mxu0 0.0
        %1735 = vmatprep.subr.mxu0 0.0
        %1736 = vmatpush1.msra.mxu0 0.0
        %1737 = vmatprep.subr.mxu0 0.0
        %1738 = vmatpush1.msra.mxu0 0.0
        %1739 = vmatprep.subr.mxu0 0.0
        %1740 = vmatpush1.msra.mxu0 0.0
        %1741 = vmatprep.subr.mxu0 0.0
        %1742 = vmatpush1.msra.mxu0 0.0
        %1743 = vmatprep.subr.mxu0 0.0
        %1744 = vmatpush1.msra.mxu0 0.0
        %1745 = vmatprep.subr.mxu0 0.0
        %1746 = vmatpush1.msra.mxu0 0.0
        %1747 = vmatprep.subr.mxu0 0.0
        %1748 = vmatpush1.msra.mxu0 0.0
        %1749 = vmatprep.subr.mxu0 0.0
        %1750 = vmatpush1.msra.mxu0 0.0
        %1751 = vmatprep.subr.mxu0 0.0
        %1752 = vmatpush1.msra.mxu0 0.0
        %1753 = vmatprep.subr.mxu0 0.0
        %1754 = vmatpush1.msra.mxu0 0.0
        %1755 = vmatprep.subr.mxu0 0.0
        %1756 = vmatpush1.msra.mxu0 0.0
        %1757 = vmatprep.subr.mxu0 0.0
        %1758 = vmatpush1.msra.mxu0 0.0
        %1759 = vmatprep.subr.mxu0 0.0
        %1760 = vmatpush1.msra.mxu0 0.0
        %1761 = vmatprep.subr.mxu0 0.0
        %1762 = vmatpush1.msra.mxu0 0.0
        %1763 = vmatprep.subr.mxu0 0.0
        %1764 = vmatpush1.msra.mxu0 0.0
        %1765 = vmatprep.subr.mxu0 0.0
        %1766 = vmatpush1.msra.mxu0 0.0
        %1767 = vmatprep.mubr.f32.mxu0 0.0
        %1768 = vmatmul.mubr.f32.gmra.mrb[0].mxu0 %v1701
        %v1769 = vpop.f32.mrb[0].mxu0
        %v1770 = vadd.f32 0.0, %v1769
        %v1771 = vpop.f32.mrb[0].mxu0
        %1772 = vdwg.mxu0
        %v1774 = vsel %vm197, %v1697, 0
        %1776 = vmatprep.subr.mxu0 0.0
        %1777 = vmatpush1.msra.mxu0 %v1148
        %1778 = vmatprep.subr.mxu0 0.0
        %1779 = vmatpush1.msra.mxu0 %v1153
        %1780 = vmatprep.subr.mxu0 0.0
        %1781 = vmatpush1.msra.mxu0 %v1158
        %1782 = vmatprep.subr.mxu0 0.0
        %1783 = vmatpush1.msra.mxu0 0.0
        %1784 = vmatprep.subr.mxu0 0.0
        %1785 = vmatpush1.msra.mxu0 0.0
        %1786 = vmatprep.subr.mxu0 0.0
        %1787 = vmatpush1.msra.mxu0 0.0
        %1788 = vmatprep.subr.mxu0 0.0
        %1789 = vmatpush1.msra.mxu0 0.0
        %1790 = vmatprep.subr.mxu0 0.0
        %1791 = vmatpush1.msra.mxu0 0.0
        %1792 = vmatprep.subr.mxu0 0.0
        %1793 = vmatpush1.msra.mxu0 0.0
        %1794 = vmatprep.subr.mxu0 0.0
        %1795 = vmatpush1.msra.mxu0 0.0
        %1796 = vmatprep.subr.mxu0 0.0
        %1797 = vmatpush1.msra.mxu0 0.0
        %1798 = vmatprep.subr.mxu0 0.0
        %1799 = vmatpush1.msra.mxu0 0.0
        %1800 = vmatprep.subr.mxu0 0.0
        %1801 = vmatpush1.msra.mxu0 0.0
        %1802 = vmatprep.subr.mxu0 0.0
        %1803 = vmatpush1.msra.mxu0 0.0
        %1804 = vmatprep.subr.mxu0 0.0
        %1805 = vmatpush1.msra.mxu0 0.0
        %1806 = vmatprep.subr.mxu0 0.0
        %1807 = vmatpush1.msra.mxu0 0.0
        %1808 = vmatprep.subr.mxu0 0.0
        %1809 = vmatpush1.msra.mxu0 0.0
        %1810 = vmatprep.subr.mxu0 0.0
        %1811 = vmatpush1.msra.mxu0 0.0
        %1812 = vmatprep.subr.mxu0 0.0
        %1813 = vmatpush1.msra.mxu0 0.0
        %1814 = vmatprep.subr.mxu0 0.0
        %1815 = vmatpush1.msra.mxu0 0.0
        %1816 = vmatprep.subr.mxu0 0.0
        %1817 = vmatpush1.msra.mxu0 0.0
        %1818 = vmatprep.subr.mxu0 0.0
        %1819 = vmatpush1.msra.mxu0 0.0
        %1820 = vmatprep.subr.mxu0 0.0
        %1821 = vmatpush1.msra.mxu0 0.0
        %1822 = vmatprep.subr.mxu0 0.0
        %1823 = vmatpush1.msra.mxu0 0.0
        %1824 = vmatprep.subr.mxu0 0.0
        %1825 = vmatpush1.msra.mxu0 0.0
        %1826 = vmatprep.subr.mxu0 0.0
        %1827 = vmatpush1.msra.mxu0 0.0
        %1828 = vmatprep.subr.mxu0 0.0
        %1829 = vmatpush1.msra.mxu0 0.0
        %1830 = vmatprep.subr.mxu0 0.0
        %1831 = vmatpush1.msra.mxu0 0.0
        %1832 = vmatprep.subr.mxu0 0.0
        %1833 = vmatpush1.msra.mxu0 0.0
        %1834 = vmatprep.subr.mxu0 0.0
        %1835 = vmatpush1.msra.mxu0 0.0
        %1836 = vmatprep.subr.mxu0 0.0
        %1837 = vmatpush1.msra.mxu0 0.0
        %1838 = vmatprep.subr.mxu0 0.0
        %1839 = vmatpush1.msra.mxu0 0.0
        %1840 = vmatprep.mubr.f32.mxu0 0.0
        %1841 = vmatmul.mubr.f32.gmra.mrb[0].mxu0 %v1774
        %v1842 = vpop.f32.mrb[0].mxu0
        %v1843 = vadd.f32 0.0, %v1842
        %v1844 = vpop.f32.mrb[0].mxu0
        %1845 = vdwg.mxu0
        %v1847 = vsel %vm197, %v1698, 0
        %1849 = vmatprep.subr.mxu0 0.0
        %1850 = vmatpush1.msra.mxu0 %v1231
        %1851 = vmatprep.subr.mxu0 0.0
        %1852 = vmatpush1.msra.mxu0 %v1236
        %1853 = vmatprep.subr.mxu0 0.0
        %1854 = vmatpush1.msra.mxu0 %v1241
        %1855 = vmatprep.subr.mxu0 0.0
        %1856 = vmatpush1.msra.mxu0 0.0
        %1857 = vmatprep.subr.mxu0 0.0
        %1858 = vmatpush1.msra.mxu0 0.0
        %1859 = vmatprep.subr.mxu0 0.0
        %1860 = vmatpush1.msra.mxu0 0.0
        %1861 = vmatprep.subr.mxu0 0.0
        %1862 = vmatpush1.msra.mxu0 0.0
        %1863 = vmatprep.subr.mxu0 0.0
        %1864 = vmatpush1.msra.mxu0 0.0
        %1865 = vmatprep.subr.mxu0 0.0
        %1866 = vmatpush1.msra.mxu0 0.0
        %1867 = vmatprep.subr.mxu0 0.0
        %1868 = vmatpush1.msra.mxu0 0.0
        %1869 = vmatprep.subr.mxu0 0.0
        %1870 = vmatpush1.msra.mxu0 0.0
        %1871 = vmatprep.subr.mxu0 0.0
        %1872 = vmatpush1.msra.mxu0 0.0
        %1873 = vmatprep.subr.mxu0 0.0
        %1874 = vmatpush1.msra.mxu0 0.0
        %1875 = vmatprep.subr.mxu0 0.0
        %1876 = vmatpush1.msra.mxu0 0.0
        %1877 = vmatprep.subr.mxu0 0.0
        %1878 = vmatpush1.msra.mxu0 0.0
        %1879 = vmatprep.subr.mxu0 0.0
        %1880 = vmatpush1.msra.mxu0 0.0
        %1881 = vmatprep.subr.mxu0 0.0
        %1882 = vmatpush1.msra.mxu0 0.0
        %1883 = vmatprep.subr.mxu0 0.0
        %1884 = vmatpush1.msra.mxu0 0.0
        %1885 = vmatprep.subr.mxu0 0.0
        %1886 = vmatpush1.msra.mxu0 0.0
        %1887 = vmatprep.subr.mxu0 0.0
        %1888 = vmatpush1.msra.mxu0 0.0
        %1889 = vmatprep.subr.mxu0 0.0
        %1890 = vmatpush1.msra.mxu0 0.0
        %1891 = vmatprep.subr.mxu0 0.0
        %1892 = vmatpush1.msra.mxu0 0.0
        %1893 = vmatprep.subr.mxu0 0.0
        %1894 = vmatpush1.msra.mxu0 0.0
        %1895 = vmatprep.subr.mxu0 0.0
        %1896 = vmatpush1.msra.mxu0 0.0
        %1897 = vmatprep.subr.mxu0 0.0
        %1898 = vmatpush1.msra.mxu0 0.0
        %1899 = vmatprep.subr.mxu0 0.0
        %1900 = vmatpush1.msra.mxu0 0.0
        %1901 = vmatprep.subr.mxu0 0.0
        %1902 = vmatpush1.msra.mxu0 0.0
        %1903 = vmatprep.subr.mxu0 0.0
        %1904 = vmatpush1.msra.mxu0 0.0
        %1905 = vmatprep.subr.mxu0 0.0
        %1906 = vmatpush1.msra.mxu0 0.0
        %1907 = vmatprep.subr.mxu0 0.0
        %1908 = vmatpush1.msra.mxu0 0.0
        %1909 = vmatprep.subr.mxu0 0.0
        %1910 = vmatpush1.msra.mxu0 0.0
        %1911 = vmatprep.subr.mxu0 0.0
        %1912 = vmatpush1.msra.mxu0 0.0
        %1913 = vmatprep.mubr.f32.mxu0 0.0
        %1914 = vmatmul.mubr.f32.gmra.mrb[0].mxu0 %v1847
        %v1915 = vpop.f32.mrb[0].mxu0
        %v1916 = vadd.f32 0.0, %v1915
        %v1917 = vpop.f32.mrb[0].mxu0
        %1918 = vdwg.mxu0
        %v1920 = vsel %vm197, %v1699, 0
        %1922 = vmatprep.subr.mxu0 0.0
        %1923 = vmatpush1.msra.mxu0 %v1314
        %1924 = vmatprep.subr.mxu0 0.0
        %1925 = vmatpush1.msra.mxu0 %v1319
        %1926 = vmatprep.subr.mxu0 0.0
        %1927 = vmatpush1.msra.mxu0 %v1324
        %1928 = vmatprep.subr.mxu0 0.0
        %1929 = vmatpush1.msra.mxu0 0.0
        %1930 = vmatprep.subr.mxu0 0.0
        %1931 = vmatpush1.msra.mxu0 0.0
        %1932 = vmatprep.subr.mxu0 0.0
        %1933 = vmatpush1.msra.mxu0 0.0
        %1934 = vmatprep.subr.mxu0 0.0
        %1935 = vmatpush1.msra.mxu0 0.0
        %1936 = vmatprep.subr.mxu0 0.0
        %1937 = vmatpush1.msra.mxu0 0.0
        %1938 = vmatprep.subr.mxu0 0.0
        %1939 = vmatpush1.msra.mxu0 0.0
        %1940 = vmatprep.subr.mxu0 0.0
        %1941 = vmatpush1.msra.mxu0 0.0
        %1942 = vmatprep.subr.mxu0 0.0
        %1943 = vmatpush1.msra.mxu0 0.0
        %1944 = vmatprep.subr.mxu0 0.0
        %1945 = vmatpush1.msra.mxu0 0.0
        %1946 = vmatprep.subr.mxu0 0.0
        %1947 = vmatpush1.msra.mxu0 0.0
        %1948 = vmatprep.subr.mxu0 0.0
        %1949 = vmatpush1.msra.mxu0 0.0
        %1950 = vmatprep.subr.mxu0 0.0
        %1951 = vmatpush1.msra.mxu0 0.0
        %1952 = vmatprep.subr.mxu0 0.0
        %1953 = vmatpush1.msra.mxu0 0.0
        %1954 = vmatprep.subr.mxu0 0.0
        %1955 = vmatpush1.msra.mxu0 0.0
        %1956 = vmatprep.subr.mxu0 0.0
        %1957 = vmatpush1.msra.mxu0 0.0
        %1958 = vmatprep.subr.mxu0 0.0
        %1959 = vmatpush1.msra.mxu0 0.0
        %1960 = vmatprep.subr.mxu0 0.0
        %1961 = vmatpush1.msra.mxu0 0.0
        %1962 = vmatprep.subr.mxu0 0.0
        %1963 = vmatpush1.msra.mxu0 0.0
        %1964 = vmatprep.subr.mxu0 0.0
        %1965 = vmatpush1.msra.mxu0 0.0
        %1966 = vmatprep.subr.mxu0 0.0
        %1967 = vmatpush1.msra.mxu0 0.0
        %1968 = vmatprep.subr.mxu0 0.0
        %1969 = vmatpush1.msra.mxu0 0.0
        %1970 = vmatprep.subr.mxu0 0.0
        %1971 = vmatpush1.msra.mxu0 0.0
        %1972 = vmatprep.subr.mxu0 0.0
        %1973 = vmatpush1.msra.mxu0 0.0
        %1974 = vmatprep.subr.mxu0 0.0
        %1975 = vmatpush1.msra.mxu0 0.0
        %1976 = vmatprep.subr.mxu0 0.0
        %1977 = vmatpush1.msra.mxu0 0.0
        %1978 = vmatprep.subr.mxu0 0.0
        %1979 = vmatpush1.msra.mxu0 0.0
        %1980 = vmatprep.subr.mxu0 0.0
        %1981 = vmatpush1.msra.mxu0 0.0
        %1982 = vmatprep.subr.mxu0 0.0
        %1983 = vmatpush1.msra.mxu0 0.0
        %1984 = vmatprep.subr.mxu0 0.0
        %1985 = vmatpush1.msra.mxu0 0.0
        %1986 = vmatprep.mubr.f32.mxu0 0.0
        %1987 = vmatmul.mubr.f32.gmra.mrb[0].mxu0 %v1920
        %v1988 = vpop.f32.mrb[0].mxu0
        %v1989 = vadd.f32 0.0, %v1988
        %v1990 = vpop.f32.mrb[0].mxu0
        %1991 = vdwg.mxu0
        %v1993 = vsel %vm1327, %v1770, 0
        %1995 = vmatprep.subr.mxu0 0.0
        %1996 = vmatpush1.msra.mxu0 %v358
        %1997 = vmatprep.subr.mxu0 0.0
        %1998 = vmatpush1.msra.mxu0 0.0
        %1999 = vmatprep.subr.mxu0 0.0
        %2000 = vmatpush1.msra.mxu0 0.0
        %2001 = vmatprep.subr.mxu0 0.0
        %2002 = vmatpush1.msra.mxu0 0.0
        %2003 = vmatprep.subr.mxu0 0.0
        %2004 = vmatpush1.msra.mxu0 0.0
        %2005 = vmatprep.subr.mxu0 0.0
        %2006 = vmatpush1.msra.mxu0 0.0
        %2007 = vmatprep.subr.mxu0 0.0
        %2008 = vmatpush1.msra.mxu0 0.0
        %2009 = vmatprep.subr.mxu0 0.0
        %2010 = vmatpush1.msra.mxu0 0.0
        %2011 = vmatprep.subr.mxu0 0.0
        %2012 = vmatpush1.msra.mxu0 0.0
        %2013 = vmatprep.subr.mxu0 0.0
        %2014 = vmatpush1.msra.mxu0 0.0
        %2015 = vmatprep.subr.mxu0 0.0
        %2016 = vmatpush1.msra.mxu0 0.0
        %2017 = vmatprep.subr.mxu0 0.0
        %2018 = vmatpush1.msra.mxu0 0.0
        %2019 = vmatprep.subr.mxu0 0.0
        %2020 = vmatpush1.msra.mxu0 0.0
        %2021 = vmatprep.subr.mxu0 0.0
        %2022 = vmatpush1.msra.mxu0 0.0
        %2023 = vmatprep.subr.mxu0 0.0
        %2024 = vmatpush1.msra.mxu0 0.0
        %2025 = vmatprep.subr.mxu0 0.0
        %2026 = vmatpush1.msra.mxu0 0.0
        %2027 = vmatprep.subr.mxu0 0.0
        %2028 = vmatpush1.msra.mxu0 0.0
        %2029 = vmatprep.subr.mxu0 0.0
        %2030 = vmatpush1.msra.mxu0 0.0
        %2031 = vmatprep.subr.mxu0 0.0
        %2032 = vmatpush1.msra.mxu0 0.0
        %2033 = vmatprep.subr.mxu0 0.0
        %2034 = vmatpush1.msra.mxu0 0.0
        %2035 = vmatprep.subr.mxu0 0.0
        %2036 = vmatpush1.msra.mxu0 0.0
        %2037 = vmatprep.subr.mxu0 0.0
        %2038 = vmatpush1.msra.mxu0 0.0
        %2039 = vmatprep.subr.mxu0 0.0
        %2040 = vmatpush1.msra.mxu0 0.0
        %2041 = vmatprep.subr.mxu0 0.0
        %2042 = vmatpush1.msra.mxu0 0.0
        %2043 = vmatprep.subr.mxu0 0.0
        %2044 = vmatpush1.msra.mxu0 0.0
        %2045 = vmatprep.subr.mxu0 0.0
        %2046 = vmatpush1.msra.mxu0 0.0
        %2047 = vmatprep.subr.mxu0 0.0
        %2048 = vmatpush1.msra.mxu0 0.0
        %2049 = vmatprep.subr.mxu0 0.0
        %2050 = vmatpush1.msra.mxu0 0.0
        %2051 = vmatprep.subr.mxu0 0.0
        %2052 = vmatpush1.msra.mxu0 0.0
        %2053 = vmatprep.subr.mxu0 0.0
        %2054 = vmatpush1.msra.mxu0 0.0
        %2055 = vmatprep.subr.mxu0 0.0
        %2056 = vmatpush1.msra.mxu0 0.0
        %2057 = vmatprep.subr.mxu0 0.0
        %2058 = vmatpush1.msra.mxu0 0.0
        %2059 = vmatprep.mubr.f32.mxu0 0.0
        %2060 = vmatmul.mubr.f32.gmra.mrb[0].mxu0 %v1993
        %v2061 = vpop.f32.mrb[0].mxu0
        %v2062 = vadd.f32 0.0, %v2061
        %v2063 = vpop.f32.mrb[0].mxu0
        %2064 = vdwg.mxu0
        %v2066 = vsel %vm1327, %v1843, 0
        %2068 = vmatprep.subr.mxu0 0.0
        %2069 = vmatpush1.msra.mxu0 %v359
        %2070 = vmatprep.subr.mxu0 0.0
        %2071 = vmatpush1.msra.mxu0 0.0
        %2072 = vmatprep.subr.mxu0 0.0
        %2073 = vmatpush1.msra.mxu0 0.0
        %2074 = vmatprep.subr.mxu0 0.0
        %2075 = vmatpush1.msra.mxu0 0.0
        %2076 = vmatprep.subr.mxu0 0.0
        %2077 = vmatpush1.msra.mxu0 0.0
        %2078 = vmatprep.subr.mxu0 0.0
        %2079 = vmatpush1.msra.mxu0 0.0
        %2080 = vmatprep.subr.mxu0 0.0
        %2081 = vmatpush1.msra.mxu0 0.0
        %2082 = vmatprep.subr.mxu0 0.0
        %2083 = vmatpush1.msra.mxu0 0.0
        %2084 = vmatprep.subr.mxu0 0.0
        %2085 = vmatpush1.msra.mxu0 0.0
        %2086 = vmatprep.subr.mxu0 0.0
        %2087 = vmatpush1.msra.mxu0 0.0
        %2088 = vmatprep.subr.mxu0 0.0
        %2089 = vmatpush1.msra.mxu0 0.0
        %2090 = vmatprep.subr.mxu0 0.0
        %2091 = vmatpush1.msra.mxu0 0.0
        %2092 = vmatprep.subr.mxu0 0.0
        %2093 = vmatpush1.msra.mxu0 0.0
        %2094 = vmatprep.subr.mxu0 0.0
        %2095 = vmatpush1.msra.mxu0 0.0
        %2096 = vmatprep.subr.mxu0 0.0
        %2097 = vmatpush1.msra.mxu0 0.0
        %2098 = vmatprep.subr.mxu0 0.0
        %2099 = vmatpush1.msra.mxu0 0.0
        %2100 = vmatprep.subr.mxu0 0.0
        %2101 = vmatpush1.msra.mxu0 0.0
        %2102 = vmatprep.subr.mxu0 0.0
        %2103 = vmatpush1.msra.mxu0 0.0
        %2104 = vmatprep.subr.mxu0 0.0
        %2105 = vmatpush1.msra.mxu0 0.0
        %2106 = vmatprep.subr.mxu0 0.0
        %2107 = vmatpush1.msra.mxu0 0.0
        %2108 = vmatprep.subr.mxu0 0.0
        %2109 = vmatpush1.msra.mxu0 0.0
        %2110 = vmatprep.subr.mxu0 0.0
        %2111 = vmatpush1.msra.mxu0 0.0
        %2112 = vmatprep.subr.mxu0 0.0
        %2113 = vmatpush1.msra.mxu0 0.0
        %2114 = vmatprep.subr.mxu0 0.0
        %2115 = vmatpush1.msra.mxu0 0.0
        %2116 = vmatprep.subr.mxu0 0.0
        %2117 = vmatpush1.msra.mxu0 0.0
        %2118 = vmatprep.subr.mxu0 0.0
        %2119 = vmatpush1.msra.mxu0 0.0
        %2120 = vmatprep.subr.mxu0 0.0
        %2121 = vmatpush1.msra.mxu0 0.0
        %2122 = vmatprep.subr.mxu0 0.0
        %2123 = vmatpush1.msra.mxu0 0.0
        %2124 = vmatprep.subr.mxu0 0.0
        %2125 = vmatpush1.msra.mxu0 0.0
        %2126 = vmatprep.subr.mxu0 0.0
        %2127 = vmatpush1.msra.mxu0 0.0
        %2128 = vmatprep.subr.mxu0 0.0
        %2129 = vmatpush1.msra.mxu0 0.0
        %2130 = vmatprep.subr.mxu0 0.0
        %2131 = vmatpush1.msra.mxu0 0.0
        %2132 = vmatprep.mubr.f32.mxu0 0.0
        %2133 = vmatmul.mubr.f32.gmra.mrb[0].mxu0 %v2066
        %v2134 = vpop.f32.mrb[0].mxu0
        %v2135 = vadd.f32 0.0, %v2134
        %v2136 = vpop.f32.mrb[0].mxu0
        %2137 = vdwg.mxu0
        %v2139 = vsel %vm1327, %v1916, 0
        %2141 = vmatprep.subr.mxu0 0.0
        %2142 = vmatpush1.msra.mxu0 %v360
        %2143 = vmatprep.subr.mxu0 0.0
        %2144 = vmatpush1.msra.mxu0 0.0
        %2145 = vmatprep.subr.mxu0 0.0
        %2146 = vmatpush1.msra.mxu0 0.0
        %2147 = vmatprep.subr.mxu0 0.0
        %2148 = vmatpush1.msra.mxu0 0.0
        %2149 = vmatprep.subr.mxu0 0.0
        %2150 = vmatpush1.msra.mxu0 0.0
        %2151 = vmatprep.subr.mxu0 0.0
        %2152 = vmatpush1.msra.mxu0 0.0
        %2153 = vmatprep.subr.mxu0 0.0
        %2154 = vmatpush1.msra.mxu0 0.0
        %2155 = vmatprep.subr.mxu0 0.0
        %2156 = vmatpush1.msra.mxu0 0.0
        %2157 = vmatprep.subr.mxu0 0.0
        %2158 = vmatpush1.msra.mxu0 0.0
        %2159 = vmatprep.subr.mxu0 0.0
        %2160 = vmatpush1.msra.mxu0 0.0
        %2161 = vmatprep.subr.mxu0 0.0
        %2162 = vmatpush1.msra.mxu0 0.0
        %2163 = vmatprep.subr.mxu0 0.0
        %2164 = vmatpush1.msra.mxu0 0.0
        %2165 = vmatprep.subr.mxu0 0.0
        %2166 = vmatpush1.msra.mxu0 0.0
        %2167 = vmatprep.subr.mxu0 0.0
        %2168 = vmatpush1.msra.mxu0 0.0
        %2169 = vmatprep.subr.mxu0 0.0
        %2170 = vmatpush1.msra.mxu0 0.0
        %2171 = vmatprep.subr.mxu0 0.0
        %2172 = vmatpush1.msra.mxu0 0.0
        %2173 = vmatprep.subr.mxu0 0.0
        %2174 = vmatpush1.msra.mxu0 0.0
        %2175 = vmatprep.subr.mxu0 0.0
        %2176 = vmatpush1.msra.mxu0 0.0
        %2177 = vmatprep.subr.mxu0 0.0
        %2178 = vmatpush1.msra.mxu0 0.0
        %2179 = vmatprep.subr.mxu0 0.0
        %2180 = vmatpush1.msra.mxu0 0.0
        %2181 = vmatprep.subr.mxu0 0.0
        %2182 = vmatpush1.msra.mxu0 0.0
        %2183 = vmatprep.subr.mxu0 0.0
        %2184 = vmatpush1.msra.mxu0 0.0
        %2185 = vmatprep.subr.mxu0 0.0
        %2186 = vmatpush1.msra.mxu0 0.0
        %2187 = vmatprep.subr.mxu0 0.0
        %2188 = vmatpush1.msra.mxu0 0.0
        %2189 = vmatprep.subr.mxu0 0.0
        %2190 = vmatpush1.msra.mxu0 0.0
        %2191 = vmatprep.subr.mxu0 0.0
        %2192 = vmatpush1.msra.mxu0 0.0
        %2193 = vmatprep.subr.mxu0 0.0
        %2194 = vmatpush1.msra.mxu0 0.0
        %2195 = vmatprep.subr.mxu0 0.0
        %2196 = vmatpush1.msra.mxu0 0.0
        %2197 = vmatprep.subr.mxu0 0.0
        %2198 = vmatpush1.msra.mxu0 0.0
        %2199 = vmatprep.subr.mxu0 0.0
        %2200 = vmatpush1.msra.mxu0 0.0
        %2201 = vmatprep.subr.mxu0 0.0
        %2202 = vmatpush1.msra.mxu0 0.0
        %2203 = vmatprep.subr.mxu0 0.0
        %2204 = vmatpush1.msra.mxu0 0.0
        %2205 = vmatprep.mubr.f32.mxu0 0.0
        %2206 = vmatmul.mubr.f32.gmra.mrb[0].mxu0 %v2139
        %v2207 = vpop.f32.mrb[0].mxu0
        %v2208 = vadd.f32 0.0, %v2207
        %v2209 = vpop.f32.mrb[0].mxu0
        %2210 = vdwg.mxu0
        %v2212 = vsel %vm1327, %v1989, 0
        %2214 = vmatprep.subr.mxu0 0.0
        %2215 = vmatpush1.msra.mxu0 %v361
        %2216 = vmatprep.subr.mxu0 0.0
        %2217 = vmatpush1.msra.mxu0 0.0
        %2218 = vmatprep.subr.mxu0 0.0
        %2219 = vmatpush1.msra.mxu0 0.0
        %2220 = vmatprep.subr.mxu0 0.0
        %2221 = vmatpush1.msra.mxu0 0.0
        %2222 = vmatprep.subr.mxu0 0.0
        %2223 = vmatpush1.msra.mxu0 0.0
        %2224 = vmatprep.subr.mxu0 0.0
        %2225 = vmatpush1.msra.mxu0 0.0
        %2226 = vmatprep.subr.mxu0 0.0
        %2227 = vmatpush1.msra.mxu0 0.0
        %2228 = vmatprep.subr.mxu0 0.0
        %2229 = vmatpush1.msra.mxu0 0.0
        %2230 = vmatprep.subr.mxu0 0.0
        %2231 = vmatpush1.msra.mxu0 0.0
        %2232 = vmatprep.subr.mxu0 0.0
        %2233 = vmatpush1.msra.mxu0 0.0
        %2234 = vmatprep.subr.mxu0 0.0
        %2235 = vmatpush1.msra.mxu0 0.0
        %2236 = vmatprep.subr.mxu0 0.0
        %2237 = vmatpush1.msra.mxu0 0.0
        %2238 = vmatprep.subr.mxu0 0.0
        %2239 = vmatpush1.msra.mxu0 0.0
        %2240 = vmatprep.subr.mxu0 0.0
        %2241 = vmatpush1.msra.mxu0 0.0
        %2242 = vmatprep.subr.mxu0 0.0
        %2243 = vmatpush1.msra.mxu0 0.0
        %2244 = vmatprep.subr.mxu0 0.0
        %2245 = vmatpush1.msra.mxu0 0.0
        %2246 = vmatprep.subr.mxu0 0.0
        %2247 = vmatpush1.msra.mxu0 0.0
        %2248 = vmatprep.subr.mxu0 0.0
        %2249 = vmatpush1.msra.mxu0 0.0
        %2250 = vmatprep.subr.mxu0 0.0
        %2251 = vmatpush1.msra.mxu0 0.0
        %2252 = vmatprep.subr.mxu0 0.0
        %2253 = vmatpush1.msra.mxu0 0.0
        %2254 = vmatprep.subr.mxu0 0.0
        %2255 = vmatpush1.msra.mxu0 0.0
        %2256 = vmatprep.subr.mxu0 0.0
        %2257 = vmatpush1.msra.mxu0 0.0
        %2258 = vmatprep.subr.mxu0 0.0
        %2259 = vmatpush1.msra.mxu0 0.0
        %2260 = vmatprep.subr.mxu0 0.0
        %2261 = vmatpush1.msra.mxu0 0.0
        %2262 = vmatprep.subr.mxu0 0.0
        %2263 = vmatpush1.msra.mxu0 0.0
        %2264 = vmatprep.subr.mxu0 0.0
        %2265 = vmatpush1.msra.mxu0 0.0
        %2266 = vmatprep.subr.mxu0 0.0
        %2267 = vmatpush1.msra.mxu0 0.0
        %2268 = vmatprep.subr.mxu0 0.0
        %2269 = vmatpush1.msra.mxu0 0.0
        %2270 = vmatprep.subr.mxu0 0.0
        %2271 = vmatpush1.msra.mxu0 0.0
        %2272 = vmatprep.subr.mxu0 0.0
        %2273 = vmatpush1.msra.mxu0 0.0
        %2274 = vmatprep.subr.mxu0 0.0
        %2275 = vmatpush1.msra.mxu0 0.0
        %2276 = vmatprep.subr.mxu0 0.0
        %2277 = vmatpush1.msra.mxu0 0.0
        %2278 = vmatprep.mubr.f32.mxu0 0.0
        %2279 = vmatmul.mubr.f32.gmra.mrb[0].mxu0 %v2212
        %v2280 = vpop.f32.mrb[0].mxu0
        %v2281 = vadd.f32 0.0, %v2280
        %v2282 = vpop.f32.mrb[0].mxu0
        %2283 = vdwg.mxu0
        %v2284 = vsel %vm281, %v2062, 0.0
        %v2285 = vsel %vm281, %v2135, 0.0
        %v2286 = vadd.f32 %v2284, %v2285
        %v2287 = vsel %vm281, %v2208, 0.0
        %v2288 = vadd.f32 %v2286, %v2287
        %v2289 = vsel %vm281, %v2281, 0.0
        %v2290 = vadd.f32 %v2288, %v2289
        %v2291 = vadd.f32 %v2290, %v188
        %v2292 = vld [vmem:[%s2 + $0xc0] sm:$0x1]
        %v2293 = vld [vmem:[%s2 + $0xc8] sm:$0x1]
        %v2294 = vsel %vm281, %v2291, 0.0
        %2295 = vadd.xlane.f32.xlu0 %v2294
        %v2296 = vpop.xlane.xlu0 %2295
        %v2297 = vmul.f32 %v2296, %v288
        %v2298 = vsub.f32 %v2291, %v2297
        %v2299 = vmul.f32 %v2298, %v2298
        %v2300 = vsel %vm281, %v2299, 0.0
        %2301 = vadd.xlane.f32.xlu0 %v2300
        %v2302 = vpop.xlane.xlu0 %2301
        %v2303 = vmul.f32 %v2302, %v288
        %v2304 = vadd.f32 %v2303, 1e-05
        %v2305 = vrsqrt.pop %v2304
        %v2306 = vmul.f32 %v2298, %v2305
        %v2307 = vlaneseq
        %v2308 = vshrl.u32 %v2307, 7
        %v2309 = vsub.s32 0, %v2308
        %v2310 = vrot.slane %v2292, %v2309
        %v2311 = vmul.f32 %v2306, %v2310
        %v2312 = vlaneseq
        %v2313 = vshrl.u32 %v2312, 7
        %v2314 = vsub.s32 0, %v2313
        %v2315 = vrot.slane %v2293, %v2314
        %v2316 = vadd.f32 %v2311, %v2315
        %v2317 = vld [vmem:[%s2 + $0xd0] sm:$0xff]
        %v2318 = vld [vmem:[%s2 + $0xd8] sm:$0xff]
        %v2319 = vld [vmem:[%s2 + $0xe0] sm:$0xff]
        %v2320 = vld [vmem:[%s2 + $0xe8] sm:$0xff]
        %v2321 = vld [vmem:[%s2 + $0xf0] sm:$0xff]
        %v2322 = vld [vmem:[%s2 + $0xf8] sm:$0xff]
        %v2323 = vld [vmem:[%s2 + $0x100] sm:$0xff]
        %v2324 = vld [vmem:[%s2 + $0x108] sm:$0xff]
        %v2325 = vld [vmem:[%s2 + $0x110] sm:$0xff]
        %v2326 = vld [vmem:[%s2 + $0x118] sm:$0xff]
        %v2327 = vld [vmem:[%s2 + $0x120] sm:$0xff]
        %v2328 = vld [vmem:[%s2 + $0x128] sm:$0xff]
        %v2329 = vld [vmem:[%s2 + $0x130] sm:$0xff]
        %v2330 = vld [vmem:[%s2 + $0x138] sm:$0xff]
        %v2331 = vld [vmem:[%s2 + $0x140] sm:$0xff]
        %v2332 = vld [vmem:[%s2 + $0x148] sm:$0xff]
        %v2334 = vsel %vm281, %v2316, 0
        %v2337 = vsel %vm281, %v2317, 0
        %v2340 = vsel %vm281, %v2318, 0
        %v2343 = vsel %vm281, %v2319, 0
        %v2346 = vsel %vm281, %v2320, 0
        %v2349 = vsel %vm281, %v2321, 0
        %v2352 = vsel %vm281, %v2322, 0
        %v2355 = vsel %vm281, %v2323, 0
        %v2358 = vsel %vm281, %v2324, 0
        %v2361 = vsel %vm281, %v2325, 0
        %v2364 = vsel %vm281, %v2326, 0
        %v2367 = vsel %vm281, %v2327, 0
        %v2370 = vsel %vm281, %v2328, 0
        %v2373 = vsel %vm281, %v2329, 0
        %v2376 = vsel %vm281, %v2330, 0
        %v2379 = vsel %vm281, %v2331, 0
        %v2382 = vsel %vm281, %v2332, 0
        %2384 = vmatprep.subr.mxu0 0.0
        %2385 = vmatpush1.xpose.msra.mxu0 %v2337
        %2386 = vmatprep.subr.mxu0 0.0
        %2387 = vmatpush1.xpose.msra.mxu0 %v2340
        %2388 = vmatprep.subr.mxu0 0.0
        %2389 = vmatpush1.xpose.msra.mxu0 %v2343
        %2390 = vmatprep.subr.mxu0 0.0
        %2391 = vmatpush1.xpose.msra.mxu0 %v2346
        %2392 = vmatprep.subr.mxu0 0.0
        %2393 = vmatpush1.xpose.msra.mxu0 %v2349
        %2394 = vmatprep.subr.mxu0 0.0
        %2395 = vmatpush1.xpose.msra.mxu0 %v2352
        %2396 = vmatprep.subr.mxu0 0.0
        %2397 = vmatpush1.xpose.msra.mxu0 %v2355
        %2398 = vmatprep.subr.mxu0 0.0
        %2399 = vmatpush1.xpose.msra.mxu0 %v2358
        %2400 = vmatprep.subr.mxu0 0.0
        %2401 = vmatpush1.xpose.msra.mxu0 %v2361
        %2402 = vmatprep.subr.mxu0 0.0
        %2403 = vmatpush1.xpose.msra.mxu0 %v2364
        %2404 = vmatprep.subr.mxu0 0.0
        %2405 = vmatpush1.xpose.msra.mxu0 %v2367
        %2406 = vmatprep.subr.mxu0 0.0
        %2407 = vmatpush1.xpose.msra.mxu0 %v2370
        %2408 = vmatprep.subr.mxu0 0.0
        %2409 = vmatpush1.xpose.msra.mxu0 %v2373
        %2410 = vmatprep.subr.mxu0 0.0
        %2411 = vmatpush1.xpose.msra.mxu0 %v2376
        %2412 = vmatprep.subr.mxu0 0.0
        %2413 = vmatpush1.xpose.msra.mxu0 %v2379
        %2414 = vmatprep.subr.mxu0 0.0
        %2415 = vmatpush1.xpose.msra.mxu0 %v2382
        %2416 = vmatprep.subr.mxu0 0.0
        %2417 = vmatpush1.xpose.msra.mxu0 0.0
        %2418 = vmatprep.subr.mxu0 0.0
        %2419 = vmatpush1.xpose.msra.mxu0 0.0
        %2420 = vmatprep.subr.mxu0 0.0
        %2421 = vmatpush1.xpose.msra.mxu0 0.0
        %2422 = vmatprep.subr.mxu0 0.0
        %2423 = vmatpush1.xpose.msra.mxu0 0.0
        %2424 = vmatprep.subr.mxu0 0.0
        %2425 = vmatpush1.xpose.msra.mxu0 0.0
        %2426 = vmatprep.subr.mxu0 0.0
        %2427 = vmatpush1.xpose.msra.mxu0 0.0
        %2428 = vmatprep.subr.mxu0 0.0
        %2429 = vmatpush1.xpose.msra.mxu0 0.0
        %2430 = vmatprep.subr.mxu0 0.0
        %2431 = vmatpush1.xpose.msra.mxu0 0.0
        %2432 = vmatprep.subr.mxu0 0.0
        %2433 = vmatpush1.xpose.msra.mxu0 0.0
        %2434 = vmatprep.subr.mxu0 0.0
        %2435 = vmatpush1.xpose.msra.mxu0 0.0
        %2436 = vmatprep.subr.mxu0 0.0
        %2437 = vmatpush1.xpose.msra.mxu0 0.0
        %2438 = vmatprep.subr.mxu0 0.0
        %2439 = vmatpush1.xpose.msra.mxu0 0.0
        %2440 = vmatprep.subr.mxu0 0.0
        %2441 = vmatpush1.xpose.msra.mxu0 0.0
        %2442 = vmatprep.subr.mxu0 0.0
        %2443 = vmatpush1.xpose.msra.mxu0 0.0
        %2444 = vmatprep.subr.mxu0 0.0
        %2445 = vmatpush1.xpose.msra.mxu0 0.0
        %2446 = vmatprep.subr.mxu0 0.0
        %2447 = vmatpush1.xpose.msra.mxu0 0.0
        %2448 = vmatprep.mubr.f32.mxu0 0.0
        %2449 = vmatmul.mubr.f32.gmra.mrb[0].mxu0 %v2334
        %v2450 = vpop.f32.mrb[0].mxu0
        %v2451 = vadd.f32 0.0, %v2450
        %v2452 = vpop.f32.mrb[0].mxu0
        %2453 = vdwg.mxu0
        %v2454 = vmul.f32 %v2451, 0.70710677
        %v2455 = vand.u32 2147483647, %v2454
        %v2456 = vmul.f32 %v2455, 0.3275911
        %v2457 = vadd.f32 %v2456, 1.0
        %v2458 = vrcp.pop %v2457
        %v2459 = vmul.f32 1.0, %v2458
        %v2460 = vmul.f32 %v2459, 1.0614054
        %v2461 = vadd.f32 %v2460, -1.4531521
        %v2462 = vmul.f32 %v2459, %v2461
        %v2463 = vadd.f32 %v2462, 1.4214138
        %v2464 = vmul.f32 %v2459, %v2463
        %v2465 = vadd.f32 %v2464, -0.28449672
        %v2466 = vmul.f32 %v2459, %v2465
        %v2467 = vadd.f32 %v2466, 0.2548296
        %v2468 = vmul.f32 %v2459, %v2467
        %v2469 = vsub.f32 0.0, %v2455
        %v2470 = vmul.f32 %v2469, %v2455
        %v2471 = vmul.f32 %v2470, 1.442695
        %v2472 = vpow.pop %v2471
        %v2473 = vmul.f32 %v2468, %v2472
        %v2474 = vsub.f32 1.0, %v2473
        %vm2475 = vcmp.ge.f32.partialorder %v2454, 0.0
        %v2476 = vsub.f32 0.0, %v2474
        %v2477 = vsel %vm2475, %v2474, %v2476
        %v2478 = vmul.f32 %v2451, 0.5
        %v2479 = vadd.f32 %v2477, 1.0
        %v2480 = vmul.f32 %v2478, %v2479
        %v2481 = vld [vmem:[%s2 + $0x150] sm:$0xff]
        %v2482 = vld [vmem:[%s2 + $0x158] sm:$0xff]
        %v2483 = vld [vmem:[%s2 + $0x160] sm:$0xff]
        %v2484 = vld [vmem:[%s2 + $0x168] sm:$0xff]
        %v2485 = vld [vmem:[%s2 + $0x170] sm:$0xff]
        %v2486 = vld [vmem:[%s2 + $0x178] sm:$0xff]
        %v2487 = vld [vmem:[%s2 + $0x180] sm:$0xff]
        %v2488 = vld [vmem:[%s2 + $0x188] sm:$0xff]
        %v2489 = vld [vmem:[%s2 + $0x190] sm:$0xff]
        %v2490 = vld [vmem:[%s2 + $0x198] sm:$0xff]
        %v2491 = vld [vmem:[%s2 + $0x1a0] sm:$0xff]
        %v2492 = vld [vmem:[%s2 + $0x1a8] sm:$0xff]
        %v2493 = vld [vmem:[%s2 + $0x1b0] sm:$0xff]
        %v2494 = vld [vmem:[%s2 + $0x1b8] sm:$0xff]
        %v2495 = vld [vmem:[%s2 + $0x1c0] sm:$0xff]
        %v2496 = vld [vmem:[%s2 + $0x1c8] sm:$0xff]
        %2497 = vmatprep.subr.mxu0 0.0
        %2498 = vmatpush1.msra.mxu0 %v2481
        %2499 = vmatprep.subr.mxu0 0.0
        %2500 = vmatpush1.msra.mxu0 %v2482
        %2501 = vmatprep.subr.mxu0 0.0
        %2502 = vmatpush1.msra.mxu0 %v2483
        %2503 = vmatprep.subr.mxu0 0.0
        %2504 = vmatpush1.msra.mxu0 %v2484
        %2505 = vmatprep.subr.mxu0 0.0
        %2506 = vmatpush1.msra.mxu0 %v2485
        %2507 = vmatprep.subr.mxu0 0.0
        %2508 = vmatpush1.msra.mxu0 %v2486
        %2509 = vmatprep.subr.mxu0 0.0
        %2510 = vmatpush1.msra.mxu0 %v2487
        %2511 = vmatprep.subr.mxu0 0.0
        %2512 = vmatpush1.msra.mxu0 %v2488
        %2513 = vmatprep.subr.mxu0 0.0
        %2514 = vmatpush1.msra.mxu0 %v2489
        %2515 = vmatprep.subr.mxu0 0.0
        %2516 = vmatpush1.msra.mxu0 %v2490
        %2517 = vmatprep.subr.mxu0 0.0
        %2518 = vmatpush1.msra.mxu0 %v2491
        %2519 = vmatprep.subr.mxu0 0.0
        %2520 = vmatpush1.msra.mxu0 %v2492
        %2521 = vmatprep.subr.mxu0 0.0
        %2522 = vmatpush1.msra.mxu0 %v2493
        %2523 = vmatprep.subr.mxu0 0.0
        %2524 = vmatpush1.msra.mxu0 %v2494
        %2525 = vmatprep.subr.mxu0 0.0
        %2526 = vmatpush1.msra.mxu0 %v2495
        %2527 = vmatprep.subr.mxu0 0.0
        %2528 = vmatpush1.msra.mxu0 %v2496
        %2529 = vmatprep.subr.mxu0 0.0
        %2530 = vmatpush1.msra.mxu0 0.0
        %2531 = vmatprep.subr.mxu0 0.0
        %2532 = vmatpush1.msra.mxu0 0.0
        %2533 = vmatprep.subr.mxu0 0.0
        %2534 = vmatpush1.msra.mxu0 0.0
        %2535 = vmatprep.subr.mxu0 0.0
        %2536 = vmatpush1.msra.mxu0 0.0
        %2537 = vmatprep.subr.mxu0 0.0
        %2538 = vmatpush1.msra.mxu0 0.0
        %2539 = vmatprep.subr.mxu0 0.0
        %2540 = vmatpush1.msra.mxu0 0.0
        %2541 = vmatprep.subr.mxu0 0.0
        %2542 = vmatpush1.msra.mxu0 0.0
        %2543 = vmatprep.subr.mxu0 0.0
        %2544 = vmatpush1.msra.mxu0 0.0
        %2545 = vmatprep.subr.mxu0 0.0
        %2546 = vmatpush1.msra.mxu0 0.0
        %2547 = vmatprep.subr.mxu0 0.0
        %2548 = vmatpush1.msra.mxu0 0.0
        %2549 = vmatprep.subr.mxu0 0.0
        %2550 = vmatpush1.msra.mxu0 0.0
        %2551 = vmatprep.subr.mxu0 0.0
        %2552 = vmatpush1.msra.mxu0 0.0
        %2553 = vmatprep.subr.mxu0 0.0
        %2554 = vmatpush1.msra.mxu0 0.0
        %2555 = vmatprep.subr.mxu0 0.0
        %2556 = vmatpush1.msra.mxu0 0.0
        %2557 = vmatprep.subr.mxu0 0.0
        %2558 = vmatpush1.msra.mxu0 0.0
        %2559 = vmatprep.subr.mxu0 0.0
        %2560 = vmatpush1.msra.mxu0 0.0
        %2561 = vmatprep.mubr.f32.mxu0 0.0
        %2562 = vmatmul.mubr.f32.gmra.mrb[0].mxu0 %v2480
        %v2563 = vpop.f32.mrb[0].mxu0
        %v2564 = vadd.f32 %v2291, %v2563
        %v2565 = vpop.f32.mrb[0].mxu0
        %2566 = vdwg.mxu0
        %v2567 = vld [vmem:[%s2 + $0x1d0] sm:$0x1]
        %v2568 = vld [vmem:[%s2 + $0x1d8] sm:$0x1]
        %v2569 = vlaneseq
        %v2570 = vshrl.u32 %v2569, 7
        %v2571 = vsub.s32 0, %v2570
        %v2572 = vrot.slane %v2567, %v2571
        %v2573 = vmul.f32 %v307, %v2572
        %v2574 = vmul.f32 %v308, %v2572
        %v2575 = vlaneseq
        %v2576 = vshrl.u32 %v2575, 7
        %v2577 = vsub.s32 0, %v2576
        %v2578 = vrot.slane %v2568, %v2577
        %v2579 = vadd.f32 %v2573, %v2578
        %v2580 = vadd.f32 %v2574, %v2578
        %v2581 = vld [vmem:[%s2 + $0x1e0] sm:$0x1]
        %v2582 = vld [vmem:[%s2 + $0x1e8] sm:$0x1]
        %v2583 = vsel %vm281, %v2564, 0.0
        %2584 = vadd.xlane.f32.xlu0 %v2583
        %v2585 = vpop.xlane.xlu0 %2584
        %v2586 = vmul.f32 %v2585, %v288
        %v2587 = vsub.f32 %v2564, %v2586
        %v2588 = vmul.f32 %v2587, %v2587
        %v2589 = vsel %vm281, %v2588, 0.0
        %2590 = vadd.xlane.f32.xlu0 %v2589
        %v2591 = vpop.xlane.xlu0 %2590
        %v2592 = vmul.f32 %v2591, %v288
        %v2593 = vadd.f32 %v2592, 1e-05
        %v2594 = vrsqrt.pop %v2593
        %v2595 = vmul.f32 %v2587, %v2594
        %v2596 = vlaneseq
        %v2597 = vshrl.u32 %v2596, 7
        %v2598 = vsub.s32 0, %v2597
        %v2599 = vrot.slane %v2581, %v2598
        %v2600 = vmul.f32 %v2595, %v2599
        %v2601 = vlaneseq
        %v2602 = vshrl.u32 %v2601, 7
        %v2603 = vsub.s32 0, %v2602
        %v2604 = vrot.slane %v2582, %v2603
        %v2605 = vadd.f32 %v2600, %v2604
        %v2606 = vld [vmem:[%s2 + $0x1f0] sm:$0xff]
        %v2607 = vld [vmem:[%s2 + $0x1f8] sm:$0xff]
        %v2608 = vld [vmem:[%s2 + $0x200] sm:$0xff]
        %v2609 = vld [vmem:[%s2 + $0x208] sm:$0xff]
        %v2610 = vld [vmem:[%s2 + $0x210] sm:$0xff]
        %v2611 = vld [vmem:[%s2 + $0x218] sm:$0xff]
        %v2612 = vld [vmem:[%s2 + $0x220] sm:$0xff]
        %v2613 = vld [vmem:[%s2 + $0x228] sm:$0xff]
        %v2614 = vld [vmem:[%s2 + $0x230] sm:$0xff]
        %v2615 = vld [vmem:[%s2 + $0x238] sm:$0xff]
        %v2616 = vld [vmem:[%s2 + $0x240] sm:$0xff]
        %v2617 = vld [vmem:[%s2 + $0x248] sm:$0xff]
        %v2618 = vld [vmem:[%s2 + $0x250] sm:$0xff]
        %v2619 = vld [vmem:[%s2 + $0x258] sm:$0xff]
        %v2620 = vld [vmem:[%s2 + $0x260] sm:$0xff]
        %v2621 = vld [vmem:[%s2 + $0x268] sm:$0xff]
        %v2623 = vsel %vm281, %v2605, 0
        %v2626 = vsel %vm281, %v2606, 0
        %2628 = vmatprep.subr.mxu0 0.0
        %2629 = vmatpush1.xpose.msra.mxu0 %v2626
        %2630 = vmatprep.subr.mxu0 0.0
        %2631 = vmatpush1.xpose.msra.mxu0 0.0
        %2632 = vmatprep.subr.mxu0 0.0
        %2633 = vmatpush1.xpose.msra.mxu0 0.0
        %2634 = vmatprep.subr.mxu0 0.0
        %2635 = vmatpush1.xpose.msra.mxu0 0.0
        %2636 = vmatprep.subr.mxu0 0.0
        %2637 = vmatpush1.xpose.msra.mxu0 0.0
        %2638 = vmatprep.subr.mxu0 0.0
        %2639 = vmatpush1.xpose.msra.mxu0 0.0
        %2640 = vmatprep.subr.mxu0 0.0
        %2641 = vmatpush1.xpose.msra.mxu0 0.0
        %2642 = vmatprep.subr.mxu0 0.0
        %2643 = vmatpush1.xpose.msra.mxu0 0.0
        %2644 = vmatprep.subr.mxu0 0.0
        %2645 = vmatpush1.xpose.msra.mxu0 0.0
        %2646 = vmatprep.subr.mxu0 0.0
        %2647 = vmatpush1.xpose.msra.mxu0 0.0
        %2648 = vmatprep.subr.mxu0 0.0
        %2649 = vmatpush1.xpose.msra.mxu0 0.0
        %2650 = vmatprep.subr.mxu0 0.0
        %2651 = vmatpush1.xpose.msra.mxu0 0.0
        %2652 = vmatprep.subr.mxu0 0.0
        %2653 = vmatpush1.xpose.msra.mxu0 0.0
        %2654 = vmatprep.subr.mxu0 0.0
        %2655 = vmatpush1.xpose.msra.mxu0 0.0
        %2656 = vmatprep.subr.mxu0 0.0
        %2657 = vmatpush1.xpose.msra.mxu0 0.0
        %2658 = vmatprep.subr.mxu0 0.0
        %2659 = vmatpush1.xpose.msra.mxu0 0.0
        %2660 = vmatprep.subr.mxu0 0.0
        %2661 = vmatpush1.xpose.msra.mxu0 0.0
        %2662 = vmatprep.subr.mxu0 0.0
        %2663 = vmatpush1.xpose.msra.mxu0 0.0
        %2664 = vmatprep.subr.mxu0 0.0
        %2665 = vmatpush1.xpose.msra.mxu0 0.0
        %2666 = vmatprep.subr.mxu0 0.0
        %2667 = vmatpush1.xpose.msra.mxu0 0.0
        %2668 = vmatprep.subr.mxu0 0.0
        %2669 = vmatpush1.xpose.msra.mxu0 0.0
        %2670 = vmatprep.subr.mxu0 0.0
        %2671 = vmatpush1.xpose.msra.mxu0 0.0
        %2672 = vmatprep.subr.mxu0 0.0
        %2673 = vmatpush1.xpose.msra.mxu0 0.0
        %2674 = vmatprep.subr.mxu0 0.0
        %2675 = vmatpush1.xpose.msra.mxu0 0.0
        %2676 = vmatprep.subr.mxu0 0.0
        %2677 = vmatpush1.xpose.msra.mxu0 0.0
        %2678 = vmatprep.subr.mxu0 0.0
        %2679 = vmatpush1.xpose.msra.mxu0 0.0
        %2680 = vmatprep.subr.mxu0 0.0
        %2681 = vmatpush1.xpose.msra.mxu0 0.0
        %2682 = vmatprep.subr.mxu0 0.0
        %2683 = vmatpush1.xpose.msra.mxu0 0.0
        %2684 = vmatprep.subr.mxu0 0.0
        %2685 = vmatpush1.xpose.msra.mxu0 0.0
        %2686 = vmatprep.subr.mxu0 0.0
        %2687 = vmatpush1.xpose.msra.mxu0 0.0
        %2688 = vmatprep.subr.mxu0 0.0
        %2689 = vmatpush1.xpose.msra.mxu0 0.0
        %2690 = vmatprep.subr.mxu0 0.0
        %2691 = vmatpush1.xpose.msra.mxu0 0.0
        %2692 = vmatprep.mubr.f32.mxu0 0.0
        %2693 = vmatmul.mubr.f32.gmra.mrb[0].mxu0 %v2623
        %v2694 = vpop.f32.mrb[0].mxu0
        %v2695 = vadd.f32 0.0, %v2694
        %v2696 = vpop.f32.mrb[0].mxu0
        %2697 = vdwg.mxu0
        %v2699 = vsel %vm281, %v2607, 0
        %2701 = vmatprep.subr.mxu0 0.0
        %2702 = vmatpush1.xpose.msra.mxu0 %v2699
        %2703 = vmatprep.subr.mxu0 0.0
        %2704 = vmatpush1.xpose.msra.mxu0 0.0
        %2705 = vmatprep.subr.mxu0 0.0
        %2706 = vmatpush1.xpose.msra.mxu0 0.0
        %2707 = vmatprep.subr.mxu0 0.0
        %2708 = vmatpush1.xpose.msra.mxu0 0.0
        %2709 = vmatprep.subr.mxu0 0.0
        %2710 = vmatpush1.xpose.msra.mxu0 0.0
        %2711 = vmatprep.subr.mxu0 0.0
        %2712 = vmatpush1.xpose.msra.mxu0 0.0
        %2713 = vmatprep.subr.mxu0 0.0
        %2714 = vmatpush1.xpose.msra.mxu0 0.0
        %2715 = vmatprep.subr.mxu0 0.0
        %2716 = vmatpush1.xpose.msra.mxu0 0.0
        %2717 = vmatprep.subr.mxu0 0.0
        %2718 = vmatpush1.xpose.msra.mxu0 0.0
        %2719 = vmatprep.subr.mxu0 0.0
        %2720 = vmatpush1.xpose.msra.mxu0 0.0
        %2721 = vmatprep.subr.mxu0 0.0
        %2722 = vmatpush1.xpose.msra.mxu0 0.0
        %2723 = vmatprep.subr.mxu0 0.0
        %2724 = vmatpush1.xpose.msra.mxu0 0.0
        %2725 = vmatprep.subr.mxu0 0.0
        %2726 = vmatpush1.xpose.msra.mxu0 0.0
        %2727 = vmatprep.subr.mxu0 0.0
        %2728 = vmatpush1.xpose.msra.mxu0 0.0
        %2729 = vmatprep.subr.mxu0 0.0
        %2730 = vmatpush1.xpose.msra.mxu0 0.0
        %2731 = vmatprep.subr.mxu0 0.0
        %2732 = vmatpush1.xpose.msra.mxu0 0.0
        %2733 = vmatprep.subr.mxu0 0.0
        %2734 = vmatpush1.xpose.msra.mxu0 0.0
        %2735 = vmatprep.subr.mxu0 0.0
        %2736 = vmatpush1.xpose.msra.mxu0 0.0
        %2737 = vmatprep.subr.mxu0 0.0
        %2738 = vmatpush1.xpose.msra.mxu0 0.0
        %2739 = vmatprep.subr.mxu0 0.0
        %2740 = vmatpush1.xpose.msra.mxu0 0.0
        %2741 = vmatprep.subr.mxu0 0.0
        %2742 = vmatpush1.xpose.msra.mxu0 0.0
        %2743 = vmatprep.subr.mxu0 0.0
        %2744 = vmatpush1.xpose.msra.mxu0 0.0
        %2745 = vmatprep.subr.mxu0 0.0
        %2746 = vmatpush1.xpose.msra.mxu0 0.0
        %2747 = vmatprep.subr.mxu0 0.0
        %2748 = vmatpush1.xpose.msra.mxu0 0.0
        %2749 = vmatprep.subr.mxu0 0.0
        %2750 = vmatpush1.xpose.msra.mxu0 0.0
        %2751 = vmatprep.subr.mxu0 0.0
        %2752 = vmatpush1.xpose.msra.mxu0 0.0
        %2753 = vmatprep.subr.mxu0 0.0
        %2754 = vmatpush1.xpose.msra.mxu0 0.0
        %2755 = vmatprep.subr.mxu0 0.0
        %2756 = vmatpush1.xpose.msra.mxu0 0.0
        %2757 = vmatprep.subr.mxu0 0.0
        %2758 = vmatpush1.xpose.msra.mxu0 0.0
        %2759 = vmatprep.subr.mxu0 0.0
        %2760 = vmatpush1.xpose.msra.mxu0 0.0
        %2761 = vmatprep.subr.mxu0 0.0
        %2762 = vmatpush1.xpose.msra.mxu0 0.0
        %2763 = vmatprep.subr.mxu0 0.0
        %2764 = vmatpush1.xpose.msra.mxu0 0.0
        %2765 = vmatprep.mubr.f32.mxu0 0.0
        %2766 = vmatmul.mubr.f32.gmra.mrb[0].mxu0 %v2623
        %v2767 = vpop.f32.mrb[0].mxu0
        %v2768 = vadd.f32 0.0, %v2767
        %v2769 = vpop.f32.mrb[0].mxu0
        %2770 = vdwg.mxu0
        %v2772 = vsel %vm281, %v2608, 0
        %2774 = vmatprep.subr.mxu0 0.0
        %2775 = vmatpush1.xpose.msra.mxu0 %v2772
        %2776 = vmatprep.subr.mxu0 0.0
        %2777 = vmatpush1.xpose.msra.mxu0 0.0
        %2778 = vmatprep.subr.mxu0 0.0
        %2779 = vmatpush1.xpose.msra.mxu0 0.0
        %2780 = vmatprep.subr.mxu0 0.0
        %2781 = vmatpush1.xpose.msra.mxu0 0.0
        %2782 = vmatprep.subr.mxu0 0.0
        %2783 = vmatpush1.xpose.msra.mxu0 0.0
        %2784 = vmatprep.subr.mxu0 0.0
        %2785 = vmatpush1.xpose.msra.mxu0 0.0
        %2786 = vmatprep.subr.mxu0 0.0
        %2787 = vmatpush1.xpose.msra.mxu0 0.0
        %2788 = vmatprep.subr.mxu0 0.0
        %2789 = vmatpush1.xpose.msra.mxu0 0.0
        %2790 = vmatprep.subr.mxu0 0.0
        %2791 = vmatpush1.xpose.msra.mxu0 0.0
        %2792 = vmatprep.subr.mxu0 0.0
        %2793 = vmatpush1.xpose.msra.mxu0 0.0
        %2794 = vmatprep.subr.mxu0 0.0
        %2795 = vmatpush1.xpose.msra.mxu0 0.0
        %2796 = vmatprep.subr.mxu0 0.0
        %2797 = vmatpush1.xpose.msra.mxu0 0.0
        %2798 = vmatprep.subr.mxu0 0.0
        %2799 = vmatpush1.xpose.msra.mxu0 0.0
        %2800 = vmatprep.subr.mxu0 0.0
        %2801 = vmatpush1.xpose.msra.mxu0 0.0
        %2802 = vmatprep.subr.mxu0 0.0
        %2803 = vmatpush1.xpose.msra.mxu0 0.0
        %2804 = vmatprep.subr.mxu0 0.0
        %2805 = vmatpush1.xpose.msra.mxu0 0.0
        %2806 = vmatprep.subr.mxu0 0.0
        %2807 = vmatpush1.xpose.msra.mxu0 0.0
        %2808 = vmatprep.subr.mxu0 0.0
        %2809 = vmatpush1.xpose.msra.mxu0 0.0
        %2810 = vmatprep.subr.mxu0 0.0
        %2811 = vmatpush1.xpose.msra.mxu0 0.0
        %2812 = vmatprep.subr.mxu0 0.0
        %2813 = vmatpush1.xpose.msra.mxu0 0.0
        %2814 = vmatprep.subr.mxu0 0.0
        %2815 = vmatpush1.xpose.msra.mxu0 0.0
        %2816 = vmatprep.subr.mxu0 0.0
        %2817 = vmatpush1.xpose.msra.mxu0 0.0
        %2818 = vmatprep.subr.mxu0 0.0
        %2819 = vmatpush1.xpose.msra.mxu0 0.0
        %2820 = vmatprep.subr.mxu0 0.0
        %2821 = vmatpush1.xpose.msra.mxu0 0.0
        %2822 = vmatprep.subr.mxu0 0.0
        %2823 = vmatpush1.xpose.msra.mxu0 0.0
        %2824 = vmatprep.subr.mxu0 0.0
        %2825 = vmatpush1.xpose.msra.mxu0 0.0
        %2826 = vmatprep.subr.mxu0 0.0
        %2827 = vmatpush1.xpose.msra.mxu0 0.0
        %2828 = vmatprep.subr.mxu0 0.0
        %2829 = vmatpush1.xpose.msra.mxu0 0.0
        %2830 = vmatprep.subr.mxu0 0.0
        %2831 = vmatpush1.xpose.msra.mxu0 0.0
        %2832 = vmatprep.subr.mxu0 0.0
        %2833 = vmatpush1.xpose.msra.mxu0 0.0
        %2834 = vmatprep.subr.mxu0 0.0
        %2835 = vmatpush1.xpose.msra.mxu0 0.0
        %2836 = vmatprep.subr.mxu0 0.0
        %2837 = vmatpush1.xpose.msra.mxu0 0.0
        %2838 = vmatprep.mubr.f32.mxu0 0.0
        %2839 = vmatmul.mubr.f32.gmra.mrb[0].mxu0 %v2623
        %v2840 = vpop.f32.mrb[0].mxu0
        %v2841 = vadd.f32 0.0, %v2840
        %v2842 = vpop.f32.mrb[0].mxu0
        %2843 = vdwg.mxu0
        %v2845 = vsel %vm281, %v2609, 0
        %2847 = vmatprep.subr.mxu0 0.0
        %2848 = vmatpush1.xpose.msra.mxu0 %v2845
        %2849 = vmatprep.subr.mxu0 0.0
        %2850 = vmatpush1.xpose.msra.mxu0 0.0
        %2851 = vmatprep.subr.mxu0 0.0
        %2852 = vmatpush1.xpose.msra.mxu0 0.0
        %2853 = vmatprep.subr.mxu0 0.0
        %2854 = vmatpush1.xpose.msra.mxu0 0.0
        %2855 = vmatprep.subr.mxu0 0.0
        %2856 = vmatpush1.xpose.msra.mxu0 0.0
        %2857 = vmatprep.subr.mxu0 0.0
        %2858 = vmatpush1.xpose.msra.mxu0 0.0
        %2859 = vmatprep.subr.mxu0 0.0
        %2860 = vmatpush1.xpose.msra.mxu0 0.0
        %2861 = vmatprep.subr.mxu0 0.0
        %2862 = vmatpush1.xpose.msra.mxu0 0.0
        %2863 = vmatprep.subr.mxu0 0.0
        %2864 = vmatpush1.xpose.msra.mxu0 0.0
        %2865 = vmatprep.subr.mxu0 0.0
        %2866 = vmatpush1.xpose.msra.mxu0 0.0
        %2867 = vmatprep.subr.mxu0 0.0
        %2868 = vmatpush1.xpose.msra.mxu0 0.0
        %2869 = vmatprep.subr.mxu0 0.0
        %2870 = vmatpush1.xpose.msra.mxu0 0.0
        %2871 = vmatprep.subr.mxu0 0.0
        %2872 = vmatpush1.xpose.msra.mxu0 0.0
        %2873 = vmatprep.subr.mxu0 0.0
        %2874 = vmatpush1.xpose.msra.mxu0 0.0
        %2875 = vmatprep.subr.mxu0 0.0
        %2876 = vmatpush1.xpose.msra.mxu0 0.0
        %2877 = vmatprep.subr.mxu0 0.0
        %2878 = vmatpush1.xpose.msra.mxu0 0.0
        %2879 = vmatprep.subr.mxu0 0.0
        %2880 = vmatpush1.xpose.msra.mxu0 0.0
        %2881 = vmatprep.subr.mxu0 0.0
        %2882 = vmatpush1.xpose.msra.mxu0 0.0
        %2883 = vmatprep.subr.mxu0 0.0
        %2884 = vmatpush1.xpose.msra.mxu0 0.0
        %2885 = vmatprep.subr.mxu0 0.0
        %2886 = vmatpush1.xpose.msra.mxu0 0.0
        %2887 = vmatprep.subr.mxu0 0.0
        %2888 = vmatpush1.xpose.msra.mxu0 0.0
        %2889 = vmatprep.subr.mxu0 0.0
        %2890 = vmatpush1.xpose.msra.mxu0 0.0
        %2891 = vmatprep.subr.mxu0 0.0
        %2892 = vmatpush1.xpose.msra.mxu0 0.0
        %2893 = vmatprep.subr.mxu0 0.0
        %2894 = vmatpush1.xpose.msra.mxu0 0.0
        %2895 = vmatprep.subr.mxu0 0.0
        %2896 = vmatpush1.xpose.msra.mxu0 0.0
        %2897 = vmatprep.subr.mxu0 0.0
        %2898 = vmatpush1.xpose.msra.mxu0 0.0
        %2899 = vmatprep.subr.mxu0 0.0
        %2900 = vmatpush1.xpose.msra.mxu0 0.0
        %2901 = vmatprep.subr.mxu0 0.0
        %2902 = vmatpush1.xpose.msra.mxu0 0.0
        %2903 = vmatprep.subr.mxu0 0.0
        %2904 = vmatpush1.xpose.msra.mxu0 0.0
        %2905 = vmatprep.subr.mxu0 0.0
        %2906 = vmatpush1.xpose.msra.mxu0 0.0
        %2907 = vmatprep.subr.mxu0 0.0
        %2908 = vmatpush1.xpose.msra.mxu0 0.0
        %2909 = vmatprep.subr.mxu0 0.0
        %2910 = vmatpush1.xpose.msra.mxu0 0.0
        %2911 = vmatprep.mubr.f32.mxu0 0.0
        %2912 = vmatmul.mubr.f32.gmra.mrb[0].mxu0 %v2623
        %v2913 = vpop.f32.mrb[0].mxu0
        %v2914 = vadd.f32 0.0, %v2913
        %v2915 = vpop.f32.mrb[0].mxu0
        %2916 = vdwg.mxu0
        %v2918 = vsel %vm281, %v2579, 0
        %v2921 = vsel %vm281, %v2580, 0
        %v2924 = vsel %vm281, %v2610, 0
        %2926 = vmatprep.subr.mxu0 0.0
        %2927 = vmatpush1.xpose.msra.mxu0 %v2924
        %2928 = vmatprep.subr.mxu0 0.0
        %2929 = vmatpush1.xpose.msra.mxu0 0.0
        %2930 = vmatprep.subr.mxu0 0.0
        %2931 = vmatpush1.xpose.msra.mxu0 0.0
        %2932 = vmatprep.subr.mxu0 0.0
        %2933 = vmatpush1.xpose.msra.mxu0 0.0
        %2934 = vmatprep.subr.mxu0 0.0
        %2935 = vmatpush1.xpose.msra.mxu0 0.0
        %2936 = vmatprep.subr.mxu0 0.0
        %2937 = vmatpush1.xpose.msra.mxu0 0.0
        %2938 = vmatprep.subr.mxu0 0.0
        %2939 = vmatpush1.xpose.msra.mxu0 0.0
        %2940 = vmatprep.subr.mxu0 0.0
        %2941 = vmatpush1.xpose.msra.mxu0 0.0
        %2942 = vmatprep.subr.mxu0 0.0
        %2943 = vmatpush1.xpose.msra.mxu0 0.0
        %2944 = vmatprep.subr.mxu0 0.0
        %2945 = vmatpush1.xpose.msra.mxu0 0.0
        %2946 = vmatprep.subr.mxu0 0.0
        %2947 = vmatpush1.xpose.msra.mxu0 0.0
        %2948 = vmatprep.subr.mxu0 0.0
        %2949 = vmatpush1.xpose.msra.mxu0 0.0
        %2950 = vmatprep.subr.mxu0 0.0
        %2951 = vmatpush1.xpose.msra.mxu0 0.0
        %2952 = vmatprep.subr.mxu0 0.0
        %2953 = vmatpush1.xpose.msra.mxu0 0.0
        %2954 = vmatprep.subr.mxu0 0.0
        %2955 = vmatpush1.xpose.msra.mxu0 0.0
        %2956 = vmatprep.subr.mxu0 0.0
        %2957 = vmatpush1.xpose.msra.mxu0 0.0
        %2958 = vmatprep.subr.mxu0 0.0
        %2959 = vmatpush1.xpose.msra.mxu0 0.0
        %2960 = vmatprep.subr.mxu0 0.0
        %2961 = vmatpush1.xpose.msra.mxu0 0.0
        %2962 = vmatprep.subr.mxu0 0.0
        %2963 = vmatpush1.xpose.msra.mxu0 0.0
        %2964 = vmatprep.subr.mxu0 0.0
        %2965 = vmatpush1.xpose.msra.mxu0 0.0
        %2966 = vmatprep.subr.mxu0 0.0
        %2967 = vmatpush1.xpose.msra.mxu0 0.0
        %2968 = vmatprep.subr.mxu0 0.0
        %2969 = vmatpush1.xpose.msra.mxu0 0.0
        %2970 = vmatprep.subr.mxu0 0.0
        %2971 = vmatpush1.xpose.msra.mxu0 0.0
        %2972 = vmatprep.subr.mxu0 0.0
        %2973 = vmatpush1.xpose.msra.mxu0 0.0
        %2974 = vmatprep.subr.mxu0 0.0
        %2975 = vmatpush1.xpose.msra.mxu0 0.0
        %2976 = vmatprep.subr.mxu0 0.0
        %2977 = vmatpush1.xpose.msra.mxu0 0.0
        %2978 = vmatprep.subr.mxu0 0.0
        %2979 = vmatpush1.xpose.msra.mxu0 0.0
        %2980 = vmatprep.subr.mxu0 0.0
        %2981 = vmatpush1.xpose.msra.mxu0 0.0
        %2982 = vmatprep.subr.mxu0 0.0
        %2983 = vmatpush1.xpose.msra.mxu0 0.0
        %2984 = vmatprep.subr.mxu0 0.0
        %2985 = vmatpush1.xpose.msra.mxu0 0.0
        %2986 = vmatprep.subr.mxu0 0.0
        %2987 = vmatpush1.xpose.msra.mxu0 0.0
        %2988 = vmatprep.subr.mxu0 0.0
        %2989 = vmatpush1.xpose.msra.mxu0 0.0
        %2990 = vmatprep.mubr.f32.mxu0 0.0
        %2991 = vmatmul.mubr.f32.gmra.mrb[0].mxu0 %v2918
        %v2992 = vpop.f32.mrb[0].mxu0
        %v2993 = vadd.f32 0.0, %v2992
        %v2994 = vpop.f32.mrb[0].mxu0
        %2995 = vmatprep.mubr.f32.mxu0 0.0
        %2996 = vmatmul.mubr.f32.gmra.mrb[0].mxu0 %v2921
        %v2997 = vpop.f32.mrb[0].mxu0
        %v2998 = vadd.f32 0.0, %v2997
        %v2999 = vpop.f32.mrb[0].mxu0
        %3000 = vmatprep.mubr.f32.mxu0 0.0
        %3001 = vmatmul.mubr.f32.gmra.mrb[0].mxu0 %v2623
        %v3002 = vpop.f32.mrb[0].mxu0
        %v3003 = vadd.f32 0.0, %v3002
        %v3004 = vpop.f32.mrb[0].mxu0
        %3005 = vdwg.mxu0
        %v3007 = vsel %vm281, %v2611, 0
        %3009 = vmatprep.subr.mxu0 0.0
        %3010 = vmatpush1.xpose.msra.mxu0 %v3007
        %3011 = vmatprep.subr.mxu0 0.0
        %3012 = vmatpush1.xpose.msra.mxu0 0.0
        %3013 = vmatprep.subr.mxu0 0.0
        %3014 = vmatpush1.xpose.msra.mxu0 0.0
        %3015 = vmatprep.subr.mxu0 0.0
        %3016 = vmatpush1.xpose.msra.mxu0 0.0
        %3017 = vmatprep.subr.mxu0 0.0
        %3018 = vmatpush1.xpose.msra.mxu0 0.0
        %3019 = vmatprep.subr.mxu0 0.0
        %3020 = vmatpush1.xpose.msra.mxu0 0.0
        %3021 = vmatprep.subr.mxu0 0.0
        %3022 = vmatpush1.xpose.msra.mxu0 0.0
        %3023 = vmatprep.subr.mxu0 0.0
        %3024 = vmatpush1.xpose.msra.mxu0 0.0
        %3025 = vmatprep.subr.mxu0 0.0
        %3026 = vmatpush1.xpose.msra.mxu0 0.0
        %3027 = vmatprep.subr.mxu0 0.0
        %3028 = vmatpush1.xpose.msra.mxu0 0.0
        %3029 = vmatprep.subr.mxu0 0.0
        %3030 = vmatpush1.xpose.msra.mxu0 0.0
        %3031 = vmatprep.subr.mxu0 0.0
        %3032 = vmatpush1.xpose.msra.mxu0 0.0
        %3033 = vmatprep.subr.mxu0 0.0
        %3034 = vmatpush1.xpose.msra.mxu0 0.0
        %3035 = vmatprep.subr.mxu0 0.0
        %3036 = vmatpush1.xpose.msra.mxu0 0.0
        %3037 = vmatprep.subr.mxu0 0.0
        %3038 = vmatpush1.xpose.msra.mxu0 0.0
        %3039 = vmatprep.subr.mxu0 0.0
        %3040 = vmatpush1.xpose.msra.mxu0 0.0
        %3041 = vmatprep.subr.mxu0 0.0
        %3042 = vmatpush1.xpose.msra.mxu0 0.0
        %3043 = vmatprep.subr.mxu0 0.0
        %3044 = vmatpush1.xpose.msra.mxu0 0.0
        %3045 = vmatprep.subr.mxu0 0.0
        %3046 = vmatpush1.xpose.msra.mxu0 0.0
        %3047 = vmatprep.subr.mxu0 0.0
        %3048 = vmatpush1.xpose.msra.mxu0 0.0
        %3049 = vmatprep.subr.mxu0 0.0
        %3050 = vmatpush1.xpose.msra.mxu0 0.0
        %3051 = vmatprep.subr.mxu0 0.0
        %3052 = vmatpush1.xpose.msra.mxu0 0.0
        %3053 = vmatprep.subr.mxu0 0.0
        %3054 = vmatpush1.xpose.msra.mxu0 0.0
        %3055 = vmatprep.subr.mxu0 0.0
        %3056 = vmatpush1.xpose.msra.mxu0 0.0
        %3057 = vmatprep.subr.mxu0 0.0
        %3058 = vmatpush1.xpose.msra.mxu0 0.0
        %3059 = vmatprep.subr.mxu0 0.0
        %3060 = vmatpush1.xpose.msra.mxu0 0.0
        %3061 = vmatprep.subr.mxu0 0.0
        %3062 = vmatpush1.xpose.msra.mxu0 0.0
        %3063 = vmatprep.subr.mxu0 0.0
        %3064 = vmatpush1.xpose.msra.mxu0 0.0
        %3065 = vmatprep.subr.mxu0 0.0
        %3066 = vmatpush1.xpose.msra.mxu0 0.0
        %3067 = vmatprep.subr.mxu0 0.0
        %3068 = vmatpush1.xpose.msra.mxu0 0.0
        %3069 = vmatprep.subr.mxu0 0.0
        %3070 = vmatpush1.xpose.msra.mxu0 0.0
        %3071 = vmatprep.subr.mxu0 0.0
        %3072 = vmatpush1.xpose.msra.mxu0 0.0
        %3073 = vmatprep.mubr.f32.mxu0 0.0
        %3074 = vmatmul.mubr.f32.gmra.mrb[0].mxu0 %v2918
        %v3075 = vpop.f32.mrb[0].mxu0
        %v3076 = vadd.f32 0.0, %v3075
        %v3077 = vpop.f32.mrb[0].mxu0
        %3078 = vmatprep.mubr.f32.mxu0 0.0
        %3079 = vmatmul.mubr.f32.gmra.mrb[0].mxu0 %v2921
        %v3080 = vpop.f32.mrb[0].mxu0
        %v3081 = vadd.f32 0.0, %v3080
        %v3082 = vpop.f32.mrb[0].mxu0
        %3083 = vmatprep.mubr.f32.mxu0 0.0
        %3084 = vmatmul.mubr.f32.gmra.mrb[0].mxu0 %v2623
        %v3085 = vpop.f32.mrb[0].mxu0
        %v3086 = vadd.f32 0.0, %v3085
        %v3087 = vpop.f32.mrb[0].mxu0
        %3088 = vdwg.mxu0
        %v3090 = vsel %vm281, %v2612, 0
        %3092 = vmatprep.subr.mxu0 0.0
        %3093 = vmatpush1.xpose.msra.mxu0 %v3090
        %3094 = vmatprep.subr.mxu0 0.0
        %3095 = vmatpush1.xpose.msra.mxu0 0.0
        %3096 = vmatprep.subr.mxu0 0.0
        %3097 = vmatpush1.xpose.msra.mxu0 0.0
        %3098 = vmatprep.subr.mxu0 0.0
        %3099 = vmatpush1.xpose.msra.mxu0 0.0
        %3100 = vmatprep.subr.mxu0 0.0
        %3101 = vmatpush1.xpose.msra.mxu0 0.0
        %3102 = vmatprep.subr.mxu0 0.0
        %3103 = vmatpush1.xpose.msra.mxu0 0.0
        %3104 = vmatprep.subr.mxu0 0.0
        %3105 = vmatpush1.xpose.msra.mxu0 0.0
        %3106 = vmatprep.subr.mxu0 0.0
        %3107 = vmatpush1.xpose.msra.mxu0 0.0
        %3108 = vmatprep.subr.mxu0 0.0
        %3109 = vmatpush1.xpose.msra.mxu0 0.0
        %3110 = vmatprep.subr.mxu0 0.0
        %3111 = vmatpush1.xpose.msra.mxu0 0.0
        %3112 = vmatprep.subr.mxu0 0.0
        %3113 = vmatpush1.xpose.msra.mxu0 0.0
        %3114 = vmatprep.subr.mxu0 0.0
        %3115 = vmatpush1.xpose.msra.mxu0 0.0
        %3116 = vmatprep.subr.mxu0 0.0
        %3117 = vmatpush1.xpose.msra.mxu0 0.0
        %3118 = vmatprep.subr.mxu0 0.0
        %3119 = vmatpush1.xpose.msra.mxu0 0.0
        %3120 = vmatprep.subr.mxu0 0.0
        %3121 = vmatpush1.xpose.msra.mxu0 0.0
        %3122 = vmatprep.subr.mxu0 0.0
        %3123 = vmatpush1.xpose.msra.mxu0 0.0
        %3124 = vmatprep.subr.mxu0 0.0
        %3125 = vmatpush1.xpose.msra.mxu0 0.0
        %3126 = vmatprep.subr.mxu0 0.0
        %3127 = vmatpush1.xpose.msra.mxu0 0.0
        %3128 = vmatprep.subr.mxu0 0.0
        %3129 = vmatpush1.xpose.msra.mxu0 0.0
        %3130 = vmatprep.subr.mxu0 0.0
        %3131 = vmatpush1.xpose.msra.mxu0 0.0
        %3132 = vmatprep.subr.mxu0 0.0
        %3133 = vmatpush1.xpose.msra.mxu0 0.0
        %3134 = vmatprep.subr.mxu0 0.0
        %3135 = vmatpush1.xpose.msra.mxu0 0.0
        %3136 = vmatprep.subr.mxu0 0.0
        %3137 = vmatpush1.xpose.msra.mxu0 0.0
        %3138 = vmatprep.subr.mxu0 0.0
        %3139 = vmatpush1.xpose.msra.mxu0 0.0
        %3140 = vmatprep.subr.mxu0 0.0
        %3141 = vmatpush1.xpose.msra.mxu0 0.0
        %3142 = vmatprep.subr.mxu0 0.0
        %3143 = vmatpush1.xpose.msra.mxu0 0.0
        %3144 = vmatprep.subr.mxu0 0.0
        %3145 = vmatpush1.xpose.msra.mxu0 0.0
        %3146 = vmatprep.subr.mxu0 0.0
        %3147 = vmatpush1.xpose.msra.mxu0 0.0
        %3148 = vmatprep.subr.mxu0 0.0
        %3149 = vmatpush1.xpose.msra.mxu0 0.0
        %3150 = vmatprep.subr.mxu0 0.0
        %3151 = vmatpush1.xpose.msra.mxu0 0.0
        %3152 = vmatprep.subr.mxu0 0.0
        %3153 = vmatpush1.xpose.msra.mxu0 0.0
        %3154 = vmatprep.subr.mxu0 0.0
        %3155 = vmatpush1.xpose.msra.mxu0 0.0
        %3156 = vmatprep.mubr.f32.mxu0 0.0
        %3157 = vmatmul.mubr.f32.gmra.mrb[0].mxu0 %v2918
        %v3158 = vpop.f32.mrb[0].mxu0
        %v3159 = vadd.f32 0.0, %v3158
        %v3160 = vpop.f32.mrb[0].mxu0
        %3161 = vmatprep.mubr.f32.mxu0 0.0
        %3162 = vmatmul.mubr.f32.gmra.mrb[0].mxu0 %v2921
        %v3163 = vpop.f32.mrb[0].mxu0
        %v3164 = vadd.f32 0.0, %v3163
        %v3165 = vpop.f32.mrb[0].mxu0
        %3166 = vmatprep.mubr.f32.mxu0 0.0
        %3167 = vmatmul.mubr.f32.gmra.mrb[0].mxu0 %v2623
        %v3168 = vpop.f32.mrb[0].mxu0
        %v3169 = vadd.f32 0.0, %v3168
        %v3170 = vpop.f32.mrb[0].mxu0
        %3171 = vdwg.mxu0
        %v3173 = vsel %vm281, %v2613, 0
        %3175 = vmatprep.subr.mxu0 0.0
        %3176 = vmatpush1.xpose.msra.mxu0 %v3173
        %3177 = vmatprep.subr.mxu0 0.0
        %3178 = vmatpush1.xpose.msra.mxu0 0.0
        %3179 = vmatprep.subr.mxu0 0.0
        %3180 = vmatpush1.xpose.msra.mxu0 0.0
        %3181 = vmatprep.subr.mxu0 0.0
        %3182 = vmatpush1.xpose.msra.mxu0 0.0
        %3183 = vmatprep.subr.mxu0 0.0
        %3184 = vmatpush1.xpose.msra.mxu0 0.0
        %3185 = vmatprep.subr.mxu0 0.0
        %3186 = vmatpush1.xpose.msra.mxu0 0.0
        %3187 = vmatprep.subr.mxu0 0.0
        %3188 = vmatpush1.xpose.msra.mxu0 0.0
        %3189 = vmatprep.subr.mxu0 0.0
        %3190 = vmatpush1.xpose.msra.mxu0 0.0
        %3191 = vmatprep.subr.mxu0 0.0
        %3192 = vmatpush1.xpose.msra.mxu0 0.0
        %3193 = vmatprep.subr.mxu0 0.0
        %3194 = vmatpush1.xpose.msra.mxu0 0.0
        %3195 = vmatprep.subr.mxu0 0.0
        %3196 = vmatpush1.xpose.msra.mxu0 0.0
        %3197 = vmatprep.subr.mxu0 0.0
        %3198 = vmatpush1.xpose.msra.mxu0 0.0
        %3199 = vmatprep.subr.mxu0 0.0
        %3200 = vmatpush1.xpose.msra.mxu0 0.0
        %3201 = vmatprep.subr.mxu0 0.0
        %3202 = vmatpush1.xpose.msra.mxu0 0.0
        %3203 = vmatprep.subr.mxu0 0.0
        %3204 = vmatpush1.xpose.msra.mxu0 0.0
        %3205 = vmatprep.subr.mxu0 0.0
        %3206 = vmatpush1.xpose.msra.mxu0 0.0
        %3207 = vmatprep.subr.mxu0 0.0
        %3208 = vmatpush1.xpose.msra.mxu0 0.0
        %3209 = vmatprep.subr.mxu0 0.0
        %3210 = vmatpush1.xpose.msra.mxu0 0.0
        %3211 = vmatprep.subr.mxu0 0.0
        %3212 = vmatpush1.xpose.msra.mxu0 0.0
        %3213 = vmatprep.subr.mxu0 0.0
        %3214 = vmatpush1.xpose.msra.mxu0 0.0
        %3215 = vmatprep.subr.mxu0 0.0
        %3216 = vmatpush1.xpose.msra.mxu0 0.0
        %3217 = vmatprep.subr.mxu0 0.0
        %3218 = vmatpush1.xpose.msra.mxu0 0.0
        %3219 = vmatprep.subr.mxu0 0.0
        %3220 = vmatpush1.xpose.msra.mxu0 0.0
        %3221 = vmatprep.subr.mxu0 0.0
        %3222 = vmatpush1.xpose.msra.mxu0 0.0
        %3223 = vmatprep.subr.mxu0 0.0
        %3224 = vmatpush1.xpose.msra.mxu0 0.0
        %3225 = vmatprep.subr.mxu0 0.0
        %3226 = vmatpush1.xpose.msra.mxu0 0.0
        %3227 = vmatprep.subr.mxu0 0.0
        %3228 = vmatpush1.xpose.msra.mxu0 0.0
        %3229 = vmatprep.subr.mxu0 0.0
        %3230 = vmatpush1.xpose.msra.mxu0 0.0
        %3231 = vmatprep.subr.mxu0 0.0
        %3232 = vmatpush1.xpose.msra.mxu0 0.0
        %3233 = vmatprep.subr.mxu0 0.0
        %3234 = vmatpush1.xpose.msra.mxu0 0.0
        %3235 = vmatprep.subr.mxu0 0.0
        %3236 = vmatpush1.xpose.msra.mxu0 0.0
        %3237 = vmatprep.subr.mxu0 0.0
        %3238 = vmatpush1.xpose.msra.mxu0 0.0
        %3239 = vmatprep.mubr.f32.mxu0 0.0
        %3240 = vmatmul.mubr.f32.gmra.mrb[0].mxu0 %v2918
        %v3241 = vpop.f32.mrb[0].mxu0
        %v3242 = vadd.f32 0.0, %v3241
        %v3243 = vpop.f32.mrb[0].mxu0
        %3244 = vmatprep.mubr.f32.mxu0 0.0
        %3245 = vmatmul.mubr.f32.gmra.mrb[0].mxu0 %v2921
        %v3246 = vpop.f32.mrb[0].mxu0
        %v3247 = vadd.f32 0.0, %v3246
        %v3248 = vpop.f32.mrb[0].mxu0
        %3249 = vmatprep.mubr.f32.mxu0 0.0
        %3250 = vmatmul.mubr.f32.gmra.mrb[0].mxu0 %v2623
        %v3251 = vpop.f32.mrb[0].mxu0
        %v3252 = vadd.f32 0.0, %v3251
        %v3253 = vpop.f32.mrb[0].mxu0
        %3254 = vdwg.mxu0
        %v3256 = vsel %vm281, %v2614, 0
        %3258 = vmatprep.subr.mxu0 0.0
        %3259 = vmatpush1.xpose.msra.mxu0 %v3256
        %3260 = vmatprep.subr.mxu0 0.0
        %3261 = vmatpush1.xpose.msra.mxu0 0.0
        %3262 = vmatprep.subr.mxu0 0.0
        %3263 = vmatpush1.xpose.msra.mxu0 0.0
        %3264 = vmatprep.subr.mxu0 0.0
        %3265 = vmatpush1.xpose.msra.mxu0 0.0
        %3266 = vmatprep.subr.mxu0 0.0
        %3267 = vmatpush1.xpose.msra.mxu0 0.0
        %3268 = vmatprep.subr.mxu0 0.0
        %3269 = vmatpush1.xpose.msra.mxu0 0.0
        %3270 = vmatprep.subr.mxu0 0.0
        %3271 = vmatpush1.xpose.msra.mxu0 0.0
        %3272 = vmatprep.subr.mxu0 0.0
        %3273 = vmatpush1.xpose.msra.mxu0 0.0
        %3274 = vmatprep.subr.mxu0 0.0
        %3275 = vmatpush1.xpose.msra.mxu0 0.0
        %3276 = vmatprep.subr.mxu0 0.0
        %3277 = vmatpush1.xpose.msra.mxu0 0.0
        %3278 = vmatprep.subr.mxu0 0.0
        %3279 = vmatpush1.xpose.msra.mxu0 0.0
        %3280 = vmatprep.subr.mxu0 0.0
        %3281 = vmatpush1.xpose.msra.mxu0 0.0
        %3282 = vmatprep.subr.mxu0 0.0
        %3283 = vmatpush1.xpose.msra.mxu0 0.0
        %3284 = vmatprep.subr.mxu0 0.0
        %3285 = vmatpush1.xpose.msra.mxu0 0.0
        %3286 = vmatprep.subr.mxu0 0.0
        %3287 = vmatpush1.xpose.msra.mxu0 0.0
        %3288 = vmatprep.subr.mxu0 0.0
        %3289 = vmatpush1.xpose.msra.mxu0 0.0
        %3290 = vmatprep.subr.mxu0 0.0
        %3291 = vmatpush1.xpose.msra.mxu0 0.0
        %3292 = vmatprep.subr.mxu0 0.0
        %3293 = vmatpush1.xpose.msra.mxu0 0.0
        %3294 = vmatprep.subr.mxu0 0.0
        %3295 = vmatpush1.xpose.msra.mxu0 0.0
        %3296 = vmatprep.subr.mxu0 0.0
        %3297 = vmatpush1.xpose.msra.mxu0 0.0
        %3298 = vmatprep.subr.mxu0 0.0
        %3299 = vmatpush1.xpose.msra.mxu0 0.0
        %3300 = vmatprep.subr.mxu0 0.0
        %3301 = vmatpush1.xpose.msra.mxu0 0.0
        %3302 = vmatprep.subr.mxu0 0.0
        %3303 = vmatpush1.xpose.msra.mxu0 0.0
        %3304 = vmatprep.subr.mxu0 0.0
        %3305 = vmatpush1.xpose.msra.mxu0 0.0
        %3306 = vmatprep.subr.mxu0 0.0
        %3307 = vmatpush1.xpose.msra.mxu0 0.0
        %3308 = vmatprep.subr.mxu0 0.0
        %3309 = vmatpush1.xpose.msra.mxu0 0.0
        %3310 = vmatprep.subr.mxu0 0.0
        %3311 = vmatpush1.xpose.msra.mxu0 0.0
        %3312 = vmatprep.subr.mxu0 0.0
        %3313 = vmatpush1.xpose.msra.mxu0 0.0
        %3314 = vmatprep.subr.mxu0 0.0
        %3315 = vmatpush1.xpose.msra.mxu0 0.0
        %3316 = vmatprep.subr.mxu0 0.0
        %3317 = vmatpush1.xpose.msra.mxu0 0.0
        %3318 = vmatprep.subr.mxu0 0.0
        %3319 = vmatpush1.xpose.msra.mxu0 0.0
        %3320 = vmatprep.subr.mxu0 0.0
        %3321 = vmatpush1.xpose.msra.mxu0 0.0
        %3322 = vmatprep.mubr.f32.mxu0 0.0
        %3323 = vmatmul.mubr.f32.gmra.mrb[0].mxu0 %v2918
        %v3324 = vpop.f32.mrb[0].mxu0
        %v3325 = vadd.f32 0.0, %v3324
        %v3326 = vpop.f32.mrb[0].mxu0
        %3327 = vmatprep.mubr.f32.mxu0 0.0
        %3328 = vmatmul.mubr.f32.gmra.mrb[0].mxu0 %v2921
        %v3329 = vpop.f32.mrb[0].mxu0
        %v3330 = vadd.f32 0.0, %v3329
        %v3331 = vpop.f32.mrb[0].mxu0
        %3332 = vmatprep.mubr.f32.mxu0 0.0
        %3333 = vmatmul.mubr.f32.gmra.mrb[0].mxu0 %v2623
        %v3334 = vpop.f32.mrb[0].mxu0
        %v3335 = vadd.f32 0.0, %v3334
        %v3336 = vpop.f32.mrb[0].mxu0
        %3337 = vdwg.mxu0
        %v3339 = vsel %vm281, %v2615, 0
        %3341 = vmatprep.subr.mxu0 0.0
        %3342 = vmatpush1.xpose.msra.mxu0 %v3339
        %3343 = vmatprep.subr.mxu0 0.0
        %3344 = vmatpush1.xpose.msra.mxu0 0.0
        %3345 = vmatprep.subr.mxu0 0.0
        %3346 = vmatpush1.xpose.msra.mxu0 0.0
        %3347 = vmatprep.subr.mxu0 0.0
        %3348 = vmatpush1.xpose.msra.mxu0 0.0
        %3349 = vmatprep.subr.mxu0 0.0
        %3350 = vmatpush1.xpose.msra.mxu0 0.0
        %3351 = vmatprep.subr.mxu0 0.0
        %3352 = vmatpush1.xpose.msra.mxu0 0.0
        %3353 = vmatprep.subr.mxu0 0.0
        %3354 = vmatpush1.xpose.msra.mxu0 0.0
        %3355 = vmatprep.subr.mxu0 0.0
        %3356 = vmatpush1.xpose.msra.mxu0 0.0
        %3357 = vmatprep.subr.mxu0 0.0
        %3358 = vmatpush1.xpose.msra.mxu0 0.0
        %3359 = vmatprep.subr.mxu0 0.0
        %3360 = vmatpush1.xpose.msra.mxu0 0.0
        %3361 = vmatprep.subr.mxu0 0.0
        %3362 = vmatpush1.xpose.msra.mxu0 0.0
        %3363 = vmatprep.subr.mxu0 0.0
        %3364 = vmatpush1.xpose.msra.mxu0 0.0
        %3365 = vmatprep.subr.mxu0 0.0
        %3366 = vmatpush1.xpose.msra.mxu0 0.0
        %3367 = vmatprep.subr.mxu0 0.0
        %3368 = vmatpush1.xpose.msra.mxu0 0.0
        %3369 = vmatprep.subr.mxu0 0.0
        %3370 = vmatpush1.xpose.msra.mxu0 0.0
        %3371 = vmatprep.subr.mxu0 0.0
        %3372 = vmatpush1.xpose.msra.mxu0 0.0
        %3373 = vmatprep.subr.mxu0 0.0
        %3374 = vmatpush1.xpose.msra.mxu0 0.0
        %3375 = vmatprep.subr.mxu0 0.0
        %3376 = vmatpush1.xpose.msra.mxu0 0.0
        %3377 = vmatprep.subr.mxu0 0.0
        %3378 = vmatpush1.xpose.msra.mxu0 0.0
        %3379 = vmatprep.subr.mxu0 0.0
        %3380 = vmatpush1.xpose.msra.mxu0 0.0
        %3381 = vmatprep.subr.mxu0 0.0
        %3382 = vmatpush1.xpose.msra.mxu0 0.0
        %3383 = vmatprep.subr.mxu0 0.0
        %3384 = vmatpush1.xpose.msra.mxu0 0.0
        %3385 = vmatprep.subr.mxu0 0.0
        %3386 = vmatpush1.xpose.msra.mxu0 0.0
        %3387 = vmatprep.subr.mxu0 0.0
        %3388 = vmatpush1.xpose.msra.mxu0 0.0
        %3389 = vmatprep.subr.mxu0 0.0
        %3390 = vmatpush1.xpose.msra.mxu0 0.0
        %3391 = vmatprep.subr.mxu0 0.0
        %3392 = vmatpush1.xpose.msra.mxu0 0.0
        %3393 = vmatprep.subr.mxu0 0.0
        %3394 = vmatpush1.xpose.msra.mxu0 0.0
        %3395 = vmatprep.subr.mxu0 0.0
        %3396 = vmatpush1.xpose.msra.mxu0 0.0
        %3397 = vmatprep.subr.mxu0 0.0
        %3398 = vmatpush1.xpose.msra.mxu0 0.0
        %3399 = vmatprep.subr.mxu0 0.0
        %3400 = vmatpush1.xpose.msra.mxu0 0.0
        %3401 = vmatprep.subr.mxu0 0.0
        %3402 = vmatpush1.xpose.msra.mxu0 0.0
        %3403 = vmatprep.subr.mxu0 0.0
        %3404 = vmatpush1.xpose.msra.mxu0 0.0
        %3405 = vmatprep.mubr.f32.mxu0 0.0
        %3406 = vmatmul.mubr.f32.gmra.mrb[0].mxu0 %v2918
        %v3407 = vpop.f32.mrb[0].mxu0
        %v3408 = vadd.f32 0.0, %v3407
        %v3409 = vpop.f32.mrb[0].mxu0
        %3410 = vmatprep.mubr.f32.mxu0 0.0
        %3411 = vmatmul.mubr.f32.gmra.mrb[0].mxu0 %v2921
        %v3412 = vpop.f32.mrb[0].mxu0
        %v3413 = vadd.f32 0.0, %v3412
        %v3414 = vpop.f32.mrb[0].mxu0
        %3415 = vmatprep.mubr.f32.mxu0 0.0
        %3416 = vmatmul.mubr.f32.gmra.mrb[0].mxu0 %v2623
        %v3417 = vpop.f32.mrb[0].mxu0
        %v3418 = vadd.f32 0.0, %v3417
        %v3419 = vpop.f32.mrb[0].mxu0
        %3420 = vdwg.mxu0
        %v3422 = vsel %vm281, %v2616, 0
        %3424 = vmatprep.subr.mxu0 0.0
        %3425 = vmatpush1.xpose.msra.mxu0 %v3422
        %3426 = vmatprep.subr.mxu0 0.0
        %3427 = vmatpush1.xpose.msra.mxu0 0.0
        %3428 = vmatprep.subr.mxu0 0.0
        %3429 = vmatpush1.xpose.msra.mxu0 0.0
        %3430 = vmatprep.subr.mxu0 0.0
        %3431 = vmatpush1.xpose.msra.mxu0 0.0
        %3432 = vmatprep.subr.mxu0 0.0
        %3433 = vmatpush1.xpose.msra.mxu0 0.0
        %3434 = vmatprep.subr.mxu0 0.0
        %3435 = vmatpush1.xpose.msra.mxu0 0.0
        %3436 = vmatprep.subr.mxu0 0.0
        %3437 = vmatpush1.xpose.msra.mxu0 0.0
        %3438 = vmatprep.subr.mxu0 0.0
        %3439 = vmatpush1.xpose.msra.mxu0 0.0
        %3440 = vmatprep.subr.mxu0 0.0
        %3441 = vmatpush1.xpose.msra.mxu0 0.0
        %3442 = vmatprep.subr.mxu0 0.0
        %3443 = vmatpush1.xpose.msra.mxu0 0.0
        %3444 = vmatprep.subr.mxu0 0.0
        %3445 = vmatpush1.xpose.msra.mxu0 0.0
        %3446 = vmatprep.subr.mxu0 0.0
        %3447 = vmatpush1.xpose.msra.mxu0 0.0
        %3448 = vmatprep.subr.mxu0 0.0
        %3449 = vmatpush1.xpose.msra.mxu0 0.0
        %3450 = vmatprep.subr.mxu0 0.0
        %3451 = vmatpush1.xpose.msra.mxu0 0.0
        %3452 = vmatprep.subr.mxu0 0.0
        %3453 = vmatpush1.xpose.msra.mxu0 0.0
        %3454 = vmatprep.subr.mxu0 0.0
        %3455 = vmatpush1.xpose.msra.mxu0 0.0
        %3456 = vmatprep.subr.mxu0 0.0
        %3457 = vmatpush1.xpose.msra.mxu0 0.0
        %3458 = vmatprep.subr.mxu0 0.0
        %3459 = vmatpush1.xpose.msra.mxu0 0.0
        %3460 = vmatprep.subr.mxu0 0.0
        %3461 = vmatpush1.xpose.msra.mxu0 0.0
        %3462 = vmatprep.subr.mxu0 0.0
        %3463 = vmatpush1.xpose.msra.mxu0 0.0
        %3464 = vmatprep.subr.mxu0 0.0
        %3465 = vmatpush1.xpose.msra.mxu0 0.0
        %3466 = vmatprep.subr.mxu0 0.0
        %3467 = vmatpush1.xpose.msra.mxu0 0.0
        %3468 = vmatprep.subr.mxu0 0.0
        %3469 = vmatpush1.xpose.msra.mxu0 0.0
        %3470 = vmatprep.subr.mxu0 0.0
        %3471 = vmatpush1.xpose.msra.mxu0 0.0
        %3472 = vmatprep.subr.mxu0 0.0
        %3473 = vmatpush1.xpose.msra.mxu0 0.0
        %3474 = vmatprep.subr.mxu0 0.0
        %3475 = vmatpush1.xpose.msra.mxu0 0.0
        %3476 = vmatprep.subr.mxu0 0.0
        %3477 = vmatpush1.xpose.msra.mxu0 0.0
        %3478 = vmatprep.subr.mxu0 0.0
        %3479 = vmatpush1.xpose.msra.mxu0 0.0
        %3480 = vmatprep.subr.mxu0 0.0
        %3481 = vmatpush1.xpose.msra.mxu0 0.0
        %3482 = vmatprep.subr.mxu0 0.0
        %3483 = vmatpush1.xpose.msra.mxu0 0.0
        %3484 = vmatprep.subr.mxu0 0.0
        %3485 = vmatpush1.xpose.msra.mxu0 0.0
        %3486 = vmatprep.subr.mxu0 0.0
        %3487 = vmatpush1.xpose.msra.mxu0 0.0
        %3488 = vmatprep.mubr.f32.mxu0 0.0
        %3489 = vmatmul.mubr.f32.gmra.mrb[0].mxu0 %v2918
        %v3490 = vpop.f32.mrb[0].mxu0
        %v3491 = vadd.f32 0.0, %v3490
        %v3492 = vpop.f32.mrb[0].mxu0
        %3493 = vmatprep.mubr.f32.mxu0 0.0
        %3494 = vmatmul.mubr.f32.gmra.mrb[0].mxu0 %v2921
        %v3495 = vpop.f32.mrb[0].mxu0
        %v3496 = vadd.f32 0.0, %v3495
        %v3497 = vpop.f32.mrb[0].mxu0
        %3498 = vmatprep.mubr.f32.mxu0 0.0
        %3499 = vmatmul.mubr.f32.gmra.mrb[0].mxu0 %v2623
        %v3500 = vpop.f32.mrb[0].mxu0
        %v3501 = vadd.f32 0.0, %v3500
        %v3502 = vpop.f32.mrb[0].mxu0
        %3503 = vdwg.mxu0
        %v3505 = vsel %vm281, %v2617, 0
        %3507 = vmatprep.subr.mxu0 0.0
        %3508 = vmatpush1.xpose.msra.mxu0 %v3505
        %3509 = vmatprep.subr.mxu0 0.0
        %3510 = vmatpush1.xpose.msra.mxu0 0.0
        %3511 = vmatprep.subr.mxu0 0.0
        %3512 = vmatpush1.xpose.msra.mxu0 0.0
        %3513 = vmatprep.subr.mxu0 0.0
        %3514 = vmatpush1.xpose.msra.mxu0 0.0
        %3515 = vmatprep.subr.mxu0 0.0
        %3516 = vmatpush1.xpose.msra.mxu0 0.0
        %3517 = vmatprep.subr.mxu0 0.0
        %3518 = vmatpush1.xpose.msra.mxu0 0.0
        %3519 = vmatprep.subr.mxu0 0.0
        %3520 = vmatpush1.xpose.msra.mxu0 0.0
        %3521 = vmatprep.subr.mxu0 0.0
        %3522 = vmatpush1.xpose.msra.mxu0 0.0
        %3523 = vmatprep.subr.mxu0 0.0
        %3524 = vmatpush1.xpose.msra.mxu0 0.0
        %3525 = vmatprep.subr.mxu0 0.0
        %3526 = vmatpush1.xpose.msra.mxu0 0.0
        %3527 = vmatprep.subr.mxu0 0.0
        %3528 = vmatpush1.xpose.msra.mxu0 0.0
        %3529 = vmatprep.subr.mxu0 0.0
        %3530 = vmatpush1.xpose.msra.mxu0 0.0
        %3531 = vmatprep.subr.mxu0 0.0
        %3532 = vmatpush1.xpose.msra.mxu0 0.0
        %3533 = vmatprep.subr.mxu0 0.0
        %3534 = vmatpush1.xpose.msra.mxu0 0.0
        %3535 = vmatprep.subr.mxu0 0.0
        %3536 = vmatpush1.xpose.msra.mxu0 0.0
        %3537 = vmatprep.subr.mxu0 0.0
        %3538 = vmatpush1.xpose.msra.mxu0 0.0
        %3539 = vmatprep.subr.mxu0 0.0
        %3540 = vmatpush1.xpose.msra.mxu0 0.0
        %3541 = vmatprep.subr.mxu0 0.0
        %3542 = vmatpush1.xpose.msra.mxu0 0.0
        %3543 = vmatprep.subr.mxu0 0.0
        %3544 = vmatpush1.xpose.msra.mxu0 0.0
        %3545 = vmatprep.subr.mxu0 0.0
        %3546 = vmatpush1.xpose.msra.mxu0 0.0
        %3547 = vmatprep.subr.mxu0 0.0
        %3548 = vmatpush1.xpose.msra.mxu0 0.0
        %3549 = vmatprep.subr.mxu0 0.0
        %3550 = vmatpush1.xpose.msra.mxu0 0.0
        %3551 = vmatprep.subr.mxu0 0.0
        %3552 = vmatpush1.xpose.msra.mxu0 0.0
        %3553 = vmatprep.subr.mxu0 0.0
        %3554 = vmatpush1.xpose.msra.mxu0 0.0
        %3555 = vmatprep.subr.mxu0 0.0
        %3556 = vmatpush1.xpose.msra.mxu0 0.0
        %3557 = vmatprep.subr.mxu0 0.0
        %3558 = vmatpush1.xpose.msra.mxu0 0.0
        %3559 = vmatprep.subr.mxu0 0.0
        %3560 = vmatpush1.xpose.msra.mxu0 0.0
        %3561 = vmatprep.subr.mxu0 0.0
        %3562 = vmatpush1.xpose.msra.mxu0 0.0
        %3563 = vmatprep.subr.mxu0 0.0
        %3564 = vmatpush1.xpose.msra.mxu0 0.0
        %3565 = vmatprep.subr.mxu0 0.0
        %3566 = vmatpush1.xpose.msra.mxu0 0.0
        %3567 = vmatprep.subr.mxu0 0.0
        %3568 = vmatpush1.xpose.msra.mxu0 0.0
        %3569 = vmatprep.subr.mxu0 0.0
        %3570 = vmatpush1.xpose.msra.mxu0 0.0
        %3571 = vmatprep.mubr.f32.mxu0 0.0
        %3572 = vmatmul.mubr.f32.gmra.mrb[0].mxu0 %v2918
        %v3573 = vpop.f32.mrb[0].mxu0
        %v3574 = vadd.f32 0.0, %v3573
        %v3575 = vpop.f32.mrb[0].mxu0
        %3576 = vmatprep.mubr.f32.mxu0 0.0
        %3577 = vmatmul.mubr.f32.gmra.mrb[0].mxu0 %v2921
        %v3578 = vpop.f32.mrb[0].mxu0
        %v3579 = vadd.f32 0.0, %v3578
        %v3580 = vpop.f32.mrb[0].mxu0
        %3581 = vmatprep.mubr.f32.mxu0 0.0
        %3582 = vmatmul.mubr.f32.gmra.mrb[0].mxu0 %v2623
        %v3583 = vpop.f32.mrb[0].mxu0
        %v3584 = vadd.f32 0.0, %v3583
        %v3585 = vpop.f32.mrb[0].mxu0
        %3586 = vdwg.mxu0
        %v3588 = vsel %vm1327, %v2695, 0
        %v3591 = vsel %vm1327, %v2993, 0
        %v3594 = vsel %vm1327, %v2998, 0
        %v3597 = vsel %vm1327, %v3003, 0
        %3599 = vmatprep.subr.mxu0 0.0
        %3600 = vmatpush1.xpose.msra.mxu0 %v3591
        %3601 = vmatprep.subr.mxu0 0.0
        %3602 = vmatpush1.xpose.msra.mxu0 %v3594
        %3603 = vmatprep.subr.mxu0 0.0
        %3604 = vmatpush1.xpose.msra.mxu0 %v3597
        %3605 = vmatprep.subr.mxu0 0.0
        %3606 = vmatpush1.xpose.msra.mxu0 0.0
        %3607 = vmatprep.subr.mxu0 0.0
        %3608 = vmatpush1.xpose.msra.mxu0 0.0
        %3609 = vmatprep.subr.mxu0 0.0
        %3610 = vmatpush1.xpose.msra.mxu0 0.0
        %3611 = vmatprep.subr.mxu0 0.0
        %3612 = vmatpush1.xpose.msra.mxu0 0.0
        %3613 = vmatprep.subr.mxu0 0.0
        %3614 = vmatpush1.xpose.msra.mxu0 0.0
        %3615 = vmatprep.subr.mxu0 0.0
        %3616 = vmatpush1.xpose.msra.mxu0 0.0
        %3617 = vmatprep.subr.mxu0 0.0
        %3618 = vmatpush1.xpose.msra.mxu0 0.0
        %3619 = vmatprep.subr.mxu0 0.0
        %3620 = vmatpush1.xpose.msra.mxu0 0.0
        %3621 = vmatprep.subr.mxu0 0.0
        %3622 = vmatpush1.xpose.msra.mxu0 0.0
        %3623 = vmatprep.subr.mxu0 0.0
        %3624 = vmatpush1.xpose.msra.mxu0 0.0
        %3625 = vmatprep.subr.mxu0 0.0
        %3626 = vmatpush1.xpose.msra.mxu0 0.0
        %3627 = vmatprep.subr.mxu0 0.0
        %3628 = vmatpush1.xpose.msra.mxu0 0.0
        %3629 = vmatprep.subr.mxu0 0.0
        %3630 = vmatpush1.xpose.msra.mxu0 0.0
        %3631 = vmatprep.subr.mxu0 0.0
        %3632 = vmatpush1.xpose.msra.mxu0 0.0
        %3633 = vmatprep.subr.mxu0 0.0
        %3634 = vmatpush1.xpose.msra.mxu0 0.0
        %3635 = vmatprep.subr.mxu0 0.0
        %3636 = vmatpush1.xpose.msra.mxu0 0.0
        %3637 = vmatprep.subr.mxu0 0.0
        %3638 = vmatpush1.xpose.msra.mxu0 0.0
        %3639 = vmatprep.subr.mxu0 0.0
        %3640 = vmatpush1.xpose.msra.mxu0 0.0
        %3641 = vmatprep.subr.mxu0 0.0
        %3642 = vmatpush1.xpose.msra.mxu0 0.0
        %3643 = vmatprep.subr.mxu0 0.0
        %3644 = vmatpush1.xpose.msra.mxu0 0.0
        %3645 = vmatprep.subr.mxu0 0.0
        %3646 = vmatpush1.xpose.msra.mxu0 0.0
        %3647 = vmatprep.subr.mxu0 0.0
        %3648 = vmatpush1.xpose.msra.mxu0 0.0
        %3649 = vmatprep.subr.mxu0 0.0
        %3650 = vmatpush1.xpose.msra.mxu0 0.0
        %3651 = vmatprep.subr.mxu0 0.0
        %3652 = vmatpush1.xpose.msra.mxu0 0.0
        %3653 = vmatprep.subr.mxu0 0.0
        %3654 = vmatpush1.xpose.msra.mxu0 0.0
        %3655 = vmatprep.subr.mxu0 0.0
        %3656 = vmatpush1.xpose.msra.mxu0 0.0
        %3657 = vmatprep.subr.mxu0 0.0
        %3658 = vmatpush1.xpose.msra.mxu0 0.0
        %3659 = vmatprep.subr.mxu0 0.0
        %3660 = vmatpush1.xpose.msra.mxu0 0.0
        %3661 = vmatprep.subr.mxu0 0.0
        %3662 = vmatpush1.xpose.msra.mxu0 0.0
        %3663 = vmatprep.mubr.f32.mxu0 0.0
        %3664 = vmatmul.mubr.f32.gmra.mrb[0].mxu0 %v3588
        %v3665 = vpop.f32.mrb[0].mxu0
        %v3666 = vadd.f32 0.0, %v3665
        %v3667 = vpop.f32.mrb[0].mxu0
        %3668 = vdwg.mxu0
        %v3670 = vsel %vm1327, %v2768, 0
        %v3673 = vsel %vm1327, %v3076, 0
        %v3676 = vsel %vm1327, %v3081, 0
        %v3679 = vsel %vm1327, %v3086, 0
        %3681 = vmatprep.subr.mxu0 0.0
        %3682 = vmatpush1.xpose.msra.mxu0 %v3673
        %3683 = vmatprep.subr.mxu0 0.0
        %3684 = vmatpush1.xpose.msra.mxu0 %v3676
        %3685 = vmatprep.subr.mxu0 0.0
        %3686 = vmatpush1.xpose.msra.mxu0 %v3679
        %3687 = vmatprep.subr.mxu0 0.0
        %3688 = vmatpush1.xpose.msra.mxu0 0.0
        %3689 = vmatprep.subr.mxu0 0.0
        %3690 = vmatpush1.xpose.msra.mxu0 0.0
        %3691 = vmatprep.subr.mxu0 0.0
        %3692 = vmatpush1.xpose.msra.mxu0 0.0
        %3693 = vmatprep.subr.mxu0 0.0
        %3694 = vmatpush1.xpose.msra.mxu0 0.0
        %3695 = vmatprep.subr.mxu0 0.0
        %3696 = vmatpush1.xpose.msra.mxu0 0.0
        %3697 = vmatprep.subr.mxu0 0.0
        %3698 = vmatpush1.xpose.msra.mxu0 0.0
        %3699 = vmatprep.subr.mxu0 0.0
        %3700 = vmatpush1.xpose.msra.mxu0 0.0
        %3701 = vmatprep.subr.mxu0 0.0
        %3702 = vmatpush1.xpose.msra.mxu0 0.0
        %3703 = vmatprep.subr.mxu0 0.0
        %3704 = vmatpush1.xpose.msra.mxu0 0.0
        %3705 = vmatprep.subr.mxu0 0.0
        %3706 = vmatpush1.xpose.msra.mxu0 0.0
        %3707 = vmatprep.subr.mxu0 0.0
        %3708 = vmatpush1.xpose.msra.mxu0 0.0
        %3709 = vmatprep.subr.mxu0 0.0
        %3710 = vmatpush1.xpose.msra.mxu0 0.0
        %3711 = vmatprep.subr.mxu0 0.0
        %3712 = vmatpush1.xpose.msra.mxu0 0.0
        %3713 = vmatprep.subr.mxu0 0.0
        %3714 = vmatpush1.xpose.msra.mxu0 0.0
        %3715 = vmatprep.subr.mxu0 0.0
        %3716 = vmatpush1.xpose.msra.mxu0 0.0
        %3717 = vmatprep.subr.mxu0 0.0
        %3718 = vmatpush1.xpose.msra.mxu0 0.0
        %3719 = vmatprep.subr.mxu0 0.0
        %3720 = vmatpush1.xpose.msra.mxu0 0.0
        %3721 = vmatprep.subr.mxu0 0.0
        %3722 = vmatpush1.xpose.msra.mxu0 0.0
        %3723 = vmatprep.subr.mxu0 0.0
        %3724 = vmatpush1.xpose.msra.mxu0 0.0
        %3725 = vmatprep.subr.mxu0 0.0
        %3726 = vmatpush1.xpose.msra.mxu0 0.0
        %3727 = vmatprep.subr.mxu0 0.0
        %3728 = vmatpush1.xpose.msra.mxu0 0.0
        %3729 = vmatprep.subr.mxu0 0.0
        %3730 = vmatpush1.xpose.msra.mxu0 0.0
        %3731 = vmatprep.subr.mxu0 0.0
        %3732 = vmatpush1.xpose.msra.mxu0 0.0
        %3733 = vmatprep.subr.mxu0 0.0
        %3734 = vmatpush1.xpose.msra.mxu0 0.0
        %3735 = vmatprep.subr.mxu0 0.0
        %3736 = vmatpush1.xpose.msra.mxu0 0.0
        %3737 = vmatprep.subr.mxu0 0.0
        %3738 = vmatpush1.xpose.msra.mxu0 0.0
        %3739 = vmatprep.subr.mxu0 0.0
        %3740 = vmatpush1.xpose.msra.mxu0 0.0
        %3741 = vmatprep.subr.mxu0 0.0
        %3742 = vmatpush1.xpose.msra.mxu0 0.0
        %3743 = vmatprep.subr.mxu0 0.0
        %3744 = vmatpush1.xpose.msra.mxu0 0.0
        %3745 = vmatprep.mubr.f32.mxu0 0.0
        %3746 = vmatmul.mubr.f32.gmra.mrb[0].mxu0 %v3670
        %v3747 = vpop.f32.mrb[0].mxu0
        %v3748 = vadd.f32 0.0, %v3747
        %v3749 = vpop.f32.mrb[0].mxu0
        %3750 = vdwg.mxu0
        %v3752 = vsel %vm1327, %v2841, 0
        %v3755 = vsel %vm1327, %v3159, 0
        %v3758 = vsel %vm1327, %v3164, 0
        %v3761 = vsel %vm1327, %v3169, 0
        %3763 = vmatprep.subr.mxu0 0.0
        %3764 = vmatpush1.xpose.msra.mxu0 %v3755
        %3765 = vmatprep.subr.mxu0 0.0
        %3766 = vmatpush1.xpose.msra.mxu0 %v3758
        %3767 = vmatprep.subr.mxu0 0.0
        %3768 = vmatpush1.xpose.msra.mxu0 %v3761
        %3769 = vmatprep.subr.mxu0 0.0
        %3770 = vmatpush1.xpose.msra.mxu0 0.0
        %3771 = vmatprep.subr.mxu0 0.0
        %3772 = vmatpush1.xpose.msra.mxu0 0.0
        %3773 = vmatprep.subr.mxu0 0.0
        %3774 = vmatpush1.xpose.msra.mxu0 0.0
        %3775 = vmatprep.subr.mxu0 0.0
        %3776 = vmatpush1.xpose.msra.mxu0 0.0
        %3777 = vmatprep.subr.mxu0 0.0
        %3778 = vmatpush1.xpose.msra.mxu0 0.0
        %3779 = vmatprep.subr.mxu0 0.0
        %3780 = vmatpush1.xpose.msra.mxu0 0.0
        %3781 = vmatprep.subr.mxu0 0.0
        %3782 = vmatpush1.xpose.msra.mxu0 0.0
        %3783 = vmatprep.subr.mxu0 0.0
        %3784 = vmatpush1.xpose.msra.mxu0 0.0
        %3785 = vmatprep.subr.mxu0 0.0
        %3786 = vmatpush1.xpose.msra.mxu0 0.0
        %3787 = vmatprep.subr.mxu0 0.0
        %3788 = vmatpush1.xpose.msra.mxu0 0.0
        %3789 = vmatprep.subr.mxu0 0.0
        %3790 = vmatpush1.xpose.msra.mxu0 0.0
        %3791 = vmatprep.subr.mxu0 0.0
        %3792 = vmatpush1.xpose.msra.mxu0 0.0
        %3793 = vmatprep.subr.mxu0 0.0
        %3794 = vmatpush1.xpose.msra.mxu0 0.0
        %3795 = vmatprep.subr.mxu0 0.0
        %3796 = vmatpush1.xpose.msra.mxu0 0.0
        %3797 = vmatprep.subr.mxu0 0.0
        %3798 = vmatpush1.xpose.msra.mxu0 0.0
        %3799 = vmatprep.subr.mxu0 0.0
        %3800 = vmatpush1.xpose.msra.mxu0 0.0
        %3801 = vmatprep.subr.mxu0 0.0
        %3802 = vmatpush1.xpose.msra.mxu0 0.0
        %3803 = vmatprep.subr.mxu0 0.0
        %3804 = vmatpush1.xpose.msra.mxu0 0.0
        %3805 = vmatprep.subr.mxu0 0.0
        %3806 = vmatpush1.xpose.msra.mxu0 0.0
        %3807 = vmatprep.subr.mxu0 0.0
        %3808 = vmatpush1.xpose.msra.mxu0 0.0
        %3809 = vmatprep.subr.mxu0 0.0
        %3810 = vmatpush1.xpose.msra.mxu0 0.0
        %3811 = vmatprep.subr.mxu0 0.0
        %3812 = vmatpush1.xpose.msra.mxu0 0.0
        %3813 = vmatprep.subr.mxu0 0.0
        %3814 = vmatpush1.xpose.msra.mxu0 0.0
        %3815 = vmatprep.subr.mxu0 0.0
        %3816 = vmatpush1.xpose.msra.mxu0 0.0
        %3817 = vmatprep.subr.mxu0 0.0
        %3818 = vmatpush1.xpose.msra.mxu0 0.0
        %3819 = vmatprep.subr.mxu0 0.0
        %3820 = vmatpush1.xpose.msra.mxu0 0.0
        %3821 = vmatprep.subr.mxu0 0.0
        %3822 = vmatpush1.xpose.msra.mxu0 0.0
        %3823 = vmatprep.subr.mxu0 0.0
        %3824 = vmatpush1.xpose.msra.mxu0 0.0
        %3825 = vmatprep.subr.mxu0 0.0
        %3826 = vmatpush1.xpose.msra.mxu0 0.0
        %3827 = vmatprep.mubr.f32.mxu0 0.0
        %3828 = vmatmul.mubr.f32.gmra.mrb[0].mxu0 %v3752
        %v3829 = vpop.f32.mrb[0].mxu0
        %v3830 = vadd.f32 0.0, %v3829
        %v3831 = vpop.f32.mrb[0].mxu0
        %3832 = vdwg.mxu0
        %v3834 = vsel %vm1327, %v2914, 0
        %v3837 = vsel %vm1327, %v3242, 0
        %v3840 = vsel %vm1327, %v3247, 0
        %v3843 = vsel %vm1327, %v3252, 0
        %3845 = vmatprep.subr.mxu0 0.0
        %3846 = vmatpush1.xpose.msra.mxu0 %v3837
        %3847 = vmatprep.subr.mxu0 0.0
        %3848 = vmatpush1.xpose.msra.mxu0 %v3840
        %3849 = vmatprep.subr.mxu0 0.0
        %3850 = vmatpush1.xpose.msra.mxu0 %v3843
        %3851 = vmatprep.subr.mxu0 0.0
        %3852 = vmatpush1.xpose.msra.mxu0 0.0
        %3853 = vmatprep.subr.mxu0 0.0
        %3854 = vmatpush1.xpose.msra.mxu0 0.0
        %3855 = vmatprep.subr.mxu0 0.0
        %3856 = vmatpush1.xpose.msra.mxu0 0.0
        %3857 = vmatprep.subr.mxu0 0.0
        %3858 = vmatpush1.xpose.msra.mxu0 0.0
        %3859 = vmatprep.subr.mxu0 0.0
        %3860 = vmatpush1.xpose.msra.mxu0 0.0
        %3861 = vmatprep.subr.mxu0 0.0
        %3862 = vmatpush1.xpose.msra.mxu0 0.0
        %3863 = vmatprep.subr.mxu0 0.0
        %3864 = vmatpush1.xpose.msra.mxu0 0.0
        %3865 = vmatprep.subr.mxu0 0.0
        %3866 = vmatpush1.xpose.msra.mxu0 0.0
        %3867 = vmatprep.subr.mxu0 0.0
        %3868 = vmatpush1.xpose.msra.mxu0 0.0
        %3869 = vmatprep.subr.mxu0 0.0
        %3870 = vmatpush1.xpose.msra.mxu0 0.0
        %3871 = vmatprep.subr.mxu0 0.0
        %3872 = vmatpush1.xpose.msra.mxu0 0.0
        %3873 = vmatprep.subr.mxu0 0.0
        %3874 = vmatpush1.xpose.msra.mxu0 0.0
        %3875 = vmatprep.subr.mxu0 0.0
        %3876 = vmatpush1.xpose.msra.mxu0 0.0
        %3877 = vmatprep.subr.mxu0 0.0
        %3878 = vmatpush1.xpose.msra.mxu0 0.0
        %3879 = vmatprep.subr.mxu0 0.0
        %3880 = vmatpush1.xpose.msra.mxu0 0.0
        %3881 = vmatprep.subr.mxu0 0.0
        %3882 = vmatpush1.xpose.msra.mxu0 0.0
        %3883 = vmatprep.subr.mxu0 0.0
        %3884 = vmatpush1.xpose.msra.mxu0 0.0
        %3885 = vmatprep.subr.mxu0 0.0
        %3886 = vmatpush1.xpose.msra.mxu0 0.0
        %3887 = vmatprep.subr.mxu0 0.0
        %3888 = vmatpush1.xpose.msra.mxu0 0.0
        %3889 = vmatprep.subr.mxu0 0.0
        %3890 = vmatpush1.xpose.msra.mxu0 0.0
        %3891 = vmatprep.subr.mxu0 0.0
        %3892 = vmatpush1.xpose.msra.mxu0 0.0
        %3893 = vmatprep.subr.mxu0 0.0
        %3894 = vmatpush1.xpose.msra.mxu0 0.0
        %3895 = vmatprep.subr.mxu0 0.0
        %3896 = vmatpush1.xpose.msra.mxu0 0.0
        %3897 = vmatprep.subr.mxu0 0.0
        %3898 = vmatpush1.xpose.msra.mxu0 0.0
        %3899 = vmatprep.subr.mxu0 0.0
        %3900 = vmatpush1.xpose.msra.mxu0 0.0
        %3901 = vmatprep.subr.mxu0 0.0
        %3902 = vmatpush1.xpose.msra.mxu0 0.0
        %3903 = vmatprep.subr.mxu0 0.0
        %3904 = vmatpush1.xpose.msra.mxu0 0.0
        %3905 = vmatprep.subr.mxu0 0.0
        %3906 = vmatpush1.xpose.msra.mxu0 0.0
        %3907 = vmatprep.subr.mxu0 0.0
        %3908 = vmatpush1.xpose.msra.mxu0 0.0
        %3909 = vmatprep.mubr.f32.mxu0 0.0
        %3910 = vmatmul.mubr.f32.gmra.mrb[0].mxu0 %v3834
        %v3911 = vpop.f32.mrb[0].mxu0
        %v3912 = vadd.f32 0.0, %v3911
        %v3913 = vpop.f32.mrb[0].mxu0
        %3914 = vdwg.mxu0
        %v3915 = vsel %vm197, %v3666, -inf
        %3916 = vmax.xlane.f32.xlu0 %v3915
        %v3917 = vpop.xlane.xlu0 %3916
        %v3918 = vsel %vm197, %v3748, -inf
        %3919 = vmax.xlane.f32.xlu0 %v3918
        %v3920 = vpop.xlane.xlu0 %3919
        %v3921 = vsel %vm197, %v3830, -inf
        %3922 = vmax.xlane.f32.xlu0 %v3921
        %v3923 = vpop.xlane.xlu0 %3922
        %v3924 = vsel %vm197, %v3912, -inf
        %3925 = vmax.xlane.f32.xlu0 %v3924
        %v3926 = vpop.xlane.xlu0 %3925
        %v3927 = vsub.f32 %v3666, %v3917
        %v3928 = vsub.f32 %v3748, %v3920
        %v3929 = vsub.f32 %v3830, %v3923
        %v3930 = vsub.f32 %v3912, %v3926
        %v3931 = vmul.f32 %v3927, 1.442695
        %v3932 = vpow.pop %v3931
        %v3933 = vmul.f32 %v3928, 1.442695
        %v3934 = vpow.pop %v3933
        %v3935 = vmul.f32 %v3929, 1.442695
        %v3936 = vpow.pop %v3935
        %v3937 = vmul.f32 %v3930, 1.442695
        %v3938 = vpow.pop %v3937
        %v3939 = vsel %vm197, %v3932, 0.0
        %3940 = vadd.xlane.f32.xlu0 %v3939
        %v3941 = vpop.xlane.xlu0 %3940
        %v3942 = vsel %vm197, %v3934, 0.0
        %3943 = vadd.xlane.f32.xlu0 %v3942
        %v3944 = vpop.xlane.xlu0 %3943
        %v3945 = vsel %vm197, %v3936, 0.0
        %3946 = vadd.xlane.f32.xlu0 %v3945
        %v3947 = vpop.xlane.xlu0 %3946
        %v3948 = vsel %vm197, %v3938, 0.0
        %3949 = vadd.xlane.f32.xlu0 %v3948
        %v3950 = vpop.xlane.xlu0 %3949
        %v3951 = vrcp.pop %v3941
        %v3952 = vrcp.pop %v3944
        %v3953 = vrcp.pop %v3947
        %v3954 = vrcp.pop %v3950
        %v3955 = vmul.f32 %v3932, %v3951
        %v3956 = vmul.f32 %v3934, %v3952
        %v3957 = vmul.f32 %v3936, %v3953
        %v3958 = vmul.f32 %v3938, %v3954
        %v3960 = vsel %vm197, %v3955, 0
        %3962 = vmatprep.subr.mxu0 0.0
        %3963 = vmatpush1.msra.mxu0 %v3325
        %3964 = vmatprep.subr.mxu0 0.0
        %3965 = vmatpush1.msra.mxu0 %v3330
        %3966 = vmatprep.subr.mxu0 0.0
        %3967 = vmatpush1.msra.mxu0 %v3335
        %3968 = vmatprep.subr.mxu0 0.0
        %3969 = vmatpush1.msra.mxu0 0.0
        %3970 = vmatprep.subr.mxu0 0.0
        %3971 = vmatpush1.msra.mxu0 0.0
        %3972 = vmatprep.subr.mxu0 0.0
        %3973 = vmatpush1.msra.mxu0 0.0
        %3974 = vmatprep.subr.mxu0 0.0
        %3975 = vmatpush1.msra.mxu0 0.0
        %3976 = vmatprep.subr.mxu0 0.0
        %3977 = vmatpush1.msra.mxu0 0.0
        %3978 = vmatprep.subr.mxu0 0.0
        %3979 = vmatpush1.msra.mxu0 0.0
        %3980 = vmatprep.subr.mxu0 0.0
        %3981 = vmatpush1.msra.mxu0 0.0
        %3982 = vmatprep.subr.mxu0 0.0
        %3983 = vmatpush1.msra.mxu0 0.0
        %3984 = vmatprep.subr.mxu0 0.0
        %3985 = vmatpush1.msra.mxu0 0.0
        %3986 = vmatprep.subr.mxu0 0.0
        %3987 = vmatpush1.msra.mxu0 0.0
        %3988 = vmatprep.subr.mxu0 0.0
        %3989 = vmatpush1.msra.mxu0 0.0
        %3990 = vmatprep.subr.mxu0 0.0
        %3991 = vmatpush1.msra.mxu0 0.0
        %3992 = vmatprep.subr.mxu0 0.0
        %3993 = vmatpush1.msra.mxu0 0.0
        %3994 = vmatprep.subr.mxu0 0.0
        %3995 = vmatpush1.msra.mxu0 0.0
        %3996 = vmatprep.subr.mxu0 0.0
        %3997 = vmatpush1.msra.mxu0 0.0
        %3998 = vmatprep.subr.mxu0 0.0
        %3999 = vmatpush1.msra.mxu0 0.0
        %4000 = vmatprep.subr.mxu0 0.0
        %4001 = vmatpush1.msra.mxu0 0.0
        %4002 = vmatprep.subr.mxu0 0.0
        %4003 = vmatpush1.msra.mxu0 0.0
        %4004 = vmatprep.subr.mxu0 0.0
        %4005 = vmatpush1.msra.mxu0 0.0
        %4006 = vmatprep.subr.mxu0 0.0
        %4007 = vmatpush1.msra.mxu0 0.0
        %4008 = vmatprep.subr.mxu0 0.0
        %4009 = vmatpush1.msra.mxu0 0.0
        %4010 = vmatprep.subr.mxu0 0.0
        %4011 = vmatpush1.msra.mxu0 0.0
        %4012 = vmatprep.subr.mxu0 0.0
        %4013 = vmatpush1.msra.mxu0 0.0
        %4014 = vmatprep.subr.mxu0 0.0
        %4015 = vmatpush1.msra.mxu0 0.0
        %4016 = vmatprep.subr.mxu0 0.0
        %4017 = vmatpush1.msra.mxu0 0.0
        %4018 = vmatprep.subr.mxu0 0.0
        %4019 = vmatpush1.msra.mxu0 0.0
        %4020 = vmatprep.subr.mxu0 0.0
        %4021 = vmatpush1.msra.mxu0 0.0
        %4022 = vmatprep.subr.mxu0 0.0
        %4023 = vmatpush1.msra.mxu0 0.0
        %4024 = vmatprep.subr.mxu0 0.0
        %4025 = vmatpush1.msra.mxu0 0.0
        %4026 = vmatprep.mubr.f32.mxu0 0.0
        %4027 = vmatmul.mubr.f32.gmra.mrb[0].mxu0 %v3960
        %v4028 = vpop.f32.mrb[0].mxu0
        %v4029 = vadd.f32 0.0, %v4028
        %v4030 = vpop.f32.mrb[0].mxu0
        %4031 = vdwg.mxu0
        %v4033 = vsel %vm197, %v3956, 0
        %4035 = vmatprep.subr.mxu0 0.0
        %4036 = vmatpush1.msra.mxu0 %v3408
        %4037 = vmatprep.subr.mxu0 0.0
        %4038 = vmatpush1.msra.mxu0 %v3413
        %4039 = vmatprep.subr.mxu0 0.0
        %4040 = vmatpush1.msra.mxu0 %v3418
        %4041 = vmatprep.subr.mxu0 0.0
        %4042 = vmatpush1.msra.mxu0 0.0
        %4043 = vmatprep.subr.mxu0 0.0
        %4044 = vmatpush1.msra.mxu0 0.0
        %4045 = vmatprep.subr.mxu0 0.0
        %4046 = vmatpush1.msra.mxu0 0.0
        %4047 = vmatprep.subr.mxu0 0.0
        %4048 = vmatpush1.msra.mxu0 0.0
        %4049 = vmatprep.subr.mxu0 0.0
        %4050 = vmatpush1.msra.mxu0 0.0
        %4051 = vmatprep.subr.mxu0 0.0
        %4052 = vmatpush1.msra.mxu0 0.0
        %4053 = vmatprep.subr.mxu0 0.0
        %4054 = vmatpush1.msra.mxu0 0.0
        %4055 = vmatprep.subr.mxu0 0.0
        %4056 = vmatpush1.msra.mxu0 0.0
        %4057 = vmatprep.subr.mxu0 0.0
        %4058 = vmatpush1.msra.mxu0 0.0
        %4059 = vmatprep.subr.mxu0 0.0
        %4060 = vmatpush1.msra.mxu0 0.0
        %4061 = vmatprep.subr.mxu0 0.0
        %4062 = vmatpush1.msra.mxu0 0.0
        %4063 = vmatprep.subr.mxu0 0.0
        %4064 = vmatpush1.msra.mxu0 0.0
        %4065 = vmatprep.subr.mxu0 0.0
        %4066 = vmatpush1.msra.mxu0 0.0
        %4067 = vmatprep.subr.mxu0 0.0
        %4068 = vmatpush1.msra.mxu0 0.0
        %4069 = vmatprep.subr.mxu0 0.0
        %4070 = vmatpush1.msra.mxu0 0.0
        %4071 = vmatprep.subr.mxu0 0.0
        %4072 = vmatpush1.msra.mxu0 0.0
        %4073 = vmatprep.subr.mxu0 0.0
        %4074 = vmatpush1.msra.mxu0 0.0
        %4075 = vmatprep.subr.mxu0 0.0
        %4076 = vmatpush1.msra.mxu0 0.0
        %4077 = vmatprep.subr.mxu0 0.0
        %4078 = vmatpush1.msra.mxu0 0.0
        %4079 = vmatprep.subr.mxu0 0.0
        %4080 = vmatpush1.msra.mxu0 0.0
        %4081 = vmatprep.subr.mxu0 0.0
        %4082 = vmatpush1.msra.mxu0 0.0
        %4083 = vmatprep.subr.mxu0 0.0
        %4084 = vmatpush1.msra.mxu0 0.0
        %4085 = vmatprep.subr.mxu0 0.0
        %4086 = vmatpush1.msra.mxu0 0.0
        %4087 = vmatprep.subr.mxu0 0.0
        %4088 = vmatpush1.msra.mxu0 0.0
        %4089 = vmatprep.subr.mxu0 0.0
        %4090 = vmatpush1.msra.mxu0 0.0
        %4091 = vmatprep.subr.mxu0 0.0
        %4092 = vmatpush1.msra.mxu0 0.0
        %4093 = vmatprep.subr.mxu0 0.0
        %4094 = vmatpush1.msra.mxu0 0.0
        %4095 = vmatprep.subr.mxu0 0.0
        %4096 = vmatpush1.msra.mxu0 0.0
        %4097 = vmatprep.subr.mxu0 0.0
        %4098 = vmatpush1.msra.mxu0 0.0
        %4099 = vmatprep.mubr.f32.mxu0 0.0
        %4100 = vmatmul.mubr.f32.gmra.mrb[0].mxu0 %v4033
        %v4101 = vpop.f32.mrb[0].mxu0
        %v4102 = vadd.f32 0.0, %v4101
        %v4103 = vpop.f32.mrb[0].mxu0
        %4104 = vdwg.mxu0
        %v4106 = vsel %vm197, %v3957, 0
        %4108 = vmatprep.subr.mxu0 0.0
        %4109 = vmatpush1.msra.mxu0 %v3491
        %4110 = vmatprep.subr.mxu0 0.0
        %4111 = vmatpush1.msra.mxu0 %v3496
        %4112 = vmatprep.subr.mxu0 0.0
        %4113 = vmatpush1.msra.mxu0 %v3501
        %4114 = vmatprep.subr.mxu0 0.0
        %4115 = vmatpush1.msra.mxu0 0.0
        %4116 = vmatprep.subr.mxu0 0.0
        %4117 = vmatpush1.msra.mxu0 0.0
        %4118 = vmatprep.subr.mxu0 0.0
        %4119 = vmatpush1.msra.mxu0 0.0
        %4120 = vmatprep.subr.mxu0 0.0
        %4121 = vmatpush1.msra.mxu0 0.0
        %4122 = vmatprep.subr.mxu0 0.0
        %4123 = vmatpush1.msra.mxu0 0.0
        %4124 = vmatprep.subr.mxu0 0.0
        %4125 = vmatpush1.msra.mxu0 0.0
        %4126 = vmatprep.subr.mxu0 0.0
        %4127 = vmatpush1.msra.mxu0 0.0
        %4128 = vmatprep.subr.mxu0 0.0
        %4129 = vmatpush1.msra.mxu0 0.0
        %4130 = vmatprep.subr.mxu0 0.0
        %4131 = vmatpush1.msra.mxu0 0.0
        %4132 = vmatprep.subr.mxu0 0.0
        %4133 = vmatpush1.msra.mxu0 0.0
        %4134 = vmatprep.subr.mxu0 0.0
        %4135 = vmatpush1.msra.mxu0 0.0
        %4136 = vmatprep.subr.mxu0 0.0
        %4137 = vmatpush1.msra.mxu0 0.0
        %4138 = vmatprep.subr.mxu0 0.0
        %4139 = vmatpush1.msra.mxu0 0.0
        %4140 = vmatprep.subr.mxu0 0.0
        %4141 = vmatpush1.msra.mxu0 0.0
        %4142 = vmatprep.subr.mxu0 0.0
        %4143 = vmatpush1.msra.mxu0 0.0
        %4144 = vmatprep.subr.mxu0 0.0
        %4145 = vmatpush1.msra.mxu0 0.0
        %4146 = vmatprep.subr.mxu0 0.0
        %4147 = vmatpush1.msra.mxu0 0.0
        %4148 = vmatprep.subr.mxu0 0.0
        %4149 = vmatpush1.msra.mxu0 0.0
        %4150 = vmatprep.subr.mxu0 0.0
        %4151 = vmatpush1.msra.mxu0 0.0
        %4152 = vmatprep.subr.mxu0 0.0
        %4153 = vmatpush1.msra.mxu0 0.0
        %4154 = vmatprep.subr.mxu0 0.0
        %4155 = vmatpush1.msra.mxu0 0.0
        %4156 = vmatprep.subr.mxu0 0.0
        %4157 = vmatpush1.msra.mxu0 0.0
        %4158 = vmatprep.subr.mxu0 0.0
        %4159 = vmatpush1.msra.mxu0 0.0
        %4160 = vmatprep.subr.mxu0 0.0
        %4161 = vmatpush1.msra.mxu0 0.0
        %4162 = vmatprep.subr.mxu0 0.0
        %4163 = vmatpush1.msra.mxu0 0.0
        %4164 = vmatprep.subr.mxu0 0.0
        %4165 = vmatpush1.msra.mxu0 0.0
        %4166 = vmatprep.subr.mxu0 0.0
        %4167 = vmatpush1.msra.mxu0 0.0
        %4168 = vmatprep.subr.mxu0 0.0
        %4169 = vmatpush1.msra.mxu0 0.0
        %4170 = vmatprep.subr.mxu0 0.0
        %4171 = vmatpush1.msra.mxu0 0.0
        %4172 = vmatprep.mubr.f32.mxu0 0.0
        %4173 = vmatmul.mubr.f32.gmra.mrb[0].mxu0 %v4106
        %v4174 = vpop.f32.mrb[0].mxu0
        %v4175 = vadd.f32 0.0, %v4174
        %v4176 = vpop.f32.mrb[0].mxu0
        %4177 = vdwg.mxu0
        %v4179 = vsel %vm197, %v3958, 0
        %4181 = vmatprep.subr.mxu0 0.0
        %4182 = vmatpush1.msra.mxu0 %v3574
        %4183 = vmatprep.subr.mxu0 0.0
        %4184 = vmatpush1.msra.mxu0 %v3579
        %4185 = vmatprep.subr.mxu0 0.0
        %4186 = vmatpush1.msra.mxu0 %v3584
        %4187 = vmatprep.subr.mxu0 0.0
        %4188 = vmatpush1.msra.mxu0 0.0
        %4189 = vmatprep.subr.mxu0 0.0
        %4190 = vmatpush1.msra.mxu0 0.0
        %4191 = vmatprep.subr.mxu0 0.0
        %4192 = vmatpush1.msra.mxu0 0.0
        %4193 = vmatprep.subr.mxu0 0.0
        %4194 = vmatpush1.msra.mxu0 0.0
        %4195 = vmatprep.subr.mxu0 0.0
        %4196 = vmatpush1.msra.mxu0 0.0
        %4197 = vmatprep.subr.mxu0 0.0
        %4198 = vmatpush1.msra.mxu0 0.0
        %4199 = vmatprep.subr.mxu0 0.0
        %4200 = vmatpush1.msra.mxu0 0.0
        %4201 = vmatprep.subr.mxu0 0.0
        %4202 = vmatpush1.msra.mxu0 0.0
        %4203 = vmatprep.subr.mxu0 0.0
        %4204 = vmatpush1.msra.mxu0 0.0
        %4205 = vmatprep.subr.mxu0 0.0
        %4206 = vmatpush1.msra.mxu0 0.0
        %4207 = vmatprep.subr.mxu0 0.0
        %4208 = vmatpush1.msra.mxu0 0.0
        %4209 = vmatprep.subr.mxu0 0.0
        %4210 = vmatpush1.msra.mxu0 0.0
        %4211 = vmatprep.subr.mxu0 0.0
        %4212 = vmatpush1.msra.mxu0 0.0
        %4213 = vmatprep.subr.mxu0 0.0
        %4214 = vmatpush1.msra.mxu0 0.0
        %4215 = vmatprep.subr.mxu0 0.0
        %4216 = vmatpush1.msra.mxu0 0.0
        %4217 = vmatprep.subr.mxu0 0.0
        %4218 = vmatpush1.msra.mxu0 0.0
        %4219 = vmatprep.subr.mxu0 0.0
        %4220 = vmatpush1.msra.mxu0 0.0
        %4221 = vmatprep.subr.mxu0 0.0
        %4222 = vmatpush1.msra.mxu0 0.0
        %4223 = vmatprep.subr.mxu0 0.0
        %4224 = vmatpush1.msra.mxu0 0.0
        %4225 = vmatprep.subr.mxu0 0.0
        %4226 = vmatpush1.msra.mxu0 0.0
        %4227 = vmatprep.subr.mxu0 0.0
        %4228 = vmatpush1.msra.mxu0 0.0
        %4229 = vmatprep.subr.mxu0 0.0
        %4230 = vmatpush1.msra.mxu0 0.0
        %4231 = vmatprep.subr.mxu0 0.0
        %4232 = vmatpush1.msra.mxu0 0.0
        %4233 = vmatprep.subr.mxu0 0.0
        %4234 = vmatpush1.msra.mxu0 0.0
        %4235 = vmatprep.subr.mxu0 0.0
        %4236 = vmatpush1.msra.mxu0 0.0
        %4237 = vmatprep.subr.mxu0 0.0
        %4238 = vmatpush1.msra.mxu0 0.0
        %4239 = vmatprep.subr.mxu0 0.0
        %4240 = vmatpush1.msra.mxu0 0.0
        %4241 = vmatprep.subr.mxu0 0.0
        %4242 = vmatpush1.msra.mxu0 0.0
        %4243 = vmatprep.subr.mxu0 0.0
        %4244 = vmatpush1.msra.mxu0 0.0
        %4245 = vmatprep.mubr.f32.mxu0 0.0
        %4246 = vmatmul.mubr.f32.gmra.mrb[0].mxu0 %v4179
        %v4247 = vpop.f32.mrb[0].mxu0
        %v4248 = vadd.f32 0.0, %v4247
        %v4249 = vpop.f32.mrb[0].mxu0
        %4250 = vdwg.mxu0
        %v4252 = vsel %vm1327, %v4029, 0
        %4254 = vmatprep.subr.mxu0 0.0
        %4255 = vmatpush1.msra.mxu0 %v2618
        %4256 = vmatprep.subr.mxu0 0.0
        %4257 = vmatpush1.msra.mxu0 0.0
        %4258 = vmatprep.subr.mxu0 0.0
        %4259 = vmatpush1.msra.mxu0 0.0
        %4260 = vmatprep.subr.mxu0 0.0
        %4261 = vmatpush1.msra.mxu0 0.0
        %4262 = vmatprep.subr.mxu0 0.0
        %4263 = vmatpush1.msra.mxu0 0.0
        %4264 = vmatprep.subr.mxu0 0.0
        %4265 = vmatpush1.msra.mxu0 0.0
        %4266 = vmatprep.subr.mxu0 0.0
        %4267 = vmatpush1.msra.mxu0 0.0
        %4268 = vmatprep.subr.mxu0 0.0
        %4269 = vmatpush1.msra.mxu0 0.0
        %4270 = vmatprep.subr.mxu0 0.0
        %4271 = vmatpush1.msra.mxu0 0.0
        %4272 = vmatprep.subr.mxu0 0.0
        %4273 = vmatpush1.msra.mxu0 0.0
        %4274 = vmatprep.subr.mxu0 0.0
        %4275 = vmatpush1.msra.mxu0 0.0
        %4276 = vmatprep.subr.mxu0 0.0
        %4277 = vmatpush1.msra.mxu0 0.0
        %4278 = vmatprep.subr.mxu0 0.0
        %4279 = vmatpush1.msra.mxu0 0.0
        %4280 = vmatprep.subr.mxu0 0.0
        %4281 = vmatpush1.msra.mxu0 0.0
        %4282 = vmatprep.subr.mxu0 0.0
        %4283 = vmatpush1.msra.mxu0 0.0
        %4284 = vmatprep.subr.mxu0 0.0
        %4285 = vmatpush1.msra.mxu0 0.0
        %4286 = vmatprep.subr.mxu0 0.0
        %4287 = vmatpush1.msra.mxu0 0.0
        %4288 = vmatprep.subr.mxu0 0.0
        %4289 = vmatpush1.msra.mxu0 0.0
        %4290 = vmatprep.subr.mxu0 0.0
        %4291 = vmatpush1.msra.mxu0 0.0
        %4292 = vmatprep.subr.mxu0 0.0
        %4293 = vmatpush1.msra.mxu0 0.0
        %4294 = vmatprep.subr.mxu0 0.0
        %4295 = vmatpush1.msra.mxu0 0.0
        %4296 = vmatprep.subr.mxu0 0.0
        %4297 = vmatpush1.msra.mxu0 0.0
        %4298 = vmatprep.subr.mxu0 0.0
        %4299 = vmatpush1.msra.mxu0 0.0
        %4300 = vmatprep.subr.mxu0 0.0
        %4301 = vmatpush1.msra.mxu0 0.0
        %4302 = vmatprep.subr.mxu0 0.0
        %4303 = vmatpush1.msra.mxu0 0.0
        %4304 = vmatprep.subr.mxu0 0.0
        %4305 = vmatpush1.msra.mxu0 0.0
        %4306 = vmatprep.subr.mxu0 0.0
        %4307 = vmatpush1.msra.mxu0 0.0
        %4308 = vmatprep.subr.mxu0 0.0
        %4309 = vmatpush1.msra.mxu0 0.0
        %4310 = vmatprep.subr.mxu0 0.0
        %4311 = vmatpush1.msra.mxu0 0.0
        %4312 = vmatprep.subr.mxu0 0.0
        %4313 = vmatpush1.msra.mxu0 0.0
        %4314 = vmatprep.subr.mxu0 0.0
        %4315 = vmatpush1.msra.mxu0 0.0
        %4316 = vmatprep.subr.mxu0 0.0
        %4317 = vmatpush1.msra.mxu0 0.0
        %4318 = vmatprep.mubr.f32.mxu0 0.0
        %4319 = vmatmul.mubr.f32.gmra.mrb[0].mxu0 %v4252
        %v4320 = vpop.f32.mrb[0].mxu0
        %v4321 = vadd.f32 0.0, %v4320
        %v4322 = vpop.f32.mrb[0].mxu0
        %4323 = vdwg.mxu0
        %v4325 = vsel %vm1327, %v4102, 0
        %4327 = vmatprep.subr.mxu0 0.0
        %4328 = vmatpush1.msra.mxu0 %v2619
        %4329 = vmatprep.subr.mxu0 0.0
        %4330 = vmatpush1.msra.mxu0 0.0
        %4331 = vmatprep.subr.mxu0 0.0
        %4332 = vmatpush1.msra.mxu0 0.0
        %4333 = vmatprep.subr.mxu0 0.0
        %4334 = vmatpush1.msra.mxu0 0.0
        %4335 = vmatprep.subr.mxu0 0.0
        %4336 = vmatpush1.msra.mxu0 0.0
        %4337 = vmatprep.subr.mxu0 0.0
        %4338 = vmatpush1.msra.mxu0 0.0
        %4339 = vmatprep.subr.mxu0 0.0
        %4340 = vmatpush1.msra.mxu0 0.0
        %4341 = vmatprep.subr.mxu0 0.0
        %4342 = vmatpush1.msra.mxu0 0.0
        %4343 = vmatprep.subr.mxu0 0.0
        %4344 = vmatpush1.msra.mxu0 0.0
        %4345 = vmatprep.subr.mxu0 0.0
        %4346 = vmatpush1.msra.mxu0 0.0
        %4347 = vmatprep.subr.mxu0 0.0
        %4348 = vmatpush1.msra.mxu0 0.0
        %4349 = vmatprep.subr.mxu0 0.0
        %4350 = vmatpush1.msra.mxu0 0.0
        %4351 = vmatprep.subr.mxu0 0.0
        %4352 = vmatpush1.msra.mxu0 0.0
        %4353 = vmatprep.subr.mxu0 0.0
        %4354 = vmatpush1.msra.mxu0 0.0
        %4355 = vmatprep.subr.mxu0 0.0
        %4356 = vmatpush1.msra.mxu0 0.0
        %4357 = vmatprep.subr.mxu0 0.0
        %4358 = vmatpush1.msra.mxu0 0.0
        %4359 = vmatprep.subr.mxu0 0.0
        %4360 = vmatpush1.msra.mxu0 0.0
        %4361 = vmatprep.subr.mxu0 0.0
        %4362 = vmatpush1.msra.mxu0 0.0
        %4363 = vmatprep.subr.mxu0 0.0
        %4364 = vmatpush1.msra.mxu0 0.0
        %4365 = vmatprep.subr.mxu0 0.0
        %4366 = vmatpush1.msra.mxu0 0.0
        %4367 = vmatprep.subr.mxu0 0.0
        %4368 = vmatpush1.msra.mxu0 0.0
        %4369 = vmatprep.subr.mxu0 0.0
        %4370 = vmatpush1.msra.mxu0 0.0
        %4371 = vmatprep.subr.mxu0 0.0
        %4372 = vmatpush1.msra.mxu0 0.0
        %4373 = vmatprep.subr.mxu0 0.0
        %4374 = vmatpush1.msra.mxu0 0.0
        %4375 = vmatprep.subr.mxu0 0.0
        %4376 = vmatpush1.msra.mxu0 0.0
        %4377 = vmatprep.subr.mxu0 0.0
        %4378 = vmatpush1.msra.mxu0 0.0
        %4379 = vmatprep.subr.mxu0 0.0
        %4380 = vmatpush1.msra.mxu0 0.0
        %4381 = vmatprep.subr.mxu0 0.0
        %4382 = vmatpush1.msra.mxu0 0.0
        %4383 = vmatprep.subr.mxu0 0.0
        %4384 = vmatpush1.msra.mxu0 0.0
        %4385 = vmatprep.subr.mxu0 0.0
        %4386 = vmatpush1.msra.mxu0 0.0
        %4387 = vmatprep.subr.mxu0 0.0
        %4388 = vmatpush1.msra.mxu0 0.0
        %4389 = vmatprep.subr.mxu0 0.0
        %4390 = vmatpush1.msra.mxu0 0.0
        %4391 = vmatprep.mubr.f32.mxu0 0.0
        %4392 = vmatmul.mubr.f32.gmra.mrb[0].mxu0 %v4325
        %v4393 = vpop.f32.mrb[0].mxu0
        %v4394 = vadd.f32 0.0, %v4393
        %v4395 = vpop.f32.mrb[0].mxu0
        %4396 = vdwg.mxu0
        %v4398 = vsel %vm1327, %v4175, 0
        %4400 = vmatprep.subr.mxu0 0.0
        %4401 = vmatpush1.msra.mxu0 %v2620
        %4402 = vmatprep.subr.mxu0 0.0
        %4403 = vmatpush1.msra.mxu0 0.0
        %4404 = vmatprep.subr.mxu0 0.0
        %4405 = vmatpush1.msra.mxu0 0.0
        %4406 = vmatprep.subr.mxu0 0.0
        %4407 = vmatpush1.msra.mxu0 0.0
        %4408 = vmatprep.subr.mxu0 0.0
        %4409 = vmatpush1.msra.mxu0 0.0
        %4410 = vmatprep.subr.mxu0 0.0
        %4411 = vmatpush1.msra.mxu0 0.0
        %4412 = vmatprep.subr.mxu0 0.0
        %4413 = vmatpush1.msra.mxu0 0.0
        %4414 = vmatprep.subr.mxu0 0.0
        %4415 = vmatpush1.msra.mxu0 0.0
        %4416 = vmatprep.subr.mxu0 0.0
        %4417 = vmatpush1.msra.mxu0 0.0
        %4418 = vmatprep.subr.mxu0 0.0
        %4419 = vmatpush1.msra.mxu0 0.0
        %4420 = vmatprep.subr.mxu0 0.0
        %4421 = vmatpush1.msra.mxu0 0.0
        %4422 = vmatprep.subr.mxu0 0.0
        %4423 = vmatpush1.msra.mxu0 0.0
        %4424 = vmatprep.subr.mxu0 0.0
        %4425 = vmatpush1.msra.mxu0 0.0
        %4426 = vmatprep.subr.mxu0 0.0
        %4427 = vmatpush1.msra.mxu0 0.0
        %4428 = vmatprep.subr.mxu0 0.0
        %4429 = vmatpush1.msra.mxu0 0.0
        %4430 = vmatprep.subr.mxu0 0.0
        %4431 = vmatpush1.msra.mxu0 0.0
        %4432 = vmatprep.subr.mxu0 0.0
        %4433 = vmatpush1.msra.mxu0 0.0
        %4434 = vmatprep.subr.mxu0 0.0
        %4435 = vmatpush1.msra.mxu0 0.0
        %4436 = vmatprep.subr.mxu0 0.0
        %4437 = vmatpush1.msra.mxu0 0.0
        %4438 = vmatprep.subr.mxu0 0.0
        %4439 = vmatpush1.msra.mxu0 0.0
        %4440 = vmatprep.subr.mxu0 0.0
        %4441 = vmatpush1.msra.mxu0 0.0
        %4442 = vmatprep.subr.mxu0 0.0
        %4443 = vmatpush1.msra.mxu0 0.0
        %4444 = vmatprep.subr.mxu0 0.0
        %4445 = vmatpush1.msra.mxu0 0.0
        %4446 = vmatprep.subr.mxu0 0.0
        %4447 = vmatpush1.msra.mxu0 0.0
        %4448 = vmatprep.subr.mxu0 0.0
        %4449 = vmatpush1.msra.mxu0 0.0
        %4450 = vmatprep.subr.mxu0 0.0
        %4451 = vmatpush1.msra.mxu0 0.0
        %4452 = vmatprep.subr.mxu0 0.0
        %4453 = vmatpush1.msra.mxu0 0.0
        %4454 = vmatprep.subr.mxu0 0.0
        %4455 = vmatpush1.msra.mxu0 0.0
        %4456 = vmatprep.subr.mxu0 0.0
        %4457 = vmatpush1.msra.mxu0 0.0
        %4458 = vmatprep.subr.mxu0 0.0
        %4459 = vmatpush1.msra.mxu0 0.0
        %4460 = vmatprep.subr.mxu0 0.0
        %4461 = vmatpush1.msra.mxu0 0.0
        %4462 = vmatprep.subr.mxu0 0.0
        %4463 = vmatpush1.msra.mxu0 0.0
        %4464 = vmatprep.mubr.f32.mxu0 0.0
        %4465 = vmatmul.mubr.f32.gmra.mrb[0].mxu0 %v4398
        %v4466 = vpop.f32.mrb[0].mxu0
        %v4467 = vadd.f32 0.0, %v4466
        %v4468 = vpop.f32.mrb[0].mxu0
        %4469 = vdwg.mxu0
        %v4471 = vsel %vm1327, %v4248, 0
        %4473 = vmatprep.subr.mxu0 0.0
        %4474 = vmatpush1.msra.mxu0 %v2621
        %4475 = vmatprep.subr.mxu0 0.0
        %4476 = vmatpush1.msra.mxu0 0.0
        %4477 = vmatprep.subr.mxu0 0.0
        %4478 = vmatpush1.msra.mxu0 0.0
        %4479 = vmatprep.subr.mxu0 0.0
        %4480 = vmatpush1.msra.mxu0 0.0
        %4481 = vmatprep.subr.mxu0 0.0
        %4482 = vmatpush1.msra.mxu0 0.0
        %4483 = vmatprep.subr.mxu0 0.0
        %4484 = vmatpush1.msra.mxu0 0.0
        %4485 = vmatprep.subr.mxu0 0.0
        %4486 = vmatpush1.msra.mxu0 0.0
        %4487 = vmatprep.subr.mxu0 0.0
        %4488 = vmatpush1.msra.mxu0 0.0
        %4489 = vmatprep.subr.mxu0 0.0
        %4490 = vmatpush1.msra.mxu0 0.0
        %4491 = vmatprep.subr.mxu0 0.0
        %4492 = vmatpush1.msra.mxu0 0.0
        %4493 = vmatprep.subr.mxu0 0.0
        %4494 = vmatpush1.msra.mxu0 0.0
        %4495 = vmatprep.subr.mxu0 0.0
        %4496 = vmatpush1.msra.mxu0 0.0
        %4497 = vmatprep.subr.mxu0 0.0
        %4498 = vmatpush1.msra.mxu0 0.0
        %4499 = vmatprep.subr.mxu0 0.0
        %4500 = vmatpush1.msra.mxu0 0.0
        %4501 = vmatprep.subr.mxu0 0.0
        %4502 = vmatpush1.msra.mxu0 0.0
        %4503 = vmatprep.subr.mxu0 0.0
        %4504 = vmatpush1.msra.mxu0 0.0
        %4505 = vmatprep.subr.mxu0 0.0
        %4506 = vmatpush1.msra.mxu0 0.0
        %4507 = vmatprep.subr.mxu0 0.0
        %4508 = vmatpush1.msra.mxu0 0.0
        %4509 = vmatprep.subr.mxu0 0.0
        %4510 = vmatpush1.msra.mxu0 0.0
        %4511 = vmatprep.subr.mxu0 0.0
        %4512 = vmatpush1.msra.mxu0 0.0
        %4513 = vmatprep.subr.mxu0 0.0
        %4514 = vmatpush1.msra.mxu0 0.0
        %4515 = vmatprep.subr.mxu0 0.0
        %4516 = vmatpush1.msra.mxu0 0.0
        %4517 = vmatprep.subr.mxu0 0.0
        %4518 = vmatpush1.msra.mxu0 0.0
        %4519 = vmatprep.subr.mxu0 0.0
        %4520 = vmatpush1.msra.mxu0 0.0
        %4521 = vmatprep.subr.mxu0 0.0
        %4522 = vmatpush1.msra.mxu0 0.0
        %4523 = vmatprep.subr.mxu0 0.0
        %4524 = vmatpush1.msra.mxu0 0.0
        %4525 = vmatprep.subr.mxu0 0.0
        %4526 = vmatpush1.msra.mxu0 0.0
        %4527 = vmatprep.subr.mxu0 0.0
        %4528 = vmatpush1.msra.mxu0 0.0
        %4529 = vmatprep.subr.mxu0 0.0
        %4530 = vmatpush1.msra.mxu0 0.0
        %4531 = vmatprep.subr.mxu0 0.0
        %4532 = vmatpush1.msra.mxu0 0.0
        %4533 = vmatprep.subr.mxu0 0.0
        %4534 = vmatpush1.msra.mxu0 0.0
        %4535 = vmatprep.subr.mxu0 0.0
        %4536 = vmatpush1.msra.mxu0 0.0
        %4537 = vmatprep.mubr.f32.mxu0 0.0
        %4538 = vmatmul.mubr.f32.gmra.mrb[0].mxu0 %v4471
        %v4539 = vpop.f32.mrb[0].mxu0
        %v4540 = vadd.f32 0.0, %v4539
        %v4541 = vpop.f32.mrb[0].mxu0
        %4542 = vdwg.mxu0
        %v4543 = vsel %vm281, %v4321, 0.0
        %v4544 = vsel %vm281, %v4394, 0.0
        %v4545 = vadd.f32 %v4543, %v4544
        %v4546 = vsel %vm281, %v4467, 0.0
        %v4547 = vadd.f32 %v4545, %v4546
        %v4548 = vsel %vm281, %v4540, 0.0
        %v4549 = vadd.f32 %v4547, %v4548
        %v4550 = vadd.f32 %v4549, %v2564
        %v4551 = vld [vmem:[%s2 + $0x270] sm:$0x1]
        %v4552 = vld [vmem:[%s2 + $0x278] sm:$0x1]
        %v4553 = vsel %vm281, %v4550, 0.0
        %4554 = vadd.xlane.f32.xlu0 %v4553
        %v4555 = vpop.xlane.xlu0 %4554
        %v4556 = vmul.f32 %v4555, %v288
        %v4557 = vsub.f32 %v4550, %v4556
        %v4558 = vmul.f32 %v4557, %v4557
        %v4559 = vsel %vm281, %v4558, 0.0
        %4560 = vadd.xlane.f32.xlu0 %v4559
        %v4561 = vpop.xlane.xlu0 %4560
        %v4562 = vmul.f32 %v4561, %v288
        %v4563 = vadd.f32 %v4562, 1e-05
        %v4564 = vrsqrt.pop %v4563
        %v4565 = vmul.f32 %v4557, %v4564
        %v4566 = vlaneseq
        %v4567 = vshrl.u32 %v4566, 7
        %v4568 = vsub.s32 0, %v4567
        %v4569 = vrot.slane %v4551, %v4568
        %v4570 = vmul.f32 %v4565, %v4569
        %v4571 = vlaneseq
        %v4572 = vshrl.u32 %v4571, 7
        %v4573 = vsub.s32 0, %v4572
        %v4574 = vrot.slane %v4552, %v4573
        %v4575 = vadd.f32 %v4570, %v4574
        %v4576 = vld [vmem:[%s2 + $0x280] sm:$0xff]
        %v4577 = vld [vmem:[%s2 + $0x288] sm:$0xff]
        %v4578 = vld [vmem:[%s2 + $0x290] sm:$0xff]
        %v4579 = vld [vmem:[%s2 + $0x298] sm:$0xff]
        %v4580 = vld [vmem:[%s2 + $0x2a0] sm:$0xff]
        %v4581 = vld [vmem:[%s2 + $0x2a8] sm:$0xff]
        %v4582 = vld [vmem:[%s2 + $0x2b0] sm:$0xff]
        %v4583 = vld [vmem:[%s2 + $0x2b8] sm:$0xff]
        %v4584 = vld [vmem:[%s2 + $0x2c0] sm:$0xff]
        %v4585 = vld [vmem:[%s2 + $0x2c8] sm:$0xff]
        %v4586 = vld [vmem:[%s2 + $0x2d0] sm:$0xff]
        %v4587 = vld [vmem:[%s2 + $0x2d8] sm:$0xff]
        %v4588 = vld [vmem:[%s2 + $0x2e0] sm:$0xff]
        %v4589 = vld [vmem:[%s2 + $0x2e8] sm:$0xff]
        %v4590 = vld [vmem:[%s2 + $0x2f0] sm:$0xff]
        %v4591 = vld [vmem:[%s2 + $0x2f8] sm:$0xff]
        %v4593 = vsel %vm281, %v4575, 0
        %v4596 = vsel %vm281, %v4576, 0
        %v4599 = vsel %vm281, %v4577, 0
        %v4602 = vsel %vm281, %v4578, 0
        %v4605 = vsel %vm281, %v4579, 0
        %v4608 = vsel %vm281, %v4580, 0
        %v4611 = vsel %vm281, %v4581, 0
        %v4614 = vsel %vm281, %v4582, 0
        %v4617 = vsel %vm281, %v4583, 0
        %v4620 = vsel %vm281, %v4584, 0
        %v4623 = vsel %vm281, %v4585, 0
        %v4626 = vsel %vm281, %v4586, 0
        %v4629 = vsel %vm281, %v4587, 0
        %v4632 = vsel %vm281, %v4588, 0
        %v4635 = vsel %vm281, %v4589, 0
        %v4638 = vsel %vm281, %v4590, 0
        %v4641 = vsel %vm281, %v4591, 0
        %4643 = vmatprep.subr.mxu0 0.0
        %4644 = vmatpush1.xpose.msra.mxu0 %v4596
        %4645 = vmatprep.subr.mxu0 0.0
        %4646 = vmatpush1.xpose.msra.mxu0 %v4599
        %4647 = vmatprep.subr.mxu0 0.0
        %4648 = vmatpush1.xpose.msra.mxu0 %v4602
        %4649 = vmatprep.subr.mxu0 0.0
        %4650 = vmatpush1.xpose.msra.mxu0 %v4605
        %4651 = vmatprep.subr.mxu0 0.0
        %4652 = vmatpush1.xpose.msra.mxu0 %v4608
        %4653 = vmatprep.subr.mxu0 0.0
        %4654 = vmatpush1.xpose.msra.mxu0 %v4611
        %4655 = vmatprep.subr.mxu0 0.0
        %4656 = vmatpush1.xpose.msra.mxu0 %v4614
        %4657 = vmatprep.subr.mxu0 0.0
        %4658 = vmatpush1.xpose.msra.mxu0 %v4617
        %4659 = vmatprep.subr.mxu0 0.0
        %4660 = vmatpush1.xpose.msra.mxu0 %v4620
        %4661 = vmatprep.subr.mxu0 0.0
        %4662 = vmatpush1.xpose.msra.mxu0 %v4623
        %4663 = vmatprep.subr.mxu0 0.0
        %4664 = vmatpush1.xpose.msra.mxu0 %v4626
        %4665 = vmatprep.subr.mxu0 0.0
        %4666 = vmatpush1.xpose.msra.mxu0 %v4629
        %4667 = vmatprep.subr.mxu0 0.0
        %4668 = vmatpush1.xpose.msra.mxu0 %v4632
        %4669 = vmatprep.subr.mxu0 0.0
        %4670 = vmatpush1.xpose.msra.mxu0 %v4635
        %4671 = vmatprep.subr.mxu0 0.0
        %4672 = vmatpush1.xpose.msra.mxu0 %v4638
        %4673 = vmatprep.subr.mxu0 0.0
        %4674 = vmatpush1.xpose.msra.mxu0 %v4641
        %4675 = vmatprep.subr.mxu0 0.0
        %4676 = vmatpush1.xpose.msra.mxu0 0.0
        %4677 = vmatprep.subr.mxu0 0.0
        %4678 = vmatpush1.xpose.msra.mxu0 0.0
        %4679 = vmatprep.subr.mxu0 0.0
        %4680 = vmatpush1.xpose.msra.mxu0 0.0
        %4681 = vmatprep.subr.mxu0 0.0
        %4682 = vmatpush1.xpose.msra.mxu0 0.0
        %4683 = vmatprep.subr.mxu0 0.0
        %4684 = vmatpush1.xpose.msra.mxu0 0.0
        %4685 = vmatprep.subr.mxu0 0.0
        %4686 = vmatpush1.xpose.msra.mxu0 0.0
        %4687 = vmatprep.subr.mxu0 0.0
        %4688 = vmatpush1.xpose.msra.mxu0 0.0
        %4689 = vmatprep.subr.mxu0 0.0
        %4690 = vmatpush1.xpose.msra.mxu0 0.0
        %4691 = vmatprep.subr.mxu0 0.0
        %4692 = vmatpush1.xpose.msra.mxu0 0.0
        %4693 = vmatprep.subr.mxu0 0.0
        %4694 = vmatpush1.xpose.msra.mxu0 0.0
        %4695 = vmatprep.subr.mxu0 0.0
        %4696 = vmatpush1.xpose.msra.mxu0 0.0
        %4697 = vmatprep.subr.mxu0 0.0
        %4698 = vmatpush1.xpose.msra.mxu0 0.0
        %4699 = vmatprep.subr.mxu0 0.0
        %4700 = vmatpush1.xpose.msra.mxu0 0.0
        %4701 = vmatprep.subr.mxu0 0.0
        %4702 = vmatpush1.xpose.msra.mxu0 0.0
        %4703 = vmatprep.subr.mxu0 0.0
        %4704 = vmatpush1.xpose.msra.mxu0 0.0
        %4705 = vmatprep.subr.mxu0 0.0
        %4706 = vmatpush1.xpose.msra.mxu0 0.0
        %4707 = vmatprep.mubr.f32.mxu0 0.0
        %4708 = vmatmul.mubr.f32.gmra.mrb[0].mxu0 %v4593
        %v4709 = vpop.f32.mrb[0].mxu0
        %v4710 = vadd.f32 0.0, %v4709
        %v4711 = vpop.f32.mrb[0].mxu0
        %4712 = vdwg.mxu0
        %v4713 = vmul.f32 %v4710, 0.70710677
        %v4714 = vand.u32 2147483647, %v4713
        %v4715 = vmul.f32 %v4714, 0.3275911
        %v4716 = vadd.f32 %v4715, 1.0
        %v4717 = vrcp.pop %v4716
        %v4718 = vmul.f32 1.0, %v4717
        %v4719 = vmul.f32 %v4718, 1.0614054
        %v4720 = vadd.f32 %v4719, -1.4531521
        %v4721 = vmul.f32 %v4718, %v4720
        %v4722 = vadd.f32 %v4721, 1.4214138
        %v4723 = vmul.f32 %v4718, %v4722
        %v4724 = vadd.f32 %v4723, -0.28449672
        %v4725 = vmul.f32 %v4718, %v4724
        %v4726 = vadd.f32 %v4725, 0.2548296
        %v4727 = vmul.f32 %v4718, %v4726
        %v4728 = vsub.f32 0.0, %v4714
        %v4729 = vmul.f32 %v4728, %v4714
        %v4730 = vmul.f32 %v4729, 1.442695
        %v4731 = vpow.pop %v4730
        %v4732 = vmul.f32 %v4727, %v4731
        %v4733 = vsub.f32 1.0, %v4732
        %vm4734 = vcmp.ge.f32.partialorder %v4713, 0.0
        %v4735 = vsub.f32 0.0, %v4733
        %v4736 = vsel %vm4734, %v4733, %v4735
        %v4737 = vmul.f32 %v4710, 0.5
        %v4738 = vadd.f32 %v4736, 1.0
        %v4739 = vmul.f32 %v4737, %v4738
        %v4740 = vld [vmem:[%s2 + $0x300] sm:$0xff]
        %v4741 = vld [vmem:[%s2 + $0x308] sm:$0xff]
        %v4742 = vld [vmem:[%s2 + $0x310] sm:$0xff]
        %v4743 = vld [vmem:[%s2 + $0x318] sm:$0xff]
        %v4744 = vld [vmem:[%s2 + $0x320] sm:$0xff]
        %v4745 = vld [vmem:[%s2 + $0x328] sm:$0xff]
        %v4746 = vld [vmem:[%s2 + $0x330] sm:$0xff]
        %v4747 = vld [vmem:[%s2 + $0x338] sm:$0xff]
        %v4748 = vld [vmem:[%s2 + $0x340] sm:$0xff]
        %v4749 = vld [vmem:[%s2 + $0x348] sm:$0xff]
        %v4750 = vld [vmem:[%s2 + $0x350] sm:$0xff]
        %v4751 = vld [vmem:[%s2 + $0x358] sm:$0xff]
        %v4752 = vld [vmem:[%s2 + $0x360] sm:$0xff]
        %v4753 = vld [vmem:[%s2 + $0x368] sm:$0xff]
        %v4754 = vld [vmem:[%s2 + $0x370] sm:$0xff]
        %v4755 = vld [vmem:[%s2 + $0x378] sm:$0xff]
        %4756 = vmatprep.subr.mxu0 0.0
        %4757 = vmatpush1.msra.mxu0 %v4740
        %4758 = vmatprep.subr.mxu0 0.0
        %4759 = vmatpush1.msra.mxu0 %v4741
        %4760 = vmatprep.subr.mxu0 0.0
        %4761 = vmatpush1.msra.mxu0 %v4742
        %4762 = vmatprep.subr.mxu0 0.0
        %4763 = vmatpush1.msra.mxu0 %v4743
        %4764 = vmatprep.subr.mxu0 0.0
        %4765 = vmatpush1.msra.mxu0 %v4744
        %4766 = vmatprep.subr.mxu0 0.0
        %4767 = vmatpush1.msra.mxu0 %v4745
        %4768 = vmatprep.subr.mxu0 0.0
        %4769 = vmatpush1.msra.mxu0 %v4746
        %4770 = vmatprep.subr.mxu0 0.0
        %4771 = vmatpush1.msra.mxu0 %v4747
        %4772 = vmatprep.subr.mxu0 0.0
        %4773 = vmatpush1.msra.mxu0 %v4748
        %4774 = vmatprep.subr.mxu0 0.0
        %4775 = vmatpush1.msra.mxu0 %v4749
        %4776 = vmatprep.subr.mxu0 0.0
        %4777 = vmatpush1.msra.mxu0 %v4750
        %4778 = vmatprep.subr.mxu0 0.0
        %4779 = vmatpush1.msra.mxu0 %v4751
        %4780 = vmatprep.subr.mxu0 0.0
        %4781 = vmatpush1.msra.mxu0 %v4752
        %4782 = vmatprep.subr.mxu0 0.0
        %4783 = vmatpush1.msra.mxu0 %v4753
        %4784 = vmatprep.subr.mxu0 0.0
        %4785 = vmatpush1.msra.mxu0 %v4754
        %4786 = vmatprep.subr.mxu0 0.0
        %4787 = vmatpush1.msra.mxu0 %v4755
        %4788 = vmatprep.subr.mxu0 0.0
        %4789 = vmatpush1.msra.mxu0 0.0
        %4790 = vmatprep.subr.mxu0 0.0
        %4791 = vmatpush1.msra.mxu0 0.0
        %4792 = vmatprep.subr.mxu0 0.0
        %4793 = vmatpush1.msra.mxu0 0.0
        %4794 = vmatprep.subr.mxu0 0.0
        %4795 = vmatpush1.msra.mxu0 0.0
        %4796 = vmatprep.subr.mxu0 0.0
        %4797 = vmatpush1.msra.mxu0 0.0
        %4798 = vmatprep.subr.mxu0 0.0
        %4799 = vmatpush1.msra.mxu0 0.0
        %4800 = vmatprep.subr.mxu0 0.0
        %4801 = vmatpush1.msra.mxu0 0.0
        %4802 = vmatprep.subr.mxu0 0.0
        %4803 = vmatpush1.msra.mxu0 0.0
        %4804 = vmatprep.subr.mxu0 0.0
        %4805 = vmatpush1.msra.mxu0 0.0
        %4806 = vmatprep.subr.mxu0 0.0
        %4807 = vmatpush1.msra.mxu0 0.0
        %4808 = vmatprep.subr.mxu0 0.0
        %4809 = vmatpush1.msra.mxu0 0.0
        %4810 = vmatprep.subr.mxu0 0.0
        %4811 = vmatpush1.msra.mxu0 0.0
        %4812 = vmatprep.subr.mxu0 0.0
        %4813 = vmatpush1.msra.mxu0 0.0
        %4814 = vmatprep.subr.mxu0 0.0
        %4815 = vmatpush1.msra.mxu0 0.0
        %4816 = vmatprep.subr.mxu0 0.0
        %4817 = vmatpush1.msra.mxu0 0.0
        %4818 = vmatprep.subr.mxu0 0.0
        %4819 = vmatpush1.msra.mxu0 0.0
        %4820 = vmatprep.mubr.f32.mxu0 0.0
        %4821 = vmatmul.mubr.f32.gmra.mrb[0].mxu0 %v4739
        %v4822 = vpop.f32.mrb[0].mxu0
        %v4823 = vadd.f32 %v4550, %v4822
        %v4824 = vpop.f32.mrb[0].mxu0
        %4825 = vdwg.mxu0
        %v4826 = vld [vmem:[%s2 + $0x380] sm:$0xff]
        %v4827 = vld [vmem:[%s2 + $0x388] sm:$0xff]
        %v4828 = vld [vmem:[%s2 + $0x390] sm:$0xff]
        %v4829 = vld [vmem:[%s2 + $0x398] sm:$0xff]
        %v4830 = vld [vmem:[%s2 + $0x3a0] sm:$0x1]
        %v4831 = vlaneseq
        %v4832 = vshrl.u32 %v4831, 7
        %v4833 = vsub.s32 0, %v4832
        %v4834 = vrot.slane %v4830, %v4833
        %v4836 = vsel %vm281, %v4823, 0
        %4838 = vmatprep.subr.mxu0 0.0
        %4839 = vmatpush1.msra.mxu0 %v4826
        %4840 = vmatprep.subr.mxu0 0.0
        %4841 = vmatpush1.msra.mxu0 %v4827
        %4842 = vmatprep.subr.mxu0 0.0
        %4843 = vmatpush1.msra.mxu0 %v4828
        %4844 = vmatprep.subr.mxu0 0.0
        %4845 = vmatpush1.msra.mxu0 %v4829
        %4846 = vmatprep.subr.mxu0 0.0
        %4847 = vmatpush1.msra.mxu0 0.0
        %4848 = vmatprep.subr.mxu0 0.0
        %4849 = vmatpush1.msra.mxu0 0.0
        %4850 = vmatprep.subr.mxu0 0.0
        %4851 = vmatpush1.msra.mxu0 0.0
        %4852 = vmatprep.subr.mxu0 0.0
        %4853 = vmatpush1.msra.mxu0 0.0
        %4854 = vmatprep.subr.mxu0 0.0
        %4855 = vmatpush1.msra.mxu0 0.0
        %4856 = vmatprep.subr.mxu0 0.0
        %4857 = vmatpush1.msra.mxu0 0.0
        %4858 = vmatprep.subr.mxu0 0.0
        %4859 = vmatpush1.msra.mxu0 0.0
        %4860 = vmatprep.subr.mxu0 0.0
        %4861 = vmatpush1.msra.mxu0 0.0
        %4862 = vmatprep.subr.mxu0 0.0
        %4863 = vmatpush1.msra.mxu0 0.0
        %4864 = vmatprep.subr.mxu0 0.0
        %4865 = vmatpush1.msra.mxu0 0.0
        %4866 = vmatprep.subr.mxu0 0.0
        %4867 = vmatpush1.msra.mxu0 0.0
        %4868 = vmatprep.subr.mxu0 0.0
        %4869 = vmatpush1.msra.mxu0 0.0
        %4870 = vmatprep.subr.mxu0 0.0
        %4871 = vmatpush1.msra.mxu0 0.0
        %4872 = vmatprep.subr.mxu0 0.0
        %4873 = vmatpush1.msra.mxu0 0.0
        %4874 = vmatprep.subr.mxu0 0.0
        %4875 = vmatpush1.msra.mxu0 0.0
        %4876 = vmatprep.subr.mxu0 0.0
        %4877 = vmatpush1.msra.mxu0 0.0
        %4878 = vmatprep.subr.mxu0 0.0
        %4879 = vmatpush1.msra.mxu0 0.0
        %4880 = vmatprep.subr.mxu0 0.0
        %4881 = vmatpush1.msra.mxu0 0.0
        %4882 = vmatprep.subr.mxu0 0.0
        %4883 = vmatpush1.msra.mxu0 0.0
        %4884 = vmatprep.subr.mxu0 0.0
        %4885 = vmatpush1.msra.mxu0 0.0
        %4886 = vmatprep.subr.mxu0 0.0
        %4887 = vmatpush1.msra.mxu0 0.0
        %4888 = vmatprep.subr.mxu0 0.0
        %4889 = vmatpush1.msra.mxu0 0.0
        %4890 = vmatprep.subr.mxu0 0.0
        %4891 = vmatpush1.msra.mxu0 0.0
        %4892 = vmatprep.subr.mxu0 0.0
        %4893 = vmatpush1.msra.mxu0 0.0
        %4894 = vmatprep.subr.mxu0 0.0
        %4895 = vmatpush1.msra.mxu0 0.0
        %4896 = vmatprep.subr.mxu0 0.0
        %4897 = vmatpush1.msra.mxu0 0.0
        %4898 = vmatprep.subr.mxu0 0.0
        %4899 = vmatpush1.msra.mxu0 0.0
        %4900 = vmatprep.subr.mxu0 0.0
        %4901 = vmatpush1.msra.mxu0 0.0
        %4902 = vmatprep.mubr.f32.mxu0 0.0
        %4903 = vmatmul.mubr.f32.gmra.mrb[0].mxu0 %v4836
        %v4904 = vpop.f32.mrb[0].mxu0
        %v4905 = vadd.f32 %v4834, %v4904
        %v4906 = vpop.f32.mrb[0].mxu0
        %4907 = vdwg.mxu0
        %v4908 = vld [vmem:[%s2 + $0x3a8] sm:$0x1]
        %v4909 = vld [vmem:[%s2 + $0x3b0] sm:$0x1]
        %v4910 = vsel %vm281, %v4905, 0.0
        %4911 = vadd.xlane.f32.xlu0 %v4910
        %v4912 = vpop.xlane.xlu0 %4911
        %v4913 = vmul.f32 %v4912, %v288
        %v4914 = vsub.f32 %v4905, %v4913
        %v4915 = vmul.f32 %v4914, %v4914
        %v4916 = vsel %vm281, %v4915, 0.0
        %4917 = vadd.xlane.f32.xlu0 %v4916
        %v4918 = vpop.xlane.xlu0 %4917
        %v4919 = vmul.f32 %v4918, %v288
        %v4920 = vadd.f32 %v4919, 1e-05
        %v4921 = vrsqrt.pop %v4920
        %v4922 = vmul.f32 %v4914, %v4921
        %v4923 = vlaneseq
        %v4924 = vshrl.u32 %v4923, 7
        %v4925 = vsub.s32 0, %v4924
        %v4926 = vrot.slane %v4908, %v4925
        %v4927 = vmul.f32 %v4922, %v4926
        %v4928 = vlaneseq
        %v4929 = vshrl.u32 %v4928, 7
        %v4930 = vsub.s32 0, %v4929
        %v4931 = vrot.slane %v4909, %v4930
        %v4932 = vadd.f32 %v4927, %v4931
        %v4933 = vld [vmem:[%s2 + $0x3b8] sm:$0xff]
        %v4934 = vld [vmem:[%s2 + $0x3c0] sm:$0xff]
        %v4935 = vld [vmem:[%s2 + $0x3c8] sm:$0xff]
        %v4936 = vld [vmem:[%s2 + $0x3d0] sm:$0xff]
        %v4937 = vld [vmem:[%s2 + $0x3d8] sm:$0x1]
        %v4938 = vlaneseq
        %v4939 = vshrl.u32 %v4938, 7
        %v4940 = vsub.s32 0, %v4939
        %v4941 = vrot.slane %v4937, %v4940
        %v4943 = vsel %vm281, %v4932, 0
        %4945 = vmatprep.subr.mxu0 0.0
        %4946 = vmatpush1.msra.mxu0 %v4933
        %4947 = vmatprep.subr.mxu0 0.0
        %4948 = vmatpush1.msra.mxu0 %v4934
        %4949 = vmatprep.subr.mxu0 0.0
        %4950 = vmatpush1.msra.mxu0 %v4935
        %4951 = vmatprep.subr.mxu0 0.0
        %4952 = vmatpush1.msra.mxu0 %v4936
        %4953 = vmatprep.subr.mxu0 0.0
        %4954 = vmatpush1.msra.mxu0 0.0
        %4955 = vmatprep.subr.mxu0 0.0
        %4956 = vmatpush1.msra.mxu0 0.0
        %4957 = vmatprep.subr.mxu0 0.0
        %4958 = vmatpush1.msra.mxu0 0.0
        %4959 = vmatprep.subr.mxu0 0.0
        %4960 = vmatpush1.msra.mxu0 0.0
        %4961 = vmatprep.subr.mxu0 0.0
        %4962 = vmatpush1.msra.mxu0 0.0
        %4963 = vmatprep.subr.mxu0 0.0
        %4964 = vmatpush1.msra.mxu0 0.0
        %4965 = vmatprep.subr.mxu0 0.0
        %4966 = vmatpush1.msra.mxu0 0.0
        %4967 = vmatprep.subr.mxu0 0.0
        %4968 = vmatpush1.msra.mxu0 0.0
        %4969 = vmatprep.subr.mxu0 0.0
        %4970 = vmatpush1.msra.mxu0 0.0
        %4971 = vmatprep.subr.mxu0 0.0
        %4972 = vmatpush1.msra.mxu0 0.0
        %4973 = vmatprep.subr.mxu0 0.0
        %4974 = vmatpush1.msra.mxu0 0.0
        %4975 = vmatprep.subr.mxu0 0.0
        %4976 = vmatpush1.msra.mxu0 0.0
        %4977 = vmatprep.subr.mxu0 0.0
        %4978 = vmatpush1.msra.mxu0 0.0
        %4979 = vmatprep.subr.mxu0 0.0
        %4980 = vmatpush1.msra.mxu0 0.0
        %4981 = vmatprep.subr.mxu0 0.0
        %4982 = vmatpush1.msra.mxu0 0.0
        %4983 = vmatprep.subr.mxu0 0.0
        %4984 = vmatpush1.msra.mxu0 0.0
        %4985 = vmatprep.subr.mxu0 0.0
        %4986 = vmatpush1.msra.mxu0 0.0
        %4987 = vmatprep.subr.mxu0 0.0
        %4988 = vmatpush1.msra.mxu0 0.0
        %4989 = vmatprep.subr.mxu0 0.0
        %4990 = vmatpush1.msra.mxu0 0.0
        %4991 = vmatprep.subr.mxu0 0.0
        %4992 = vmatpush1.msra.mxu0 0.0
        %4993 = vmatprep.subr.mxu0 0.0
        %4994 = vmatpush1.msra.mxu0 0.0
        %4995 = vmatprep.subr.mxu0 0.0
        %4996 = vmatpush1.msra.mxu0 0.0
        %4997 = vmatprep.subr.mxu0 0.0
        %4998 = vmatpush1.msra.mxu0 0.0
        %4999 = vmatprep.subr.mxu0 0.0
        %5000 = vmatpush1.msra.mxu0 0.0
        %5001 = vmatprep.subr.mxu0 0.0
        %5002 = vmatpush1.msra.mxu0 0.0
        %5003 = vmatprep.subr.mxu0 0.0
        %5004 = vmatpush1.msra.mxu0 0.0
        %5005 = vmatprep.subr.mxu0 0.0
        %5006 = vmatpush1.msra.mxu0 0.0
        %5007 = vmatprep.subr.mxu0 0.0
        %5008 = vmatpush1.msra.mxu0 0.0
        %5009 = vmatprep.mubr.f32.mxu0 0.0
        %5010 = vmatmul.mubr.f32.gmra.mrb[0].mxu0 %v4943
        %v5011 = vpop.f32.mrb[0].mxu0
        %v5012 = vadd.f32 %v4941, %v5011
        %v5013 = vpop.f32.mrb[0].mxu0
        %5014 = vdwg.mxu0
        %v5015 = vadd.f32 %v188, %v5012
        %5016 = vst.msk [vmem:[%s176] sm:$0xff] %vm281, %v5015
        %s5017 = sand.u32 %s98, 1
        %s5018 = scalar_lea.sflag [#allocation3], %s5017
        %s5019 = sand.u32 %s98, 1
        %s5020 = smul.addr %s5019, 8
        %s5021 = scalar_lea.vmem [#allocation2], %s5020
        // Predicated region
        $region33: #{resampler_cross_forward.1} parent=31 // pred_check
          %p5022 = pneg %p108
        $region34: #{resampler_cross_forward.1} parent=31 // pred_check_branch
          %5024 = sbr.rel (%p5022) target = $region36
        $region35: #{resampler_cross_forward.1} parent=31 // pred_region
          %s5026 = ssub.s32 128, 128
          %5027 = vsyncadd %s5018, %s5026
          %s5028 = smul.addr %s17, 128
          %s5029 = scalar_lea.hbm %s3, %s5028
          %s5031 = sshll.u32 %s5021, 4
          %s5032 = int_to_ptr.vmem [resolvable:$true] %s5031
          %5034 = dma.vmem_to_hbm [thread:$0]  %s5032, 128, %s5029, %s5018
        $region36: #{resampler_cross_forward.1} parent=31 // pred_fallthru
          _
      $region32: #{resampler_cross_forward.1} parent=5 // pred_fallthru
        _
      %p5035 = scmp.le.s32.totalorder 2, %s12
      // Predicated region
      $region37: #{resampler_cross_forward.1} parent=5 // pred_check
        %p5036 = pneg %p5035
      $region38: #{resampler_cross_forward.1} parent=5 // pred_check_branch
        %5038 = sbr.rel (%p5036) target = $region40
      $region39: #{resampler_cross_forward.1} parent=5 // pred_region
        %s5039 = ssub.s32 %s12, 2
        // Predicated region
        $region41: #{resampler_cross_forward.1} parent=39 // pred_check
          %p5040 = pneg %p114
        $region42: #{resampler_cross_forward.1} parent=39 // pred_check_branch
          %5042 = sbr.rel (%p5040) target = $region44
        $region43: #{resampler_cross_forward.1} parent=39 // pred_region
          %s5043 = sand.u32 %s99, 1
          %s5044 = scalar_lea.sflag [#allocation3], %s5043
          %s5045 = sand.u32 %s99, 1
          %s5046 = smul.addr %s5045, 8
          %s5047 = scalar_lea.vmem [#allocation2], %s5046
          %5048 = dma.done %s5044, 128
        $region44: #{resampler_cross_forward.1} parent=39 // pred_fallthru
          _
      $region40: #{resampler_cross_forward.1} parent=5 // pred_fallthru
        _
    $region6: #{resampler_cross_forward.1} parent=1 // loop_footer
      %s16 = sadd.s32 1, %s12
    $region7: #{resampler_cross_forward.1} parent=1 // loop_footer_branch
      %11 = sbr.rel target = $region3
    $region8: #{resampler_cross_forward.1} parent=1 // loop_exit
      _
    %5049 = vsyncpa [#allocation3], 1
    %s5050 = scalar_lea.sflag [#allocation3], 1
    %5051 = vsyncpa %s5050, 1

</llo_original>
